<compile_context>
chip_gen: v6e
topology: v6e:2x2x1
jax: 0.10.0
libtpu: 0.0.40
codegen_flags: <defaults>
</compile_context>

<pallas_src>
import jax
import jax.numpy as jnp
from jax.experimental import pallas as pl
from jax.experimental.pallas import tpu as pltpu


_TARGET_BLOCK_BYTES = 4 * 1024 * 1024      # ~4 MiB raw HBM per V / out block
_DEFAULT_VMEM_BYTES = 64 * 1024 * 1024     # conservative fallback (v7x per-core VMEM)
_PIPELINE_BUDGET_CAP = 40 * 1024 * 1024    # budget for buffers + temporaries
_VMEM_LIMIT_CAP = 56 * 1024 * 1024         # < v7x 64 MiB physical, > all scoped defaults


def _cdiv(a, b):
    return -(-a // b)


def _round_up(a, b):
    return _cdiv(a, b) * b


def _vmem_capacity_bytes():
    try:
        info = pltpu.get_tpu_info()
        cap = getattr(info, "vmem_capacity_bytes", None)
        if cap:
            return int(cap)
    except Exception:
        pass
    return _DEFAULT_VMEM_BYTES


def _choose_block_b(B, n, itemsize, pipeline_budget):
    """Pick the batch chunk size.

    Sized so that (a) each block carries a few MiB of HBM traffic, (b) the
    double-buffered V-in/out blocks plus in-kernel temporaries fit the VMEM
    budget *including* the (8,128) tile padding of small matrices, and (c) the
    grid has >= 2 steps when possible (v7x megacore sharding of the batch axis).
    """
    # VMEM bytes per matrix in the tiled layout (lane dim padded to 128,
    # sublane dim to 8) -- for n=16 this is 8x the raw size.
    padded_mat = _round_up(n, 8) * _round_up(n, 128) * itemsize
    # 2 pipeline buffers each for the V input and the output (= 4 block copies)
    # plus ~4 more block-sized copies of headroom for in-kernel temporaries
    # (V*diag(s), the f32 matmul result) and compiler scratch.
    cap_vmem = max(1, pipeline_budget // (8 * padded_mat))
    cap_target = max(1, _TARGET_BLOCK_BYTES // (n * n * itemsize))
    bb = max(1, min(B, cap_vmem, cap_target))
    # >=2 grid steps when the batch allows two >=8-row blocks (v7x has 2 TCs).
    min_steps = 2 if B > 8 else 1
    steps = max(min_steps, _cdiv(B, bb))
    bb = _cdiv(B, steps)                  # balanced chunks; last block may be ragged
    if bb < B:
        bb = min(_round_up(bb, 8), B)     # sublane-align the (bb, n) eigenvalue block
    return bb


def _make_kernel(epsilon, use_bf16_matmul):
    def kernel(v_ref, w_ref, o_ref):
        # v_ref: (bb, n, n) eigenvectors (columns are eigenvectors)
        # w_ref: (bb, n)    eigenvalues
        # o_ref: (bb, n, n) rectified SPD output
        v = v_ref[...]
        # torch.svd singular values of a symmetric matrix are |eigenvalues|;
        # clamp them to at least epsilon (pure VPU work).
        s = jnp.maximum(jnp.abs(w_ref[...]), epsilon)          # (bb, n)
        vs = v * s[:, None, :]                                  # V @ diag(s): scale columns
        # (V diag(s)) @ V^T batched over the whole chunk in one dot_general.
        # Both operands contract on their trailing axis (flash-attention style
        # 'bij,bkj->bik'), the form Mosaic lowers without extra relayouts.
        if use_bf16_matmul:
            # Compute-bound regime (large n): bf16 operands, f32 accumulation
            # recovers full MXU throughput on v6e/v7x.
            out = jnp.einsum(
                "bij,bkj->bik",
                vs.astype(jnp.bfloat16), v.astype(jnp.bfloat16),
                preferred_element_type=jnp.float32)
        else:
            # Mem-bound regime: exact f32 matmul (the multi-pass MXU cost is
            # hidden behind the DMA), avoids any precision surprises.
            out = jnp.einsum(
                "bij,bkj->bik", vs, v,
                preferred_element_type=jnp.float32,
                precision=jax.lax.Precision.HIGHEST)
        o_ref[...] = out.astype(o_ref.dtype)

    return kernel


def spd_rectified(x, epsilon=1e-4, *, bf16_matmul_min_n=512):
    """x: (B, n, n) symmetric SPD float32 -> (B, n, n) rectified SPD."""
    B, n, n2 = x.shape
    assert n == n2, "input must be a batch of square matrices"
    itemsize = x.dtype.itemsize

    # TODO(synk): torch.svd / batched symmetric eigendecomposition has no Pallas
    # TPU primitive; it stays in the XLA wrapper (and dominates wall-clock).
    # jnp.linalg.eigh symmetrizes internally, which matches the SPD inputs this
    # module is designed for.
    w, v = jnp.linalg.eigh(x)          # w: (B, n) eigenvalues, v: (B, n, n) eigenvectors

    vmem_cap = _vmem_capacity_bytes()
    pipeline_budget = min(int(vmem_cap * 0.6), _PIPELINE_BUDGET_CAP)
    vmem_limit = min(int(vmem_cap * 0.85), _VMEM_LIMIT_CAP)

    bb = _choose_block_b(B, n, itemsize, pipeline_budget)
    # Ragged last block: OOB input reads feed only dropped OOB output writes,
    # so no jnp.pad (and no extra full-HBM copy of V) is needed.
    grid = (_cdiv(B, bb),)

    use_bf16_matmul = n >= bf16_matmul_min_n
    kernel = _make_kernel(float(epsilon), use_bf16_matmul)

    cost = pl.CostEstimate(
        flops=2 * B * n * n * n,
        transcendentals=0,
        bytes_accessed=B * (2 * n * n + n) * itemsize,
    )

    # TODO(synk): for n < 128 the (bb, n, n) tile layout under-fills lanes (8x
    # VMEM inflation at n=16); a lane-dense flattened (bb, n*n) block layout
    # would need an in-kernel relayout whose Mosaic lowering is shape-dependent,
    # and at these sizes the eigh above dominates wall-clock, so it is left out.
    # TODO(synk): very large n (>~1500) would additionally need a K-tiled grid
    # axis with a VMEM accumulator to stay inside v7x's 64 MiB VMEM.
    out = pl.pallas_call(
        kernel,
        out_shape=jax.ShapeDtypeStruct((B, n, n), x.dtype),
        grid=grid,
        in_specs=[
            pl.BlockSpec((bb, n, n), lambda b: (b, 0, 0)),    # eigenvectors
            pl.BlockSpec((bb, n), lambda b: (b, 0)),          # eigenvalues
        ],
        out_specs=pl.BlockSpec((bb, n, n), lambda b: (b, 0, 0)),
        compiler_params=pltpu.CompilerParams(
            dimension_semantics=("parallel",),
            vmem_limit_bytes=vmem_limit,
        ),
        cost_estimate=cost,
    )(v, w)
    return out


def _reference(x, eps):
    w_ref, v_ref = jnp.linalg.eigh(x)
    s_ref = jnp.maximum(jnp.abs(w_ref), eps)
    return jnp.einsum("bij,bj,bkj->bik", v_ref, s_ref, v_ref)


if __name__ == "__main__":
    eps = 1e-4
    key = jax.random.PRNGKey(0)

    # Small SPD batch matching the module's expected input (covariance-like).
    B, n = 8, 16
    a = jax.random.normal(key, (B, n, n), dtype=jnp.float32)
    x = jnp.einsum("bij,bkj->bik", a, a) / n

    out = jax.block_until_ready(spd_rectified(x, epsilon=eps))
    ref = _reference(x, eps)
    assert out.shape == (B, n, n)
    err = float(jnp.max(jnp.abs(out - ref)))
    assert jnp.allclose(out, ref, atol=1e-4, rtol=1e-4), err

    # Second shape exercises the multi-step grid with a ragged last block
    # (no padding path).
    B2 = 20
    key2 = jax.random.PRNGKey(1)
    a2 = jax.random.normal(key2, (B2, n, n), dtype=jnp.float32)
    x2 = jnp.einsum("bij,bkj->bik", a2, a2) / n
    out2 = jax.block_until_ready(spd_rectified(x2, epsilon=eps))
    ref2 = _reference(x2, eps)
    assert out2.shape == (B2, n, n)
    err2 = float(jnp.max(jnp.abs(out2 - ref2)))
    assert jnp.allclose(out2, ref2, atol=1e-4, rtol=1e-4), err2

    print("KERNEL_OK")
</pallas_src>

<mosaic_0001>
module attributes {stable_mosaic.version = 11 : i64} {
  func.func @kernel(%arg0: i32, %arg1: memref<8x16x16xf32, #tpu.memory_space<vmem>>, %arg2: memref<8x16xf32, #tpu.memory_space<vmem>>, %arg3: memref<8x16x16xf32, #tpu.memory_space<vmem>>) attributes {dimension_semantics = [#tpu.dimension_semantics<parallel>], iteration_bounds = array<i64: 1>, scalar_prefetch = 0 : i64, scratch_operands = 0 : i64, tpu.core_type = #tpu.core_type<tc>, window_params = [{transform_indices = @transform_0, window_bounds = array<i64: 8, 16, 16>}, {transform_indices = @transform_1, window_bounds = array<i64: 8, 16>}, {transform_indices = @transform_2, window_bounds = array<i64: 8, 16, 16>}]} {
    %c0 = arith.constant 0 : index
    %c0_0 = arith.constant 0 : index
    %c0_1 = arith.constant 0 : index
    %0 = vector.load %arg1[%c0, %c0_0, %c0_1] : memref<8x16x16xf32, #tpu.memory_space<vmem>>, vector<8x16x16xf32>
    %c0_2 = arith.constant 0 : index
    %c0_3 = arith.constant 0 : index
    %1 = vector.load %arg2[%c0_2, %c0_3] : memref<8x16xf32, #tpu.memory_space<vmem>>, vector<8x16xf32>
    %2 = math.absf %1 : vector<8x16xf32>
    %cst = arith.constant 9.99999974E-5 : f32
    %3 = vector.broadcast %cst : f32 to vector<8x16xf32>
    %4 = arith.maximumf %2, %3 : vector<8x16xf32>
    %5 = vector.shape_cast %4 : vector<8x16xf32> to vector<8x1x16xf32>
    %6 = vector.broadcast %5 : vector<8x1x16xf32> to vector<8x16x16xf32>
    %7 = arith.mulf %0, %6 : vector<8x16x16xf32>
    "tpu.trace_start"() <{level = 10 : i32, message = "bij,bkj->bik"}> : () -> ()
    %cst_4 = arith.constant dense<0.000000e+00> : vector<8x16x16xf32>
    %8 = tpu.matmul %7, %0, %cst_4 {dimension_numbers = #tpu.dot_dimension_numbers<[2], [2], [1], [1], [0, 0, 0, 1, 1, 1], [0], [0]>, precision = #tpu.contract_precision<fp32>} : vector<8x16x16xf32>, vector<8x16x16xf32>, vector<8x16x16xf32> -> vector<8x16x16xf32>
    "tpu.trace_stop"() : () -> ()
    %c0_5 = arith.constant 0 : index
    %c0_6 = arith.constant 0 : index
    %c0_7 = arith.constant 0 : index
    %9 = vector.load %arg3[%c0_5, %c0_6, %c0_7] : memref<8x16x16xf32, #tpu.memory_space<vmem>>, vector<8x16x16xf32>
    tpu.vector_store %arg3[%c0_5, %c0_6, %c0_7], %8 {strides = array<i32>} : memref<8x16x16xf32, #tpu.memory_space<vmem>>, vector<8x16x16xf32>,
    return
  }
  func.func @transform_0(%arg0: i32) -> (i32, i32, i32) {
    %c0_i32 = arith.constant 0 : i32
    %c0_i32_0 = arith.constant 0 : i32
    %c0_i32_1 = arith.constant 0 : i32
    return %arg0, %c0_i32, %c0_i32_0 : i32, i32, i32
  }
  func.func @transform_1(%arg0: i32) -> (i32, i32) {
    %c0_i32 = arith.constant 0 : i32
    %c0_i32_0 = arith.constant 0 : i32
    return %arg0, %c0_i32 : i32, i32
  }
  func.func @transform_2(%arg0: i32) -> (i32, i32, i32) {
    %c0_i32 = arith.constant 0 : i32
    %c0_i32_0 = arith.constant 0 : i32
    %c0_i32_1 = arith.constant 0 : i32
    return %arg0, %c0_i32, %c0_i32_0 : i32, i32, i32
  }
}

</mosaic_0001>

<llo_original>
// kernel: tpu_custom_call.1
$region0: #{tpu_custom_call.1}
  #allocation0 [shape = 'u32[]', space=smem, size = 0x4, offset = 0x4, fixed_abs, tag = 'smem constant byte address 0x4 - core index']
  #allocation1 [shape = 'u32[144,128]{1,0:T(1,128)}', space=vmem, size = 0x12000, scoped, tag = 'internal scratch']
  %s0 = inlined_call_operand.hbm [shape: f32[8,16,16], index: 0, kind: input, shape index: {}]
  %s1 = inlined_call_operand.hbm [shape: f32[8,16], index: 1, kind: input, shape index: {}]
  %s2 = inlined_call_operand.hbm [shape: f32[8,16,16], index: 2, kind: output, shape index: {}]
  %s3 = sld [smem:[#allocation0]]
  $region26: #{tpu_custom_call.1} parent=0
    _
  %s5 = ssub.s32 1, %s3
  %s6 = scalar_select 0, %s5, %s3
  $region1: #{tpu_custom_call.1} parent=0
    #allocation2 [shape = 'u8[65536]{0}', space=vmem, size = 0x10000, scoped, tag = 'input window, operand 0, single buffered']
    #allocation3 [shape = 's32[1]{0}', space=sflag, size = 0x4, scoped, tag = 'scoped memory for tpu_custom_call.1']
    #allocation4 [shape = 's32[1]{0}', space=sflag, size = 0x4, scoped, tag = 'scoped memory for tpu_custom_call.1']
    #allocation5 [shape = 'u8[4096]{0}', space=vmem, size = 0x1000, scoped, tag = 'input window, operand 1, single buffered']
    #allocation6 [shape = 's32[1]{0}', space=sflag, size = 0x4, scoped, tag = 'scoped memory for tpu_custom_call.1']
    #allocation7 [shape = 'u8[65536]{0}', space=vmem, size = 0x10000, scoped, tag = 'output window, operand 0, single buffered']
    %7 = vsyncpa [#allocation3], 0
    %8 = vsyncpa [#allocation6], 0
    %9 = vsyncpa [#allocation4], 0
    // Predicated region
    $region2: #{tpu_custom_call.1} parent=1 // pred_check
      _
    $region3: #{tpu_custom_call.1} parent=1 // pred_check_branch
      %11 = sbr.rel (0) target = $region5
    $region4: #{tpu_custom_call.1} parent=1 // pred_region
      %s13 = ssub.s32 2048, 2048
      %14 = vsyncadd [#allocation3], %s13
      %s15 = sshll.u32 [#allocation2], 4
      %s16 = int_to_ptr.vmem [resolvable:$true] %s15
      %21 = dma.hbm_to_vmem [thread:$0]  %s0, 2048, %s16, [#allocation3], 128, 128, 8
    $region5: #{tpu_custom_call.1} parent=1 // pred_fallthru
      _
    // Predicated region
    $region6: #{tpu_custom_call.1} parent=1 // pred_check
      _
    $region7: #{tpu_custom_call.1} parent=1 // pred_check_branch
      %23 = sbr.rel (0) target = $region9
    $region8: #{tpu_custom_call.1} parent=1 // pred_region
      %s25 = ssub.s32 128, 128
      %26 = vsyncadd [#allocation6], %s25
      %s28 = sshll.u32 [#allocation5], 4
      %s29 = int_to_ptr.vmem [resolvable:$true] %s28
      %31 = dma.hbm_to_vmem [thread:$0]  %s1, 128, %s29, [#allocation6]
    $region9: #{tpu_custom_call.1} parent=1 // pred_fallthru
      _
    // Predicated region
    $region10: #{tpu_custom_call.1} parent=1 // pred_check
      _
    $region11: #{tpu_custom_call.1} parent=1 // pred_check_branch
      %33 = sbr.rel (0) target = $region13
    $region12: #{tpu_custom_call.1} parent=1 // pred_region
      %34 = dma.done [#allocation3], 2048
    $region13: #{tpu_custom_call.1} parent=1 // pred_fallthru
      _
    // Predicated region
    $region14: #{tpu_custom_call.1} parent=1 // pred_check
      _
    $region15: #{tpu_custom_call.1} parent=1 // pred_check_branch
      %36 = sbr.rel (0) target = $region17
    $region16: #{tpu_custom_call.1} parent=1 // pred_region
      %37 = dma.done [#allocation6], 128
    $region17: #{tpu_custom_call.1} parent=1 // pred_fallthru
      _
    %v38 = vld [vmem:[#allocation2] sm:$0xff]
    %v39 = vld [vmem:[#allocation2 + $0x8] sm:$0xff]
    %v40 = vld [vmem:[#allocation2 + $0x10] sm:$0xff]
    %v41 = vld [vmem:[#allocation2 + $0x18] sm:$0xff]
    %v42 = vld [vmem:[#allocation2 + $0x20] sm:$0xff]
    %v43 = vld [vmem:[#allocation2 + $0x28] sm:$0xff]
    %v44 = vld [vmem:[#allocation2 + $0x30] sm:$0xff]
    %v45 = vld [vmem:[#allocation2 + $0x38] sm:$0xff]
    %v46 = vld [vmem:[#allocation2 + $0x40] sm:$0xff]
    %v47 = vld [vmem:[#allocation2 + $0x48] sm:$0xff]
    %v48 = vld [vmem:[#allocation2 + $0x50] sm:$0xff]
    %v49 = vld [vmem:[#allocation2 + $0x58] sm:$0xff]
    %v50 = vld [vmem:[#allocation2 + $0x60] sm:$0xff]
    %v51 = vld [vmem:[#allocation2 + $0x68] sm:$0xff]
    %v52 = vld [vmem:[#allocation2 + $0x70] sm:$0xff]
    %v53 = vld [vmem:[#allocation2 + $0x78] sm:$0xff]
    %v54 = vld [vmem:[#allocation5] sm:$0xff]
    %v55 = vand.u32 2147483647, %v54
    %v56 = vmax.f32 %v55, 0.0001
    %v58 = vcombine.high %v56, %v56
    %v60 = vunpack.c.l.s4 1966171168
    %v61 = vunpack.c.0.s8 %v60
    %v62 = vlaneseq
    %v63 = vshrl.u32 %v62, 7
    %v64 = vsub.s32 %v61, %v63
    %v65 = vrot.slane %v56, %v64
    %v67 = vunpack.c.l.s4 1966171168
    %v68 = vunpack.c.0.s8 %v67
    %v69 = vlaneseq
    %v70 = vshrl.u32 %v69, 7
    %v71 = vsub.s32 %v68, %v70
    %v72 = vrot.slane %v58, %v71
    %v73 = vcombine.high %v65, %v65
    %v74 = vcombine.high %v72, %v72
    %v76 = vunpack.c.l.s4 1966171168
    %v77 = vunpack.c.0.s8 %v76
    %v78 = vlaneseq
    %v79 = vshrl.u32 %v78, 7
    %v80 = vsub.s32 %v77, %v79
    %v81 = vrot.slane %v65, %v80
    %v83 = vunpack.c.l.s4 1966171168
    %v84 = vunpack.c.0.s8 %v83
    %v85 = vlaneseq
    %v86 = vshrl.u32 %v85, 7
    %v87 = vsub.s32 %v84, %v86
    %v88 = vrot.slane %v72, %v87
    %v90 = vunpack.c.l.s4 1966171168
    %v91 = vunpack.c.0.s8 %v90
    %v92 = vlaneseq
    %v93 = vshrl.u32 %v92, 7
    %v94 = vsub.s32 %v91, %v93
    %v95 = vrot.slane %v73, %v94
    %v97 = vunpack.c.l.s4 1966171168
    %v98 = vunpack.c.0.s8 %v97
    %v99 = vlaneseq
    %v100 = vshrl.u32 %v99, 7
    %v101 = vsub.s32 %v98, %v100
    %v102 = vrot.slane %v74, %v101
    %v103 = vcombine.high %v81, %v81
    %v104 = vcombine.high %v88, %v88
    %v105 = vcombine.high %v95, %v95
    %v106 = vcombine.high %v102, %v102
    %v107 = vlaneseq
    %v108 = vshrl.u32 %v107, 7
    %v109 = vsub.s32 0, %v108
    %v110 = vrot.slane %v81, %v109
    %v111 = vlaneseq
    %v112 = vshrl.u32 %v111, 7
    %v113 = vsub.s32 0, %v112
    %v114 = vrot.slane %v95, %v113
    %v115 = vlaneseq
    %v116 = vshrl.u32 %v115, 7
    %v117 = vsub.s32 0, %v116
    %v118 = vrot.slane %v103, %v117
    %v119 = vlaneseq
    %v120 = vshrl.u32 %v119, 7
    %v121 = vsub.s32 0, %v120
    %v122 = vrot.slane %v105, %v121
    %v123 = vlaneseq
    %v124 = vshrl.u32 %v123, 7
    %v125 = vsub.s32 0, %v124
    %v126 = vrot.slane %v88, %v125
    %v127 = vlaneseq
    %v128 = vshrl.u32 %v127, 7
    %v129 = vsub.s32 0, %v128
    %v130 = vrot.slane %v102, %v129
    %v131 = vlaneseq
    %v132 = vshrl.u32 %v131, 7
    %v133 = vsub.s32 0, %v132
    %v134 = vrot.slane %v104, %v133
    %v135 = vlaneseq
    %v136 = vshrl.u32 %v135, 7
    %v137 = vsub.s32 0, %v136
    %v138 = vrot.slane %v106, %v137
    %v147 = vmul.f32 %v38, %v110
    %v148 = vmul.f32 %v39, %v110
    %v149 = vmul.f32 %v40, %v114
    %v150 = vmul.f32 %v41, %v114
    %v151 = vmul.f32 %v42, %v118
    %v152 = vmul.f32 %v43, %v118
    %v153 = vmul.f32 %v44, %v122
    %v154 = vmul.f32 %v45, %v122
    %v155 = vmul.f32 %v46, %v126
    %v156 = vmul.f32 %v47, %v126
    %v157 = vmul.f32 %v48, %v130
    %v158 = vmul.f32 %v49, %v130
    %v159 = vmul.f32 %v50, %v134
    %v160 = vmul.f32 %v51, %v134
    %v161 = vmul.f32 %v52, %v138
    %v162 = vmul.f32 %v53, %v138
    %vm163 = vcmask 130048
    %v165 = vsel %vm163, %v147, 0
    %v168 = vsel %vm163, %v148, 0
    %v171 = vsel %vm163, %v38, 0
    %v174 = vsel %vm163, %v39, 0
    %176 = vmatprep.subr.mxu0 0.0
    %177 = vmatpush1.xpose.msra.mxu0 0.0
    %178 = vmatprep.subr.mxu0 0.0
    %179 = vmatpush1.xpose.msra.mxu0 0.0
    %180 = vmatprep.subr.mxu0 0.0
    %181 = vmatpush1.xpose.msra.mxu0 0.0
    %182 = vmatprep.subr.mxu0 0.0
    %183 = vmatpush1.xpose.msra.mxu0 0.0
    %184 = vmatprep.subr.mxu0 0.0
    %185 = vmatpush1.xpose.msra.mxu0 0.0
    %186 = vmatprep.subr.mxu0 0.0
    %187 = vmatpush1.xpose.msra.mxu0 0.0
    %188 = vmatprep.subr.mxu0 0.0
    %189 = vmatpush1.xpose.msra.mxu0 0.0
    %190 = vmatprep.subr.mxu0 0.0
    %191 = vmatpush1.xpose.msra.mxu0 0.0
    %192 = vmatprep.subr.mxu0 0.0
    %193 = vmatpush1.xpose.msra.mxu0 0.0
    %194 = vmatprep.subr.mxu0 0.0
    %195 = vmatpush1.xpose.msra.mxu0 0.0
    %196 = vmatprep.subr.mxu0 0.0
    %197 = vmatpush1.xpose.msra.mxu0 0.0
    %198 = vmatprep.subr.mxu0 0.0
    %199 = vmatpush1.xpose.msra.mxu0 0.0
    %200 = vmatprep.subr.mxu0 0.0
    %201 = vmatpush1.xpose.msra.mxu0 0.0
    %202 = vmatprep.subr.mxu0 0.0
    %203 = vmatpush1.xpose.msra.mxu0 0.0
    %204 = vmatprep.subr.mxu0 0.0
    %v205 = vand.u32 %v174, 4294901760
    %206 = vmatpush1.xpose.msra.mxu0 %v205
    %207 = vmatprep.subr.mxu0 0.0
    %v208 = vand.u32 %v171, 4294901760
    %209 = vmatpush1.xpose.msra.mxu0 %v208
    %210 = vmatprep.subr.mxu0 0.0
    %211 = vmatpush2.xpose.msra.mxu0 0.0
    %212 = vmatprep.subr.mxu0 0.0
    %213 = vmatpush2.xpose.msra.mxu0 0.0
    %214 = vmatprep.subr.mxu0 0.0
    %215 = vmatpush2.xpose.msra.mxu0 0.0
    %216 = vmatprep.subr.mxu0 0.0
    %217 = vmatpush2.xpose.msra.mxu0 0.0
    %218 = vmatprep.subr.mxu0 0.0
    %219 = vmatpush2.xpose.msra.mxu0 0.0
    %220 = vmatprep.subr.mxu0 0.0
    %221 = vmatpush2.xpose.msra.mxu0 0.0
    %222 = vmatprep.subr.mxu0 0.0
    %223 = vmatpush2.xpose.msra.mxu0 0.0
    %224 = vmatprep.subr.mxu0 0.0
    %225 = vmatpush2.xpose.msra.mxu0 0.0
    %226 = vmatprep.subr.mxu0 0.0
    %227 = vmatpush2.xpose.msra.mxu0 0.0
    %228 = vmatprep.subr.mxu0 0.0
    %229 = vmatpush2.xpose.msra.mxu0 0.0
    %230 = vmatprep.subr.mxu0 0.0
    %231 = vmatpush2.xpose.msra.mxu0 0.0
    %232 = vmatprep.subr.mxu0 0.0
    %233 = vmatpush2.xpose.msra.mxu0 0.0
    %234 = vmatprep.subr.mxu0 0.0
    %235 = vmatpush2.xpose.msra.mxu0 0.0
    %236 = vmatprep.subr.mxu0 0.0
    %237 = vmatpush2.xpose.msra.mxu0 0.0
    %238 = vmatprep.subr.mxu0 0.0
    %239 = vmatpush2.xpose.msra.mxu0 0.0
    %240 = vmatprep.subr.mxu0 0.0
    %241 = vmatpush2.xpose.msra.mxu0 0.0
    %242 = vmatprep.mubr.f32.mxu0 0.0
    %v243 = vand.u32 %v165, 4294901760
    %v244 = vsub.f32 %v165, %v243
    %v245 = vand.u32 %v244, 4294901760
    %v246 = vsub.f32 %v244, %v245
    %v247 = vand.u32 %v246, 4294901760
    %248 = vmatmul.mubr.f32.gmra.mxu0 %v247
    %v249 = vpop.f32.mrf.mxu0
    %v250 = vadd.f32 0.0, %v249
    %v251 = vpop.f32.mrf.mxu0
    %252 = vmatprep.mubr.f32.mxu0 0.0
    %v253 = vand.u32 %v168, 4294901760
    %v254 = vsub.f32 %v168, %v253
    %v255 = vand.u32 %v254, 4294901760
    %v256 = vsub.f32 %v254, %v255
    %v257 = vand.u32 %v256, 4294901760
    %258 = vmatmul.mubr.f32.gmra.mxu0 %v257
    %v259 = vpop.f32.mrf.mxu0
    %v260 = vadd.f32 0.0, %v259
    %v261 = vpop.f32.mrf.mxu0
    %262 = vdwg.mxu0
    %263 = vmatprep.subr.mxu0 0.0
    %264 = vmatpush1.xpose.msra.mxu0 0.0
    %265 = vmatprep.subr.mxu0 0.0
    %266 = vmatpush1.xpose.msra.mxu0 0.0
    %267 = vmatprep.subr.mxu0 0.0
    %268 = vmatpush1.xpose.msra.mxu0 0.0
    %269 = vmatprep.subr.mxu0 0.0
    %270 = vmatpush1.xpose.msra.mxu0 0.0
    %271 = vmatprep.subr.mxu0 0.0
    %272 = vmatpush1.xpose.msra.mxu0 0.0
    %273 = vmatprep.subr.mxu0 0.0
    %274 = vmatpush1.xpose.msra.mxu0 0.0
    %275 = vmatprep.subr.mxu0 0.0
    %276 = vmatpush1.xpose.msra.mxu0 0.0
    %277 = vmatprep.subr.mxu0 0.0
    %278 = vmatpush1.xpose.msra.mxu0 0.0
    %279 = vmatprep.subr.mxu0 0.0
    %280 = vmatpush1.xpose.msra.mxu0 0.0
    %281 = vmatprep.subr.mxu0 0.0
    %282 = vmatpush1.xpose.msra.mxu0 0.0
    %283 = vmatprep.subr.mxu0 0.0
    %284 = vmatpush1.xpose.msra.mxu0 0.0
    %285 = vmatprep.subr.mxu0 0.0
    %286 = vmatpush1.xpose.msra.mxu0 0.0
    %287 = vmatprep.subr.mxu0 0.0
    %288 = vmatpush1.xpose.msra.mxu0 0.0
    %289 = vmatprep.subr.mxu0 0.0
    %290 = vmatpush1.xpose.msra.mxu0 0.0
    %291 = vmatprep.subr.mxu0 0.0
    %v292 = vand.u32 %v174, 4294901760
    %v293 = vsub.f32 %v174, %v292
    %v294 = vand.u32 %v293, 4294901760
    %v295 = vsub.f32 %v293, %v294
    %v296 = vand.u32 %v295, 4294901760
    %297 = vmatpush1.xpose.msra.mxu0 %v296
    %298 = vmatprep.subr.mxu0 0.0
    %v299 = vand.u32 %v171, 4294901760
    %v300 = vsub.f32 %v171, %v299
    %v301 = vand.u32 %v300, 4294901760
    %v302 = vsub.f32 %v300, %v301
    %v303 = vand.u32 %v302, 4294901760
    %304 = vmatpush1.xpose.msra.mxu0 %v303
    %305 = vmatprep.subr.mxu0 0.0
    %306 = vmatpush2.xpose.msra.mxu0 0.0
    %307 = vmatprep.subr.mxu0 0.0
    %308 = vmatpush2.xpose.msra.mxu0 0.0
    %309 = vmatprep.subr.mxu0 0.0
    %310 = vmatpush2.xpose.msra.mxu0 0.0
    %311 = vmatprep.subr.mxu0 0.0
    %312 = vmatpush2.xpose.msra.mxu0 0.0
    %313 = vmatprep.subr.mxu0 0.0
    %314 = vmatpush2.xpose.msra.mxu0 0.0
    %315 = vmatprep.subr.mxu0 0.0
    %316 = vmatpush2.xpose.msra.mxu0 0.0
    %317 = vmatprep.subr.mxu0 0.0
    %318 = vmatpush2.xpose.msra.mxu0 0.0
    %319 = vmatprep.subr.mxu0 0.0
    %320 = vmatpush2.xpose.msra.mxu0 0.0
    %321 = vmatprep.subr.mxu0 0.0
    %322 = vmatpush2.xpose.msra.mxu0 0.0
    %323 = vmatprep.subr.mxu0 0.0
    %324 = vmatpush2.xpose.msra.mxu0 0.0
    %325 = vmatprep.subr.mxu0 0.0
    %326 = vmatpush2.xpose.msra.mxu0 0.0
    %327 = vmatprep.subr.mxu0 0.0
    %328 = vmatpush2.xpose.msra.mxu0 0.0
    %329 = vmatprep.subr.mxu0 0.0
    %330 = vmatpush2.xpose.msra.mxu0 0.0
    %331 = vmatprep.subr.mxu0 0.0
    %332 = vmatpush2.xpose.msra.mxu0 0.0
    %333 = vmatprep.subr.mxu0 0.0
    %334 = vmatpush2.xpose.msra.mxu0 0.0
    %335 = vmatprep.subr.mxu0 0.0
    %336 = vmatpush2.xpose.msra.mxu0 0.0
    %337 = vmatprep.mubr.f32.mxu0 0.0
    %v338 = vand.u32 %v165, 4294901760
    %339 = vmatmul.mubr.f32.gmra.mxu0 %v338
    %v340 = vpop.f32.mrf.mxu0
    %v341 = vadd.f32 %v250, %v340
    %v342 = vpop.f32.mrf.mxu0
    %343 = vmatprep.mubr.f32.mxu0 0.0
    %v344 = vand.u32 %v168, 4294901760
    %345 = vmatmul.mubr.f32.gmra.mxu0 %v344
    %v346 = vpop.f32.mrf.mxu0
    %v347 = vadd.f32 %v260, %v346
    %v348 = vpop.f32.mrf.mxu0
    %349 = vdwg.mxu0
    %350 = vmatprep.subr.mxu0 0.0
    %351 = vmatpush1.xpose.msra.mxu0 0.0
    %352 = vmatprep.subr.mxu0 0.0
    %353 = vmatpush1.xpose.msra.mxu0 0.0
    %354 = vmatprep.subr.mxu0 0.0
    %355 = vmatpush1.xpose.msra.mxu0 0.0
    %356 = vmatprep.subr.mxu0 0.0
    %357 = vmatpush1.xpose.msra.mxu0 0.0
    %358 = vmatprep.subr.mxu0 0.0
    %359 = vmatpush1.xpose.msra.mxu0 0.0
    %360 = vmatprep.subr.mxu0 0.0
    %361 = vmatpush1.xpose.msra.mxu0 0.0
    %362 = vmatprep.subr.mxu0 0.0
    %363 = vmatpush1.xpose.msra.mxu0 0.0
    %364 = vmatprep.subr.mxu0 0.0
    %365 = vmatpush1.xpose.msra.mxu0 0.0
    %366 = vmatprep.subr.mxu0 0.0
    %367 = vmatpush1.xpose.msra.mxu0 0.0
    %368 = vmatprep.subr.mxu0 0.0
    %369 = vmatpush1.xpose.msra.mxu0 0.0
    %370 = vmatprep.subr.mxu0 0.0
    %371 = vmatpush1.xpose.msra.mxu0 0.0
    %372 = vmatprep.subr.mxu0 0.0
    %373 = vmatpush1.xpose.msra.mxu0 0.0
    %374 = vmatprep.subr.mxu0 0.0
    %375 = vmatpush1.xpose.msra.mxu0 0.0
    %376 = vmatprep.subr.mxu0 0.0
    %377 = vmatpush1.xpose.msra.mxu0 0.0
    %378 = vmatprep.subr.mxu0 0.0
    %v379 = vand.u32 %v174, 4294901760
    %v380 = vsub.f32 %v174, %v379
    %381 = vmatpush1.xpose.msra.mxu0 %v380
    %382 = vmatprep.subr.mxu0 0.0
    %v383 = vand.u32 %v171, 4294901760
    %v384 = vsub.f32 %v171, %v383
    %385 = vmatpush1.xpose.msra.mxu0 %v384
    %386 = vmatprep.subr.mxu0 0.0
    %387 = vmatpush2.xpose.msra.mxu0 0.0
    %388 = vmatprep.subr.mxu0 0.0
    %389 = vmatpush2.xpose.msra.mxu0 0.0
    %390 = vmatprep.subr.mxu0 0.0
    %391 = vmatpush2.xpose.msra.mxu0 0.0
    %392 = vmatprep.subr.mxu0 0.0
    %393 = vmatpush2.xpose.msra.mxu0 0.0
    %394 = vmatprep.subr.mxu0 0.0
    %395 = vmatpush2.xpose.msra.mxu0 0.0
    %396 = vmatprep.subr.mxu0 0.0
    %397 = vmatpush2.xpose.msra.mxu0 0.0
    %398 = vmatprep.subr.mxu0 0.0
    %399 = vmatpush2.xpose.msra.mxu0 0.0
    %400 = vmatprep.subr.mxu0 0.0
    %401 = vmatpush2.xpose.msra.mxu0 0.0
    %402 = vmatprep.subr.mxu0 0.0
    %403 = vmatpush2.xpose.msra.mxu0 0.0
    %404 = vmatprep.subr.mxu0 0.0
    %405 = vmatpush2.xpose.msra.mxu0 0.0
    %406 = vmatprep.subr.mxu0 0.0
    %407 = vmatpush2.xpose.msra.mxu0 0.0
    %408 = vmatprep.subr.mxu0 0.0
    %409 = vmatpush2.xpose.msra.mxu0 0.0
    %410 = vmatprep.subr.mxu0 0.0
    %411 = vmatpush2.xpose.msra.mxu0 0.0
    %412 = vmatprep.subr.mxu0 0.0
    %413 = vmatpush2.xpose.msra.mxu0 0.0
    %414 = vmatprep.subr.mxu0 0.0
    %415 = vmatpush2.xpose.msra.mxu0 0.0
    %416 = vmatprep.subr.mxu0 0.0
    %417 = vmatpush2.xpose.msra.mxu0 0.0
    %418 = vmatprep.mubr.f32.mxu0 0.0
    %v419 = vand.u32 %v165, 4294901760
    %v420 = vsub.f32 %v165, %v419
    %421 = vmatmul.mubr.f32.gmra.mxu0 %v420
    %v422 = vpop.f32.mrf.mxu0
    %v423 = vadd.f32 %v341, %v422
    %v424 = vpop.f32.mrf.mxu0
    %425 = vmatprep.mubr.f32.mxu0 0.0
    %v426 = vand.u32 %v168, 4294901760
    %v427 = vsub.f32 %v168, %v426
    %428 = vmatmul.mubr.f32.gmra.mxu0 %v427
    %v429 = vpop.f32.mrf.mxu0
    %v430 = vadd.f32 %v347, %v429
    %v431 = vpop.f32.mrf.mxu0
    %432 = vdwg.mxu0
    %433 = vmatprep.subr.mxu0 0.0
    %434 = vmatpush1.xpose.msra.mxu0 0.0
    %435 = vmatprep.subr.mxu0 0.0
    %436 = vmatpush1.xpose.msra.mxu0 0.0
    %437 = vmatprep.subr.mxu0 0.0
    %438 = vmatpush1.xpose.msra.mxu0 0.0
    %439 = vmatprep.subr.mxu0 0.0
    %440 = vmatpush1.xpose.msra.mxu0 0.0
    %441 = vmatprep.subr.mxu0 0.0
    %442 = vmatpush1.xpose.msra.mxu0 0.0
    %443 = vmatprep.subr.mxu0 0.0
    %444 = vmatpush1.xpose.msra.mxu0 0.0
    %445 = vmatprep.subr.mxu0 0.0
    %446 = vmatpush1.xpose.msra.mxu0 0.0
    %447 = vmatprep.subr.mxu0 0.0
    %448 = vmatpush1.xpose.msra.mxu0 0.0
    %449 = vmatprep.subr.mxu0 0.0
    %450 = vmatpush1.xpose.msra.mxu0 0.0
    %451 = vmatprep.subr.mxu0 0.0
    %452 = vmatpush1.xpose.msra.mxu0 0.0
    %453 = vmatprep.subr.mxu0 0.0
    %454 = vmatpush1.xpose.msra.mxu0 0.0
    %455 = vmatprep.subr.mxu0 0.0
    %456 = vmatpush1.xpose.msra.mxu0 0.0
    %457 = vmatprep.subr.mxu0 0.0
    %458 = vmatpush1.xpose.msra.mxu0 0.0
    %459 = vmatprep.subr.mxu0 0.0
    %460 = vmatpush1.xpose.msra.mxu0 0.0
    %461 = vmatprep.subr.mxu0 0.0
    %v462 = vand.u32 %v174, 4294901760
    %463 = vmatpush1.xpose.msra.mxu0 %v462
    %464 = vmatprep.subr.mxu0 0.0
    %v465 = vand.u32 %v171, 4294901760
    %466 = vmatpush1.xpose.msra.mxu0 %v465
    %467 = vmatprep.subr.mxu0 0.0
    %468 = vmatpush2.xpose.msra.mxu0 0.0
    %469 = vmatprep.subr.mxu0 0.0
    %470 = vmatpush2.xpose.msra.mxu0 0.0
    %471 = vmatprep.subr.mxu0 0.0
    %472 = vmatpush2.xpose.msra.mxu0 0.0
    %473 = vmatprep.subr.mxu0 0.0
    %474 = vmatpush2.xpose.msra.mxu0 0.0
    %475 = vmatprep.subr.mxu0 0.0
    %476 = vmatpush2.xpose.msra.mxu0 0.0
    %477 = vmatprep.subr.mxu0 0.0
    %478 = vmatpush2.xpose.msra.mxu0 0.0
    %479 = vmatprep.subr.mxu0 0.0
    %480 = vmatpush2.xpose.msra.mxu0 0.0
    %481 = vmatprep.subr.mxu0 0.0
    %482 = vmatpush2.xpose.msra.mxu0 0.0
    %483 = vmatprep.subr.mxu0 0.0
    %484 = vmatpush2.xpose.msra.mxu0 0.0
    %485 = vmatprep.subr.mxu0 0.0
    %486 = vmatpush2.xpose.msra.mxu0 0.0
    %487 = vmatprep.subr.mxu0 0.0
    %488 = vmatpush2.xpose.msra.mxu0 0.0
    %489 = vmatprep.subr.mxu0 0.0
    %490 = vmatpush2.xpose.msra.mxu0 0.0
    %491 = vmatprep.subr.mxu0 0.0
    %492 = vmatpush2.xpose.msra.mxu0 0.0
    %493 = vmatprep.subr.mxu0 0.0
    %494 = vmatpush2.xpose.msra.mxu0 0.0
    %495 = vmatprep.subr.mxu0 0.0
    %496 = vmatpush2.xpose.msra.mxu0 0.0
    %497 = vmatprep.subr.mxu0 0.0
    %498 = vmatpush2.xpose.msra.mxu0 0.0
    %499 = vmatprep.mubr.f32.mxu0 0.0
    %v500 = vand.u32 %v165, 4294901760
    %v501 = vsub.f32 %v165, %v500
    %v502 = vand.u32 %v501, 4294901760
    %503 = vmatmul.mubr.f32.gmra.mxu0 %v502
    %v504 = vpop.f32.mrf.mxu0
    %v505 = vadd.f32 %v423, %v504
    %v506 = vpop.f32.mrf.mxu0
    %507 = vmatprep.mubr.f32.mxu0 0.0
    %v508 = vand.u32 %v168, 4294901760
    %v509 = vsub.f32 %v168, %v508
    %v510 = vand.u32 %v509, 4294901760
    %511 = vmatmul.mubr.f32.gmra.mxu0 %v510
    %v512 = vpop.f32.mrf.mxu0
    %v513 = vadd.f32 %v430, %v512
    %v514 = vpop.f32.mrf.mxu0
    %515 = vdwg.mxu0
    %516 = vmatprep.subr.mxu0 0.0
    %517 = vmatpush1.xpose.msra.mxu0 0.0
    %518 = vmatprep.subr.mxu0 0.0
    %519 = vmatpush1.xpose.msra.mxu0 0.0
    %520 = vmatprep.subr.mxu0 0.0
    %521 = vmatpush1.xpose.msra.mxu0 0.0
    %522 = vmatprep.subr.mxu0 0.0
    %523 = vmatpush1.xpose.msra.mxu0 0.0
    %524 = vmatprep.subr.mxu0 0.0
    %525 = vmatpush1.xpose.msra.mxu0 0.0
    %526 = vmatprep.subr.mxu0 0.0
    %527 = vmatpush1.xpose.msra.mxu0 0.0
    %528 = vmatprep.subr.mxu0 0.0
    %529 = vmatpush1.xpose.msra.mxu0 0.0
    %530 = vmatprep.subr.mxu0 0.0
    %531 = vmatpush1.xpose.msra.mxu0 0.0
    %532 = vmatprep.subr.mxu0 0.0
    %533 = vmatpush1.xpose.msra.mxu0 0.0
    %534 = vmatprep.subr.mxu0 0.0
    %535 = vmatpush1.xpose.msra.mxu0 0.0
    %536 = vmatprep.subr.mxu0 0.0
    %537 = vmatpush1.xpose.msra.mxu0 0.0
    %538 = vmatprep.subr.mxu0 0.0
    %539 = vmatpush1.xpose.msra.mxu0 0.0
    %540 = vmatprep.subr.mxu0 0.0
    %541 = vmatpush1.xpose.msra.mxu0 0.0
    %542 = vmatprep.subr.mxu0 0.0
    %543 = vmatpush1.xpose.msra.mxu0 0.0
    %544 = vmatprep.subr.mxu0 0.0
    %v545 = vand.u32 %v174, 4294901760
    %v546 = vsub.f32 %v174, %v545
    %v547 = vand.u32 %v546, 4294901760
    %548 = vmatpush1.xpose.msra.mxu0 %v547
    %549 = vmatprep.subr.mxu0 0.0
    %v550 = vand.u32 %v171, 4294901760
    %v551 = vsub.f32 %v171, %v550
    %v552 = vand.u32 %v551, 4294901760
    %553 = vmatpush1.xpose.msra.mxu0 %v552
    %554 = vmatprep.subr.mxu0 0.0
    %555 = vmatpush2.xpose.msra.mxu0 0.0
    %556 = vmatprep.subr.mxu0 0.0
    %557 = vmatpush2.xpose.msra.mxu0 0.0
    %558 = vmatprep.subr.mxu0 0.0
    %559 = vmatpush2.xpose.msra.mxu0 0.0
    %560 = vmatprep.subr.mxu0 0.0
    %561 = vmatpush2.xpose.msra.mxu0 0.0
    %562 = vmatprep.subr.mxu0 0.0
    %563 = vmatpush2.xpose.msra.mxu0 0.0
    %564 = vmatprep.subr.mxu0 0.0
    %565 = vmatpush2.xpose.msra.mxu0 0.0
    %566 = vmatprep.subr.mxu0 0.0
    %567 = vmatpush2.xpose.msra.mxu0 0.0
    %568 = vmatprep.subr.mxu0 0.0
    %569 = vmatpush2.xpose.msra.mxu0 0.0
    %570 = vmatprep.subr.mxu0 0.0
    %571 = vmatpush2.xpose.msra.mxu0 0.0
    %572 = vmatprep.subr.mxu0 0.0
    %573 = vmatpush2.xpose.msra.mxu0 0.0
    %574 = vmatprep.subr.mxu0 0.0
    %575 = vmatpush2.xpose.msra.mxu0 0.0
    %576 = vmatprep.subr.mxu0 0.0
    %577 = vmatpush2.xpose.msra.mxu0 0.0
    %578 = vmatprep.subr.mxu0 0.0
    %579 = vmatpush2.xpose.msra.mxu0 0.0
    %580 = vmatprep.subr.mxu0 0.0
    %581 = vmatpush2.xpose.msra.mxu0 0.0
    %582 = vmatprep.subr.mxu0 0.0
    %583 = vmatpush2.xpose.msra.mxu0 0.0
    %584 = vmatprep.subr.mxu0 0.0
    %585 = vmatpush2.xpose.msra.mxu0 0.0
    %586 = vmatprep.mubr.f32.mxu0 0.0
    %v587 = vand.u32 %v165, 4294901760
    %588 = vmatmul.mubr.f32.gmra.mxu0 %v587
    %v589 = vpop.f32.mrf.mxu0
    %v590 = vadd.f32 %v505, %v589
    %v591 = vpop.f32.mrf.mxu0
    %592 = vmatprep.mubr.f32.mxu0 0.0
    %v593 = vand.u32 %v168, 4294901760
    %594 = vmatmul.mubr.f32.gmra.mxu0 %v593
    %v595 = vpop.f32.mrf.mxu0
    %v596 = vadd.f32 %v513, %v595
    %v597 = vpop.f32.mrf.mxu0
    %598 = vdwg.mxu0
    %599 = vmatprep.subr.mxu0 0.0
    %600 = vmatpush1.xpose.msra.mxu0 0.0
    %601 = vmatprep.subr.mxu0 0.0
    %602 = vmatpush1.xpose.msra.mxu0 0.0
    %603 = vmatprep.subr.mxu0 0.0
    %604 = vmatpush1.xpose.msra.mxu0 0.0
    %605 = vmatprep.subr.mxu0 0.0
    %606 = vmatpush1.xpose.msra.mxu0 0.0
    %607 = vmatprep.subr.mxu0 0.0
    %608 = vmatpush1.xpose.msra.mxu0 0.0
    %609 = vmatprep.subr.mxu0 0.0
    %610 = vmatpush1.xpose.msra.mxu0 0.0
    %611 = vmatprep.subr.mxu0 0.0
    %612 = vmatpush1.xpose.msra.mxu0 0.0
    %613 = vmatprep.subr.mxu0 0.0
    %614 = vmatpush1.xpose.msra.mxu0 0.0
    %615 = vmatprep.subr.mxu0 0.0
    %616 = vmatpush1.xpose.msra.mxu0 0.0
    %617 = vmatprep.subr.mxu0 0.0
    %618 = vmatpush1.xpose.msra.mxu0 0.0
    %619 = vmatprep.subr.mxu0 0.0
    %620 = vmatpush1.xpose.msra.mxu0 0.0
    %621 = vmatprep.subr.mxu0 0.0
    %622 = vmatpush1.xpose.msra.mxu0 0.0
    %623 = vmatprep.subr.mxu0 0.0
    %624 = vmatpush1.xpose.msra.mxu0 0.0
    %625 = vmatprep.subr.mxu0 0.0
    %626 = vmatpush1.xpose.msra.mxu0 0.0
    %627 = vmatprep.subr.mxu0 0.0
    %v628 = vand.u32 %v174, 4294901760
    %629 = vmatpush1.xpose.msra.mxu0 %v628
    %630 = vmatprep.subr.mxu0 0.0
    %v631 = vand.u32 %v171, 4294901760
    %632 = vmatpush1.xpose.msra.mxu0 %v631
    %633 = vmatprep.subr.mxu0 0.0
    %634 = vmatpush2.xpose.msra.mxu0 0.0
    %635 = vmatprep.subr.mxu0 0.0
    %636 = vmatpush2.xpose.msra.mxu0 0.0
    %637 = vmatprep.subr.mxu0 0.0
    %638 = vmatpush2.xpose.msra.mxu0 0.0
    %639 = vmatprep.subr.mxu0 0.0
    %640 = vmatpush2.xpose.msra.mxu0 0.0
    %641 = vmatprep.subr.mxu0 0.0
    %642 = vmatpush2.xpose.msra.mxu0 0.0
    %643 = vmatprep.subr.mxu0 0.0
    %644 = vmatpush2.xpose.msra.mxu0 0.0
    %645 = vmatprep.subr.mxu0 0.0
    %646 = vmatpush2.xpose.msra.mxu0 0.0
    %647 = vmatprep.subr.mxu0 0.0
    %648 = vmatpush2.xpose.msra.mxu0 0.0
    %649 = vmatprep.subr.mxu0 0.0
    %650 = vmatpush2.xpose.msra.mxu0 0.0
    %651 = vmatprep.subr.mxu0 0.0
    %652 = vmatpush2.xpose.msra.mxu0 0.0
    %653 = vmatprep.subr.mxu0 0.0
    %654 = vmatpush2.xpose.msra.mxu0 0.0
    %655 = vmatprep.subr.mxu0 0.0
    %656 = vmatpush2.xpose.msra.mxu0 0.0
    %657 = vmatprep.subr.mxu0 0.0
    %658 = vmatpush2.xpose.msra.mxu0 0.0
    %659 = vmatprep.subr.mxu0 0.0
    %660 = vmatpush2.xpose.msra.mxu0 0.0
    %661 = vmatprep.subr.mxu0 0.0
    %662 = vmatpush2.xpose.msra.mxu0 0.0
    %663 = vmatprep.subr.mxu0 0.0
    %664 = vmatpush2.xpose.msra.mxu0 0.0
    %665 = vmatprep.mubr.f32.mxu0 0.0
    %v666 = vand.u32 %v165, 4294901760
    %667 = vmatmul.mubr.f32.gmra.mxu0 %v666
    %v668 = vpop.f32.mrf.mxu0
    %v669 = vadd.f32 %v590, %v668
    %v670 = vpop.f32.mrf.mxu0
    %671 = vmatprep.mubr.f32.mxu0 0.0
    %v672 = vand.u32 %v168, 4294901760
    %673 = vmatmul.mubr.f32.gmra.mxu0 %v672
    %v674 = vpop.f32.mrf.mxu0
    %v675 = vadd.f32 %v596, %v674
    %v676 = vpop.f32.mrf.mxu0
    %677 = vdwg.mxu0
    %v679 = vsel %vm163, %v149, 0
    %v682 = vsel %vm163, %v150, 0
    %v685 = vsel %vm163, %v40, 0
    %v688 = vsel %vm163, %v41, 0
    %690 = vmatprep.subr.mxu0 0.0
    %691 = vmatpush1.xpose.msra.mxu0 0.0
    %692 = vmatprep.subr.mxu0 0.0
    %693 = vmatpush1.xpose.msra.mxu0 0.0
    %694 = vmatprep.subr.mxu0 0.0
    %695 = vmatpush1.xpose.msra.mxu0 0.0
    %696 = vmatprep.subr.mxu0 0.0
    %697 = vmatpush1.xpose.msra.mxu0 0.0
    %698 = vmatprep.subr.mxu0 0.0
    %699 = vmatpush1.xpose.msra.mxu0 0.0
    %700 = vmatprep.subr.mxu0 0.0
    %701 = vmatpush1.xpose.msra.mxu0 0.0
    %702 = vmatprep.subr.mxu0 0.0
    %703 = vmatpush1.xpose.msra.mxu0 0.0
    %704 = vmatprep.subr.mxu0 0.0
    %705 = vmatpush1.xpose.msra.mxu0 0.0
    %706 = vmatprep.subr.mxu0 0.0
    %707 = vmatpush1.xpose.msra.mxu0 0.0
    %708 = vmatprep.subr.mxu0 0.0
    %709 = vmatpush1.xpose.msra.mxu0 0.0
    %710 = vmatprep.subr.mxu0 0.0
    %711 = vmatpush1.xpose.msra.mxu0 0.0
    %712 = vmatprep.subr.mxu0 0.0
    %713 = vmatpush1.xpose.msra.mxu0 0.0
    %714 = vmatprep.subr.mxu0 0.0
    %715 = vmatpush1.xpose.msra.mxu0 0.0
    %716 = vmatprep.subr.mxu0 0.0
    %717 = vmatpush1.xpose.msra.mxu0 0.0
    %718 = vmatprep.subr.mxu0 0.0
    %v719 = vand.u32 %v688, 4294901760
    %720 = vmatpush1.xpose.msra.mxu0 %v719
    %721 = vmatprep.subr.mxu0 0.0
    %v722 = vand.u32 %v685, 4294901760
    %723 = vmatpush1.xpose.msra.mxu0 %v722
    %724 = vmatprep.subr.mxu0 0.0
    %725 = vmatpush2.xpose.msra.mxu0 0.0
    %726 = vmatprep.subr.mxu0 0.0
    %727 = vmatpush2.xpose.msra.mxu0 0.0
    %728 = vmatprep.subr.mxu0 0.0
    %729 = vmatpush2.xpose.msra.mxu0 0.0
    %730 = vmatprep.subr.mxu0 0.0
    %731 = vmatpush2.xpose.msra.mxu0 0.0
    %732 = vmatprep.subr.mxu0 0.0
    %733 = vmatpush2.xpose.msra.mxu0 0.0
    %734 = vmatprep.subr.mxu0 0.0
    %735 = vmatpush2.xpose.msra.mxu0 0.0
    %736 = vmatprep.subr.mxu0 0.0
    %737 = vmatpush2.xpose.msra.mxu0 0.0
    %738 = vmatprep.subr.mxu0 0.0
    %739 = vmatpush2.xpose.msra.mxu0 0.0
    %740 = vmatprep.subr.mxu0 0.0
    %741 = vmatpush2.xpose.msra.mxu0 0.0
    %742 = vmatprep.subr.mxu0 0.0
    %743 = vmatpush2.xpose.msra.mxu0 0.0
    %744 = vmatprep.subr.mxu0 0.0
    %745 = vmatpush2.xpose.msra.mxu0 0.0
    %746 = vmatprep.subr.mxu0 0.0
    %747 = vmatpush2.xpose.msra.mxu0 0.0
    %748 = vmatprep.subr.mxu0 0.0
    %749 = vmatpush2.xpose.msra.mxu0 0.0
    %750 = vmatprep.subr.mxu0 0.0
    %751 = vmatpush2.xpose.msra.mxu0 0.0
    %752 = vmatprep.subr.mxu0 0.0
    %753 = vmatpush2.xpose.msra.mxu0 0.0
    %754 = vmatprep.subr.mxu0 0.0
    %755 = vmatpush2.xpose.msra.mxu0 0.0
    %756 = vmatprep.mubr.f32.mxu0 0.0
    %v757 = vand.u32 %v679, 4294901760
    %v758 = vsub.f32 %v679, %v757
    %v759 = vand.u32 %v758, 4294901760
    %v760 = vsub.f32 %v758, %v759
    %v761 = vand.u32 %v760, 4294901760
    %762 = vmatmul.mubr.f32.gmra.mxu0 %v761
    %v763 = vpop.f32.mrf.mxu0
    %v764 = vadd.f32 0.0, %v763
    %v765 = vpop.f32.mrf.mxu0
    %766 = vmatprep.mubr.f32.mxu0 0.0
    %v767 = vand.u32 %v682, 4294901760
    %v768 = vsub.f32 %v682, %v767
    %v769 = vand.u32 %v768, 4294901760
    %v770 = vsub.f32 %v768, %v769
    %v771 = vand.u32 %v770, 4294901760
    %772 = vmatmul.mubr.f32.gmra.mxu0 %v771
    %v773 = vpop.f32.mrf.mxu0
    %v774 = vadd.f32 0.0, %v773
    %v775 = vpop.f32.mrf.mxu0
    %776 = vdwg.mxu0
    %777 = vmatprep.subr.mxu0 0.0
    %778 = vmatpush1.xpose.msra.mxu0 0.0
    %779 = vmatprep.subr.mxu0 0.0
    %780 = vmatpush1.xpose.msra.mxu0 0.0
    %781 = vmatprep.subr.mxu0 0.0
    %782 = vmatpush1.xpose.msra.mxu0 0.0
    %783 = vmatprep.subr.mxu0 0.0
    %784 = vmatpush1.xpose.msra.mxu0 0.0
    %785 = vmatprep.subr.mxu0 0.0
    %786 = vmatpush1.xpose.msra.mxu0 0.0
    %787 = vmatprep.subr.mxu0 0.0
    %788 = vmatpush1.xpose.msra.mxu0 0.0
    %789 = vmatprep.subr.mxu0 0.0
    %790 = vmatpush1.xpose.msra.mxu0 0.0
    %791 = vmatprep.subr.mxu0 0.0
    %792 = vmatpush1.xpose.msra.mxu0 0.0
    %793 = vmatprep.subr.mxu0 0.0
    %794 = vmatpush1.xpose.msra.mxu0 0.0
    %795 = vmatprep.subr.mxu0 0.0
    %796 = vmatpush1.xpose.msra.mxu0 0.0
    %797 = vmatprep.subr.mxu0 0.0
    %798 = vmatpush1.xpose.msra.mxu0 0.0
    %799 = vmatprep.subr.mxu0 0.0
    %800 = vmatpush1.xpose.msra.mxu0 0.0
    %801 = vmatprep.subr.mxu0 0.0
    %802 = vmatpush1.xpose.msra.mxu0 0.0
    %803 = vmatprep.subr.mxu0 0.0
    %804 = vmatpush1.xpose.msra.mxu0 0.0
    %805 = vmatprep.subr.mxu0 0.0
    %v806 = vand.u32 %v688, 4294901760
    %v807 = vsub.f32 %v688, %v806
    %v808 = vand.u32 %v807, 4294901760
    %v809 = vsub.f32 %v807, %v808
    %v810 = vand.u32 %v809, 4294901760
    %811 = vmatpush1.xpose.msra.mxu0 %v810
    %812 = vmatprep.subr.mxu0 0.0
    %v813 = vand.u32 %v685, 4294901760
    %v814 = vsub.f32 %v685, %v813
    %v815 = vand.u32 %v814, 4294901760
    %v816 = vsub.f32 %v814, %v815
    %v817 = vand.u32 %v816, 4294901760
    %818 = vmatpush1.xpose.msra.mxu0 %v817
    %819 = vmatprep.subr.mxu0 0.0
    %820 = vmatpush2.xpose.msra.mxu0 0.0
    %821 = vmatprep.subr.mxu0 0.0
    %822 = vmatpush2.xpose.msra.mxu0 0.0
    %823 = vmatprep.subr.mxu0 0.0
    %824 = vmatpush2.xpose.msra.mxu0 0.0
    %825 = vmatprep.subr.mxu0 0.0
    %826 = vmatpush2.xpose.msra.mxu0 0.0
    %827 = vmatprep.subr.mxu0 0.0
    %828 = vmatpush2.xpose.msra.mxu0 0.0
    %829 = vmatprep.subr.mxu0 0.0
    %830 = vmatpush2.xpose.msra.mxu0 0.0
    %831 = vmatprep.subr.mxu0 0.0
    %832 = vmatpush2.xpose.msra.mxu0 0.0
    %833 = vmatprep.subr.mxu0 0.0
    %834 = vmatpush2.xpose.msra.mxu0 0.0
    %835 = vmatprep.subr.mxu0 0.0
    %836 = vmatpush2.xpose.msra.mxu0 0.0
    %837 = vmatprep.subr.mxu0 0.0
    %838 = vmatpush2.xpose.msra.mxu0 0.0
    %839 = vmatprep.subr.mxu0 0.0
    %840 = vmatpush2.xpose.msra.mxu0 0.0
    %841 = vmatprep.subr.mxu0 0.0
    %842 = vmatpush2.xpose.msra.mxu0 0.0
    %843 = vmatprep.subr.mxu0 0.0
    %844 = vmatpush2.xpose.msra.mxu0 0.0
    %845 = vmatprep.subr.mxu0 0.0
    %846 = vmatpush2.xpose.msra.mxu0 0.0
    %847 = vmatprep.subr.mxu0 0.0
    %848 = vmatpush2.xpose.msra.mxu0 0.0
    %849 = vmatprep.subr.mxu0 0.0
    %850 = vmatpush2.xpose.msra.mxu0 0.0
    %851 = vmatprep.mubr.f32.mxu0 0.0
    %v852 = vand.u32 %v679, 4294901760
    %853 = vmatmul.mubr.f32.gmra.mxu0 %v852
    %v854 = vpop.f32.mrf.mxu0
    %v855 = vadd.f32 %v764, %v854
    %v856 = vpop.f32.mrf.mxu0
    %857 = vmatprep.mubr.f32.mxu0 0.0
    %v858 = vand.u32 %v682, 4294901760
    %859 = vmatmul.mubr.f32.gmra.mxu0 %v858
    %v860 = vpop.f32.mrf.mxu0
    %v861 = vadd.f32 %v774, %v860
    %v862 = vpop.f32.mrf.mxu0
    %863 = vdwg.mxu0
    %864 = vmatprep.subr.mxu0 0.0
    %865 = vmatpush1.xpose.msra.mxu0 0.0
    %866 = vmatprep.subr.mxu0 0.0
    %867 = vmatpush1.xpose.msra.mxu0 0.0
    %868 = vmatprep.subr.mxu0 0.0
    %869 = vmatpush1.xpose.msra.mxu0 0.0
    %870 = vmatprep.subr.mxu0 0.0
    %871 = vmatpush1.xpose.msra.mxu0 0.0
    %872 = vmatprep.subr.mxu0 0.0
    %873 = vmatpush1.xpose.msra.mxu0 0.0
    %874 = vmatprep.subr.mxu0 0.0
    %875 = vmatpush1.xpose.msra.mxu0 0.0
    %876 = vmatprep.subr.mxu0 0.0
    %877 = vmatpush1.xpose.msra.mxu0 0.0
    %878 = vmatprep.subr.mxu0 0.0
    %879 = vmatpush1.xpose.msra.mxu0 0.0
    %880 = vmatprep.subr.mxu0 0.0
    %881 = vmatpush1.xpose.msra.mxu0 0.0
    %882 = vmatprep.subr.mxu0 0.0
    %883 = vmatpush1.xpose.msra.mxu0 0.0
    %884 = vmatprep.subr.mxu0 0.0
    %885 = vmatpush1.xpose.msra.mxu0 0.0
    %886 = vmatprep.subr.mxu0 0.0
    %887 = vmatpush1.xpose.msra.mxu0 0.0
    %888 = vmatprep.subr.mxu0 0.0
    %889 = vmatpush1.xpose.msra.mxu0 0.0
    %890 = vmatprep.subr.mxu0 0.0
    %891 = vmatpush1.xpose.msra.mxu0 0.0
    %892 = vmatprep.subr.mxu0 0.0
    %v893 = vand.u32 %v688, 4294901760
    %v894 = vsub.f32 %v688, %v893
    %895 = vmatpush1.xpose.msra.mxu0 %v894
    %896 = vmatprep.subr.mxu0 0.0
    %v897 = vand.u32 %v685, 4294901760
    %v898 = vsub.f32 %v685, %v897
    %899 = vmatpush1.xpose.msra.mxu0 %v898
    %900 = vmatprep.subr.mxu0 0.0
    %901 = vmatpush2.xpose.msra.mxu0 0.0
    %902 = vmatprep.subr.mxu0 0.0
    %903 = vmatpush2.xpose.msra.mxu0 0.0
    %904 = vmatprep.subr.mxu0 0.0
    %905 = vmatpush2.xpose.msra.mxu0 0.0
    %906 = vmatprep.subr.mxu0 0.0
    %907 = vmatpush2.xpose.msra.mxu0 0.0
    %908 = vmatprep.subr.mxu0 0.0
    %909 = vmatpush2.xpose.msra.mxu0 0.0
    %910 = vmatprep.subr.mxu0 0.0
    %911 = vmatpush2.xpose.msra.mxu0 0.0
    %912 = vmatprep.subr.mxu0 0.0
    %913 = vmatpush2.xpose.msra.mxu0 0.0
    %914 = vmatprep.subr.mxu0 0.0
    %915 = vmatpush2.xpose.msra.mxu0 0.0
    %916 = vmatprep.subr.mxu0 0.0
    %917 = vmatpush2.xpose.msra.mxu0 0.0
    %918 = vmatprep.subr.mxu0 0.0
    %919 = vmatpush2.xpose.msra.mxu0 0.0
    %920 = vmatprep.subr.mxu0 0.0
    %921 = vmatpush2.xpose.msra.mxu0 0.0
    %922 = vmatprep.subr.mxu0 0.0
    %923 = vmatpush2.xpose.msra.mxu0 0.0
    %924 = vmatprep.subr.mxu0 0.0
    %925 = vmatpush2.xpose.msra.mxu0 0.0
    %926 = vmatprep.subr.mxu0 0.0
    %927 = vmatpush2.xpose.msra.mxu0 0.0
    %928 = vmatprep.subr.mxu0 0.0
    %929 = vmatpush2.xpose.msra.mxu0 0.0
    %930 = vmatprep.subr.mxu0 0.0
    %931 = vmatpush2.xpose.msra.mxu0 0.0
    %932 = vmatprep.mubr.f32.mxu0 0.0
    %v933 = vand.u32 %v679, 4294901760
    %v934 = vsub.f32 %v679, %v933
    %935 = vmatmul.mubr.f32.gmra.mxu0 %v934
    %v936 = vpop.f32.mrf.mxu0
    %v937 = vadd.f32 %v855, %v936
    %v938 = vpop.f32.mrf.mxu0
    %939 = vmatprep.mubr.f32.mxu0 0.0
    %v940 = vand.u32 %v682, 4294901760
    %v941 = vsub.f32 %v682, %v940
    %942 = vmatmul.mubr.f32.gmra.mxu0 %v941
    %v943 = vpop.f32.mrf.mxu0
    %v944 = vadd.f32 %v861, %v943
    %v945 = vpop.f32.mrf.mxu0
    %946 = vdwg.mxu0
    %947 = vmatprep.subr.mxu0 0.0
    %948 = vmatpush1.xpose.msra.mxu0 0.0
    %949 = vmatprep.subr.mxu0 0.0
    %950 = vmatpush1.xpose.msra.mxu0 0.0
    %951 = vmatprep.subr.mxu0 0.0
    %952 = vmatpush1.xpose.msra.mxu0 0.0
    %953 = vmatprep.subr.mxu0 0.0
    %954 = vmatpush1.xpose.msra.mxu0 0.0
    %955 = vmatprep.subr.mxu0 0.0
    %956 = vmatpush1.xpose.msra.mxu0 0.0
    %957 = vmatprep.subr.mxu0 0.0
    %958 = vmatpush1.xpose.msra.mxu0 0.0
    %959 = vmatprep.subr.mxu0 0.0
    %960 = vmatpush1.xpose.msra.mxu0 0.0
    %961 = vmatprep.subr.mxu0 0.0
    %962 = vmatpush1.xpose.msra.mxu0 0.0
    %963 = vmatprep.subr.mxu0 0.0
    %964 = vmatpush1.xpose.msra.mxu0 0.0
    %965 = vmatprep.subr.mxu0 0.0
    %966 = vmatpush1.xpose.msra.mxu0 0.0
    %967 = vmatprep.subr.mxu0 0.0
    %968 = vmatpush1.xpose.msra.mxu0 0.0
    %969 = vmatprep.subr.mxu0 0.0
    %970 = vmatpush1.xpose.msra.mxu0 0.0
    %971 = vmatprep.subr.mxu0 0.0
    %972 = vmatpush1.xpose.msra.mxu0 0.0
    %973 = vmatprep.subr.mxu0 0.0
    %974 = vmatpush1.xpose.msra.mxu0 0.0
    %975 = vmatprep.subr.mxu0 0.0
    %v976 = vand.u32 %v688, 4294901760
    %977 = vmatpush1.xpose.msra.mxu0 %v976
    %978 = vmatprep.subr.mxu0 0.0
    %v979 = vand.u32 %v685, 4294901760
    %980 = vmatpush1.xpose.msra.mxu0 %v979
    %981 = vmatprep.subr.mxu0 0.0
    %982 = vmatpush2.xpose.msra.mxu0 0.0
    %983 = vmatprep.subr.mxu0 0.0
    %984 = vmatpush2.xpose.msra.mxu0 0.0
    %985 = vmatprep.subr.mxu0 0.0
    %986 = vmatpush2.xpose.msra.mxu0 0.0
    %987 = vmatprep.subr.mxu0 0.0
    %988 = vmatpush2.xpose.msra.mxu0 0.0
    %989 = vmatprep.subr.mxu0 0.0
    %990 = vmatpush2.xpose.msra.mxu0 0.0
    %991 = vmatprep.subr.mxu0 0.0
    %992 = vmatpush2.xpose.msra.mxu0 0.0
    %993 = vmatprep.subr.mxu0 0.0
    %994 = vmatpush2.xpose.msra.mxu0 0.0
    %995 = vmatprep.subr.mxu0 0.0
    %996 = vmatpush2.xpose.msra.mxu0 0.0
    %997 = vmatprep.subr.mxu0 0.0
    %998 = vmatpush2.xpose.msra.mxu0 0.0
    %999 = vmatprep.subr.mxu0 0.0
    %1000 = vmatpush2.xpose.msra.mxu0 0.0
    %1001 = vmatprep.subr.mxu0 0.0
    %1002 = vmatpush2.xpose.msra.mxu0 0.0
    %1003 = vmatprep.subr.mxu0 0.0
    %1004 = vmatpush2.xpose.msra.mxu0 0.0
    %1005 = vmatprep.subr.mxu0 0.0
    %1006 = vmatpush2.xpose.msra.mxu0 0.0
    %1007 = vmatprep.subr.mxu0 0.0
    %1008 = vmatpush2.xpose.msra.mxu0 0.0
    %1009 = vmatprep.subr.mxu0 0.0
    %1010 = vmatpush2.xpose.msra.mxu0 0.0
    %1011 = vmatprep.subr.mxu0 0.0
    %1012 = vmatpush2.xpose.msra.mxu0 0.0
    %1013 = vmatprep.mubr.f32.mxu0 0.0
    %v1014 = vand.u32 %v679, 4294901760
    %v1015 = vsub.f32 %v679, %v1014
    %v1016 = vand.u32 %v1015, 4294901760
    %1017 = vmatmul.mubr.f32.gmra.mxu0 %v1016
    %v1018 = vpop.f32.mrf.mxu0
    %v1019 = vadd.f32 %v937, %v1018
    %v1020 = vpop.f32.mrf.mxu0
    %1021 = vmatprep.mubr.f32.mxu0 0.0
    %v1022 = vand.u32 %v682, 4294901760
    %v1023 = vsub.f32 %v682, %v1022
    %v1024 = vand.u32 %v1023, 4294901760
    %1025 = vmatmul.mubr.f32.gmra.mxu0 %v1024
    %v1026 = vpop.f32.mrf.mxu0
    %v1027 = vadd.f32 %v944, %v1026
    %v1028 = vpop.f32.mrf.mxu0
    %1029 = vdwg.mxu0
    %1030 = vmatprep.subr.mxu0 0.0
    %1031 = vmatpush1.xpose.msra.mxu0 0.0
    %1032 = vmatprep.subr.mxu0 0.0
    %1033 = vmatpush1.xpose.msra.mxu0 0.0
    %1034 = vmatprep.subr.mxu0 0.0
    %1035 = vmatpush1.xpose.msra.mxu0 0.0
    %1036 = vmatprep.subr.mxu0 0.0
    %1037 = vmatpush1.xpose.msra.mxu0 0.0
    %1038 = vmatprep.subr.mxu0 0.0
    %1039 = vmatpush1.xpose.msra.mxu0 0.0
    %1040 = vmatprep.subr.mxu0 0.0
    %1041 = vmatpush1.xpose.msra.mxu0 0.0
    %1042 = vmatprep.subr.mxu0 0.0
    %1043 = vmatpush1.xpose.msra.mxu0 0.0
    %1044 = vmatprep.subr.mxu0 0.0
    %1045 = vmatpush1.xpose.msra.mxu0 0.0
    %1046 = vmatprep.subr.mxu0 0.0
    %1047 = vmatpush1.xpose.msra.mxu0 0.0
    %1048 = vmatprep.subr.mxu0 0.0
    %1049 = vmatpush1.xpose.msra.mxu0 0.0
    %1050 = vmatprep.subr.mxu0 0.0
    %1051 = vmatpush1.xpose.msra.mxu0 0.0
    %1052 = vmatprep.subr.mxu0 0.0
    %1053 = vmatpush1.xpose.msra.mxu0 0.0
    %1054 = vmatprep.subr.mxu0 0.0
    %1055 = vmatpush1.xpose.msra.mxu0 0.0
    %1056 = vmatprep.subr.mxu0 0.0
    %1057 = vmatpush1.xpose.msra.mxu0 0.0
    %1058 = vmatprep.subr.mxu0 0.0
    %v1059 = vand.u32 %v688, 4294901760
    %v1060 = vsub.f32 %v688, %v1059
    %v1061 = vand.u32 %v1060, 4294901760
    %1062 = vmatpush1.xpose.msra.mxu0 %v1061
    %1063 = vmatprep.subr.mxu0 0.0
    %v1064 = vand.u32 %v685, 4294901760
    %v1065 = vsub.f32 %v685, %v1064
    %v1066 = vand.u32 %v1065, 4294901760
    %1067 = vmatpush1.xpose.msra.mxu0 %v1066
    %1068 = vmatprep.subr.mxu0 0.0
    %1069 = vmatpush2.xpose.msra.mxu0 0.0
    %1070 = vmatprep.subr.mxu0 0.0
    %1071 = vmatpush2.xpose.msra.mxu0 0.0
    %1072 = vmatprep.subr.mxu0 0.0
    %1073 = vmatpush2.xpose.msra.mxu0 0.0
    %1074 = vmatprep.subr.mxu0 0.0
    %1075 = vmatpush2.xpose.msra.mxu0 0.0
    %1076 = vmatprep.subr.mxu0 0.0
    %1077 = vmatpush2.xpose.msra.mxu0 0.0
    %1078 = vmatprep.subr.mxu0 0.0
    %1079 = vmatpush2.xpose.msra.mxu0 0.0
    %1080 = vmatprep.subr.mxu0 0.0
    %1081 = vmatpush2.xpose.msra.mxu0 0.0
    %1082 = vmatprep.subr.mxu0 0.0
    %1083 = vmatpush2.xpose.msra.mxu0 0.0
    %1084 = vmatprep.subr.mxu0 0.0
    %1085 = vmatpush2.xpose.msra.mxu0 0.0
    %1086 = vmatprep.subr.mxu0 0.0
    %1087 = vmatpush2.xpose.msra.mxu0 0.0
    %1088 = vmatprep.subr.mxu0 0.0
    %1089 = vmatpush2.xpose.msra.mxu0 0.0
    %1090 = vmatprep.subr.mxu0 0.0
    %1091 = vmatpush2.xpose.msra.mxu0 0.0
    %1092 = vmatprep.subr.mxu0 0.0
    %1093 = vmatpush2.xpose.msra.mxu0 0.0
    %1094 = vmatprep.subr.mxu0 0.0
    %1095 = vmatpush2.xpose.msra.mxu0 0.0
    %1096 = vmatprep.subr.mxu0 0.0
    %1097 = vmatpush2.xpose.msra.mxu0 0.0
    %1098 = vmatprep.subr.mxu0 0.0
    %1099 = vmatpush2.xpose.msra.mxu0 0.0
    %1100 = vmatprep.mubr.f32.mxu0 0.0
    %v1101 = vand.u32 %v679, 4294901760
    %1102 = vmatmul.mubr.f32.gmra.mxu0 %v1101
    %v1103 = vpop.f32.mrf.mxu0
    %v1104 = vadd.f32 %v1019, %v1103
    %v1105 = vpop.f32.mrf.mxu0
    %1106 = vmatprep.mubr.f32.mxu0 0.0
    %v1107 = vand.u32 %v682, 4294901760
    %1108 = vmatmul.mubr.f32.gmra.mxu0 %v1107
    %v1109 = vpop.f32.mrf.mxu0
    %v1110 = vadd.f32 %v1027, %v1109
    %v1111 = vpop.f32.mrf.mxu0
    %1112 = vdwg.mxu0
    %1113 = vmatprep.subr.mxu0 0.0
    %1114 = vmatpush1.xpose.msra.mxu0 0.0
    %1115 = vmatprep.subr.mxu0 0.0
    %1116 = vmatpush1.xpose.msra.mxu0 0.0
    %1117 = vmatprep.subr.mxu0 0.0
    %1118 = vmatpush1.xpose.msra.mxu0 0.0
    %1119 = vmatprep.subr.mxu0 0.0
    %1120 = vmatpush1.xpose.msra.mxu0 0.0
    %1121 = vmatprep.subr.mxu0 0.0
    %1122 = vmatpush1.xpose.msra.mxu0 0.0
    %1123 = vmatprep.subr.mxu0 0.0
    %1124 = vmatpush1.xpose.msra.mxu0 0.0
    %1125 = vmatprep.subr.mxu0 0.0
    %1126 = vmatpush1.xpose.msra.mxu0 0.0
    %1127 = vmatprep.subr.mxu0 0.0
    %1128 = vmatpush1.xpose.msra.mxu0 0.0
    %1129 = vmatprep.subr.mxu0 0.0
    %1130 = vmatpush1.xpose.msra.mxu0 0.0
    %1131 = vmatprep.subr.mxu0 0.0
    %1132 = vmatpush1.xpose.msra.mxu0 0.0
    %1133 = vmatprep.subr.mxu0 0.0
    %1134 = vmatpush1.xpose.msra.mxu0 0.0
    %1135 = vmatprep.subr.mxu0 0.0
    %1136 = vmatpush1.xpose.msra.mxu0 0.0
    %1137 = vmatprep.subr.mxu0 0.0
    %1138 = vmatpush1.xpose.msra.mxu0 0.0
    %1139 = vmatprep.subr.mxu0 0.0
    %1140 = vmatpush1.xpose.msra.mxu0 0.0
    %1141 = vmatprep.subr.mxu0 0.0
    %v1142 = vand.u32 %v688, 4294901760
    %1143 = vmatpush1.xpose.msra.mxu0 %v1142
    %1144 = vmatprep.subr.mxu0 0.0
    %v1145 = vand.u32 %v685, 4294901760
    %1146 = vmatpush1.xpose.msra.mxu0 %v1145
    %1147 = vmatprep.subr.mxu0 0.0
    %1148 = vmatpush2.xpose.msra.mxu0 0.0
    %1149 = vmatprep.subr.mxu0 0.0
    %1150 = vmatpush2.xpose.msra.mxu0 0.0
    %1151 = vmatprep.subr.mxu0 0.0
    %1152 = vmatpush2.xpose.msra.mxu0 0.0
    %1153 = vmatprep.subr.mxu0 0.0
    %1154 = vmatpush2.xpose.msra.mxu0 0.0
    %1155 = vmatprep.subr.mxu0 0.0
    %1156 = vmatpush2.xpose.msra.mxu0 0.0
    %1157 = vmatprep.subr.mxu0 0.0
    %1158 = vmatpush2.xpose.msra.mxu0 0.0
    %1159 = vmatprep.subr.mxu0 0.0
    %1160 = vmatpush2.xpose.msra.mxu0 0.0
    %1161 = vmatprep.subr.mxu0 0.0
    %1162 = vmatpush2.xpose.msra.mxu0 0.0
    %1163 = vmatprep.subr.mxu0 0.0
    %1164 = vmatpush2.xpose.msra.mxu0 0.0
    %1165 = vmatprep.subr.mxu0 0.0
    %1166 = vmatpush2.xpose.msra.mxu0 0.0
    %1167 = vmatprep.subr.mxu0 0.0
    %1168 = vmatpush2.xpose.msra.mxu0 0.0
    %1169 = vmatprep.subr.mxu0 0.0
    %1170 = vmatpush2.xpose.msra.mxu0 0.0
    %1171 = vmatprep.subr.mxu0 0.0
    %1172 = vmatpush2.xpose.msra.mxu0 0.0
    %1173 = vmatprep.subr.mxu0 0.0
    %1174 = vmatpush2.xpose.msra.mxu0 0.0
    %1175 = vmatprep.subr.mxu0 0.0
    %1176 = vmatpush2.xpose.msra.mxu0 0.0
    %1177 = vmatprep.subr.mxu0 0.0
    %1178 = vmatpush2.xpose.msra.mxu0 0.0
    %1179 = vmatprep.mubr.f32.mxu0 0.0
    %v1180 = vand.u32 %v679, 4294901760
    %1181 = vmatmul.mubr.f32.gmra.mxu0 %v1180
    %v1182 = vpop.f32.mrf.mxu0
    %v1183 = vadd.f32 %v1104, %v1182
    %v1184 = vpop.f32.mrf.mxu0
    %1185 = vmatprep.mubr.f32.mxu0 0.0
    %v1186 = vand.u32 %v682, 4294901760
    %1187 = vmatmul.mubr.f32.gmra.mxu0 %v1186
    %v1188 = vpop.f32.mrf.mxu0
    %v1189 = vadd.f32 %v1110, %v1188
    %v1190 = vpop.f32.mrf.mxu0
    %1191 = vdwg.mxu0
    %v1193 = vsel %vm163, %v151, 0
    %v1196 = vsel %vm163, %v152, 0
    %v1199 = vsel %vm163, %v42, 0
    %v1202 = vsel %vm163, %v43, 0
    %1204 = vmatprep.subr.mxu0 0.0
    %1205 = vmatpush1.xpose.msra.mxu0 0.0
    %1206 = vmatprep.subr.mxu0 0.0
    %1207 = vmatpush1.xpose.msra.mxu0 0.0
    %1208 = vmatprep.subr.mxu0 0.0
    %1209 = vmatpush1.xpose.msra.mxu0 0.0
    %1210 = vmatprep.subr.mxu0 0.0
    %1211 = vmatpush1.xpose.msra.mxu0 0.0
    %1212 = vmatprep.subr.mxu0 0.0
    %1213 = vmatpush1.xpose.msra.mxu0 0.0
    %1214 = vmatprep.subr.mxu0 0.0
    %1215 = vmatpush1.xpose.msra.mxu0 0.0
    %1216 = vmatprep.subr.mxu0 0.0
    %1217 = vmatpush1.xpose.msra.mxu0 0.0
    %1218 = vmatprep.subr.mxu0 0.0
    %1219 = vmatpush1.xpose.msra.mxu0 0.0
    %1220 = vmatprep.subr.mxu0 0.0
    %1221 = vmatpush1.xpose.msra.mxu0 0.0
    %1222 = vmatprep.subr.mxu0 0.0
    %1223 = vmatpush1.xpose.msra.mxu0 0.0
    %1224 = vmatprep.subr.mxu0 0.0
    %1225 = vmatpush1.xpose.msra.mxu0 0.0
    %1226 = vmatprep.subr.mxu0 0.0
    %1227 = vmatpush1.xpose.msra.mxu0 0.0
    %1228 = vmatprep.subr.mxu0 0.0
    %1229 = vmatpush1.xpose.msra.mxu0 0.0
    %1230 = vmatprep.subr.mxu0 0.0
    %1231 = vmatpush1.xpose.msra.mxu0 0.0
    %1232 = vmatprep.subr.mxu0 0.0
    %v1233 = vand.u32 %v1202, 4294901760
    %1234 = vmatpush1.xpose.msra.mxu0 %v1233
    %1235 = vmatprep.subr.mxu0 0.0
    %v1236 = vand.u32 %v1199, 4294901760
    %1237 = vmatpush1.xpose.msra.mxu0 %v1236
    %1238 = vmatprep.subr.mxu0 0.0
    %1239 = vmatpush2.xpose.msra.mxu0 0.0
    %1240 = vmatprep.subr.mxu0 0.0
    %1241 = vmatpush2.xpose.msra.mxu0 0.0
    %1242 = vmatprep.subr.mxu0 0.0
    %1243 = vmatpush2.xpose.msra.mxu0 0.0
    %1244 = vmatprep.subr.mxu0 0.0
    %1245 = vmatpush2.xpose.msra.mxu0 0.0
    %1246 = vmatprep.subr.mxu0 0.0
    %1247 = vmatpush2.xpose.msra.mxu0 0.0
    %1248 = vmatprep.subr.mxu0 0.0
    %1249 = vmatpush2.xpose.msra.mxu0 0.0
    %1250 = vmatprep.subr.mxu0 0.0
    %1251 = vmatpush2.xpose.msra.mxu0 0.0
    %1252 = vmatprep.subr.mxu0 0.0
    %1253 = vmatpush2.xpose.msra.mxu0 0.0
    %1254 = vmatprep.subr.mxu0 0.0
    %1255 = vmatpush2.xpose.msra.mxu0 0.0
    %1256 = vmatprep.subr.mxu0 0.0
    %1257 = vmatpush2.xpose.msra.mxu0 0.0
    %1258 = vmatprep.subr.mxu0 0.0
    %1259 = vmatpush2.xpose.msra.mxu0 0.0
    %1260 = vmatprep.subr.mxu0 0.0
    %1261 = vmatpush2.xpose.msra.mxu0 0.0
    %1262 = vmatprep.subr.mxu0 0.0
    %1263 = vmatpush2.xpose.msra.mxu0 0.0
    %1264 = vmatprep.subr.mxu0 0.0
    %1265 = vmatpush2.xpose.msra.mxu0 0.0
    %1266 = vmatprep.subr.mxu0 0.0
    %1267 = vmatpush2.xpose.msra.mxu0 0.0
    %1268 = vmatprep.subr.mxu0 0.0
    %1269 = vmatpush2.xpose.msra.mxu0 0.0
    %1270 = vmatprep.mubr.f32.mxu0 0.0
    %v1271 = vand.u32 %v1193, 4294901760
    %v1272 = vsub.f32 %v1193, %v1271
    %v1273 = vand.u32 %v1272, 4294901760
    %v1274 = vsub.f32 %v1272, %v1273
    %v1275 = vand.u32 %v1274, 4294901760
    %1276 = vmatmul.mubr.f32.gmra.mxu0 %v1275
    %v1277 = vpop.f32.mrf.mxu0
    %v1278 = vadd.f32 0.0, %v1277
    %v1279 = vpop.f32.mrf.mxu0
    %1280 = vmatprep.mubr.f32.mxu0 0.0
    %v1281 = vand.u32 %v1196, 4294901760
    %v1282 = vsub.f32 %v1196, %v1281
    %v1283 = vand.u32 %v1282, 4294901760
    %v1284 = vsub.f32 %v1282, %v1283
    %v1285 = vand.u32 %v1284, 4294901760
    %1286 = vmatmul.mubr.f32.gmra.mxu0 %v1285
    %v1287 = vpop.f32.mrf.mxu0
    %v1288 = vadd.f32 0.0, %v1287
    %v1289 = vpop.f32.mrf.mxu0
    %1290 = vdwg.mxu0
    %1291 = vmatprep.subr.mxu0 0.0
    %1292 = vmatpush1.xpose.msra.mxu0 0.0
    %1293 = vmatprep.subr.mxu0 0.0
    %1294 = vmatpush1.xpose.msra.mxu0 0.0
    %1295 = vmatprep.subr.mxu0 0.0
    %1296 = vmatpush1.xpose.msra.mxu0 0.0
    %1297 = vmatprep.subr.mxu0 0.0
    %1298 = vmatpush1.xpose.msra.mxu0 0.0
    %1299 = vmatprep.subr.mxu0 0.0
    %1300 = vmatpush1.xpose.msra.mxu0 0.0
    %1301 = vmatprep.subr.mxu0 0.0
    %1302 = vmatpush1.xpose.msra.mxu0 0.0
    %1303 = vmatprep.subr.mxu0 0.0
    %1304 = vmatpush1.xpose.msra.mxu0 0.0
    %1305 = vmatprep.subr.mxu0 0.0
    %1306 = vmatpush1.xpose.msra.mxu0 0.0
    %1307 = vmatprep.subr.mxu0 0.0
    %1308 = vmatpush1.xpose.msra.mxu0 0.0
    %1309 = vmatprep.subr.mxu0 0.0
    %1310 = vmatpush1.xpose.msra.mxu0 0.0
    %1311 = vmatprep.subr.mxu0 0.0
    %1312 = vmatpush1.xpose.msra.mxu0 0.0
    %1313 = vmatprep.subr.mxu0 0.0
    %1314 = vmatpush1.xpose.msra.mxu0 0.0
    %1315 = vmatprep.subr.mxu0 0.0
    %1316 = vmatpush1.xpose.msra.mxu0 0.0
    %1317 = vmatprep.subr.mxu0 0.0
    %1318 = vmatpush1.xpose.msra.mxu0 0.0
    %1319 = vmatprep.subr.mxu0 0.0
    %v1320 = vand.u32 %v1202, 4294901760
    %v1321 = vsub.f32 %v1202, %v1320
    %v1322 = vand.u32 %v1321, 4294901760
    %v1323 = vsub.f32 %v1321, %v1322
    %v1324 = vand.u32 %v1323, 4294901760
    %1325 = vmatpush1.xpose.msra.mxu0 %v1324
    %1326 = vmatprep.subr.mxu0 0.0
    %v1327 = vand.u32 %v1199, 4294901760
    %v1328 = vsub.f32 %v1199, %v1327
    %v1329 = vand.u32 %v1328, 4294901760
    %v1330 = vsub.f32 %v1328, %v1329
    %v1331 = vand.u32 %v1330, 4294901760
    %1332 = vmatpush1.xpose.msra.mxu0 %v1331
    %1333 = vmatprep.subr.mxu0 0.0
    %1334 = vmatpush2.xpose.msra.mxu0 0.0
    %1335 = vmatprep.subr.mxu0 0.0
    %1336 = vmatpush2.xpose.msra.mxu0 0.0
    %1337 = vmatprep.subr.mxu0 0.0
    %1338 = vmatpush2.xpose.msra.mxu0 0.0
    %1339 = vmatprep.subr.mxu0 0.0
    %1340 = vmatpush2.xpose.msra.mxu0 0.0
    %1341 = vmatprep.subr.mxu0 0.0
    %1342 = vmatpush2.xpose.msra.mxu0 0.0
    %1343 = vmatprep.subr.mxu0 0.0
    %1344 = vmatpush2.xpose.msra.mxu0 0.0
    %1345 = vmatprep.subr.mxu0 0.0
    %1346 = vmatpush2.xpose.msra.mxu0 0.0
    %1347 = vmatprep.subr.mxu0 0.0
    %1348 = vmatpush2.xpose.msra.mxu0 0.0
    %1349 = vmatprep.subr.mxu0 0.0
    %1350 = vmatpush2.xpose.msra.mxu0 0.0
    %1351 = vmatprep.subr.mxu0 0.0
    %1352 = vmatpush2.xpose.msra.mxu0 0.0
    %1353 = vmatprep.subr.mxu0 0.0
    %1354 = vmatpush2.xpose.msra.mxu0 0.0
    %1355 = vmatprep.subr.mxu0 0.0
    %1356 = vmatpush2.xpose.msra.mxu0 0.0
    %1357 = vmatprep.subr.mxu0 0.0
    %1358 = vmatpush2.xpose.msra.mxu0 0.0
    %1359 = vmatprep.subr.mxu0 0.0
    %1360 = vmatpush2.xpose.msra.mxu0 0.0
    %1361 = vmatprep.subr.mxu0 0.0
    %1362 = vmatpush2.xpose.msra.mxu0 0.0
    %1363 = vmatprep.subr.mxu0 0.0
    %1364 = vmatpush2.xpose.msra.mxu0 0.0
    %1365 = vmatprep.mubr.f32.mxu0 0.0
    %v1366 = vand.u32 %v1193, 4294901760
    %1367 = vmatmul.mubr.f32.gmra.mxu0 %v1366
    %v1368 = vpop.f32.mrf.mxu0
    %v1369 = vadd.f32 %v1278, %v1368
    %v1370 = vpop.f32.mrf.mxu0
    %1371 = vmatprep.mubr.f32.mxu0 0.0
    %v1372 = vand.u32 %v1196, 4294901760
    %1373 = vmatmul.mubr.f32.gmra.mxu0 %v1372
    %v1374 = vpop.f32.mrf.mxu0
    %v1375 = vadd.f32 %v1288, %v1374
    %v1376 = vpop.f32.mrf.mxu0
    %1377 = vdwg.mxu0
    %1378 = vmatprep.subr.mxu0 0.0
    %1379 = vmatpush1.xpose.msra.mxu0 0.0
    %1380 = vmatprep.subr.mxu0 0.0
    %1381 = vmatpush1.xpose.msra.mxu0 0.0
    %1382 = vmatprep.subr.mxu0 0.0
    %1383 = vmatpush1.xpose.msra.mxu0 0.0
    %1384 = vmatprep.subr.mxu0 0.0
    %1385 = vmatpush1.xpose.msra.mxu0 0.0
    %1386 = vmatprep.subr.mxu0 0.0
    %1387 = vmatpush1.xpose.msra.mxu0 0.0
    %1388 = vmatprep.subr.mxu0 0.0
    %1389 = vmatpush1.xpose.msra.mxu0 0.0
    %1390 = vmatprep.subr.mxu0 0.0
    %1391 = vmatpush1.xpose.msra.mxu0 0.0
    %1392 = vmatprep.subr.mxu0 0.0
    %1393 = vmatpush1.xpose.msra.mxu0 0.0
    %1394 = vmatprep.subr.mxu0 0.0
    %1395 = vmatpush1.xpose.msra.mxu0 0.0
    %1396 = vmatprep.subr.mxu0 0.0
    %1397 = vmatpush1.xpose.msra.mxu0 0.0
    %1398 = vmatprep.subr.mxu0 0.0
    %1399 = vmatpush1.xpose.msra.mxu0 0.0
    %1400 = vmatprep.subr.mxu0 0.0
    %1401 = vmatpush1.xpose.msra.mxu0 0.0
    %1402 = vmatprep.subr.mxu0 0.0
    %1403 = vmatpush1.xpose.msra.mxu0 0.0
    %1404 = vmatprep.subr.mxu0 0.0
    %1405 = vmatpush1.xpose.msra.mxu0 0.0
    %1406 = vmatprep.subr.mxu0 0.0
    %v1407 = vand.u32 %v1202, 4294901760
    %v1408 = vsub.f32 %v1202, %v1407
    %1409 = vmatpush1.xpose.msra.mxu0 %v1408
    %1410 = vmatprep.subr.mxu0 0.0
    %v1411 = vand.u32 %v1199, 4294901760
    %v1412 = vsub.f32 %v1199, %v1411
    %1413 = vmatpush1.xpose.msra.mxu0 %v1412
    %1414 = vmatprep.subr.mxu0 0.0
    %1415 = vmatpush2.xpose.msra.mxu0 0.0
    %1416 = vmatprep.subr.mxu0 0.0
    %1417 = vmatpush2.xpose.msra.mxu0 0.0
    %1418 = vmatprep.subr.mxu0 0.0
    %1419 = vmatpush2.xpose.msra.mxu0 0.0
    %1420 = vmatprep.subr.mxu0 0.0
    %1421 = vmatpush2.xpose.msra.mxu0 0.0
    %1422 = vmatprep.subr.mxu0 0.0
    %1423 = vmatpush2.xpose.msra.mxu0 0.0
    %1424 = vmatprep.subr.mxu0 0.0
    %1425 = vmatpush2.xpose.msra.mxu0 0.0
    %1426 = vmatprep.subr.mxu0 0.0
    %1427 = vmatpush2.xpose.msra.mxu0 0.0
    %1428 = vmatprep.subr.mxu0 0.0
    %1429 = vmatpush2.xpose.msra.mxu0 0.0
    %1430 = vmatprep.subr.mxu0 0.0
    %1431 = vmatpush2.xpose.msra.mxu0 0.0
    %1432 = vmatprep.subr.mxu0 0.0
    %1433 = vmatpush2.xpose.msra.mxu0 0.0
    %1434 = vmatprep.subr.mxu0 0.0
    %1435 = vmatpush2.xpose.msra.mxu0 0.0
    %1436 = vmatprep.subr.mxu0 0.0
    %1437 = vmatpush2.xpose.msra.mxu0 0.0
    %1438 = vmatprep.subr.mxu0 0.0
    %1439 = vmatpush2.xpose.msra.mxu0 0.0
    %1440 = vmatprep.subr.mxu0 0.0
    %1441 = vmatpush2.xpose.msra.mxu0 0.0
    %1442 = vmatprep.subr.mxu0 0.0
    %1443 = vmatpush2.xpose.msra.mxu0 0.0
    %1444 = vmatprep.subr.mxu0 0.0
    %1445 = vmatpush2.xpose.msra.mxu0 0.0
    %1446 = vmatprep.mubr.f32.mxu0 0.0
    %v1447 = vand.u32 %v1193, 4294901760
    %v1448 = vsub.f32 %v1193, %v1447
    %1449 = vmatmul.mubr.f32.gmra.mxu0 %v1448
    %v1450 = vpop.f32.mrf.mxu0
    %v1451 = vadd.f32 %v1369, %v1450
    %v1452 = vpop.f32.mrf.mxu0
    %1453 = vmatprep.mubr.f32.mxu0 0.0
    %v1454 = vand.u32 %v1196, 4294901760
    %v1455 = vsub.f32 %v1196, %v1454
    %1456 = vmatmul.mubr.f32.gmra.mxu0 %v1455
    %v1457 = vpop.f32.mrf.mxu0
    %v1458 = vadd.f32 %v1375, %v1457
    %v1459 = vpop.f32.mrf.mxu0
    %1460 = vdwg.mxu0
    %1461 = vmatprep.subr.mxu0 0.0
    %1462 = vmatpush1.xpose.msra.mxu0 0.0
    %1463 = vmatprep.subr.mxu0 0.0
    %1464 = vmatpush1.xpose.msra.mxu0 0.0
    %1465 = vmatprep.subr.mxu0 0.0
    %1466 = vmatpush1.xpose.msra.mxu0 0.0
    %1467 = vmatprep.subr.mxu0 0.0
    %1468 = vmatpush1.xpose.msra.mxu0 0.0
    %1469 = vmatprep.subr.mxu0 0.0
    %1470 = vmatpush1.xpose.msra.mxu0 0.0
    %1471 = vmatprep.subr.mxu0 0.0
    %1472 = vmatpush1.xpose.msra.mxu0 0.0
    %1473 = vmatprep.subr.mxu0 0.0
    %1474 = vmatpush1.xpose.msra.mxu0 0.0
    %1475 = vmatprep.subr.mxu0 0.0
    %1476 = vmatpush1.xpose.msra.mxu0 0.0
    %1477 = vmatprep.subr.mxu0 0.0
    %1478 = vmatpush1.xpose.msra.mxu0 0.0
    %1479 = vmatprep.subr.mxu0 0.0
    %1480 = vmatpush1.xpose.msra.mxu0 0.0
    %1481 = vmatprep.subr.mxu0 0.0
    %1482 = vmatpush1.xpose.msra.mxu0 0.0
    %1483 = vmatprep.subr.mxu0 0.0
    %1484 = vmatpush1.xpose.msra.mxu0 0.0
    %1485 = vmatprep.subr.mxu0 0.0
    %1486 = vmatpush1.xpose.msra.mxu0 0.0
    %1487 = vmatprep.subr.mxu0 0.0
    %1488 = vmatpush1.xpose.msra.mxu0 0.0
    %1489 = vmatprep.subr.mxu0 0.0
    %v1490 = vand.u32 %v1202, 4294901760
    %1491 = vmatpush1.xpose.msra.mxu0 %v1490
    %1492 = vmatprep.subr.mxu0 0.0
    %v1493 = vand.u32 %v1199, 4294901760
    %1494 = vmatpush1.xpose.msra.mxu0 %v1493
    %1495 = vmatprep.subr.mxu0 0.0
    %1496 = vmatpush2.xpose.msra.mxu0 0.0
    %1497 = vmatprep.subr.mxu0 0.0
    %1498 = vmatpush2.xpose.msra.mxu0 0.0
    %1499 = vmatprep.subr.mxu0 0.0
    %1500 = vmatpush2.xpose.msra.mxu0 0.0
    %1501 = vmatprep.subr.mxu0 0.0
    %1502 = vmatpush2.xpose.msra.mxu0 0.0
    %1503 = vmatprep.subr.mxu0 0.0
    %1504 = vmatpush2.xpose.msra.mxu0 0.0
    %1505 = vmatprep.subr.mxu0 0.0
    %1506 = vmatpush2.xpose.msra.mxu0 0.0
    %1507 = vmatprep.subr.mxu0 0.0
    %1508 = vmatpush2.xpose.msra.mxu0 0.0
    %1509 = vmatprep.subr.mxu0 0.0
    %1510 = vmatpush2.xpose.msra.mxu0 0.0
    %1511 = vmatprep.subr.mxu0 0.0
    %1512 = vmatpush2.xpose.msra.mxu0 0.0
    %1513 = vmatprep.subr.mxu0 0.0
    %1514 = vmatpush2.xpose.msra.mxu0 0.0
    %1515 = vmatprep.subr.mxu0 0.0
    %1516 = vmatpush2.xpose.msra.mxu0 0.0
    %1517 = vmatprep.subr.mxu0 0.0
    %1518 = vmatpush2.xpose.msra.mxu0 0.0
    %1519 = vmatprep.subr.mxu0 0.0
    %1520 = vmatpush2.xpose.msra.mxu0 0.0
    %1521 = vmatprep.subr.mxu0 0.0
    %1522 = vmatpush2.xpose.msra.mxu0 0.0
    %1523 = vmatprep.subr.mxu0 0.0
    %1524 = vmatpush2.xpose.msra.mxu0 0.0
    %1525 = vmatprep.subr.mxu0 0.0
    %1526 = vmatpush2.xpose.msra.mxu0 0.0
    %1527 = vmatprep.mubr.f32.mxu0 0.0
    %v1528 = vand.u32 %v1193, 4294901760
    %v1529 = vsub.f32 %v1193, %v1528
    %v1530 = vand.u32 %v1529, 4294901760
    %1531 = vmatmul.mubr.f32.gmra.mxu0 %v1530
    %v1532 = vpop.f32.mrf.mxu0
    %v1533 = vadd.f32 %v1451, %v1532
    %v1534 = vpop.f32.mrf.mxu0
    %1535 = vmatprep.mubr.f32.mxu0 0.0
    %v1536 = vand.u32 %v1196, 4294901760
    %v1537 = vsub.f32 %v1196, %v1536
    %v1538 = vand.u32 %v1537, 4294901760
    %1539 = vmatmul.mubr.f32.gmra.mxu0 %v1538
    %v1540 = vpop.f32.mrf.mxu0
    %v1541 = vadd.f32 %v1458, %v1540
    %v1542 = vpop.f32.mrf.mxu0
    %1543 = vdwg.mxu0
    %1544 = vmatprep.subr.mxu0 0.0
    %1545 = vmatpush1.xpose.msra.mxu0 0.0
    %1546 = vmatprep.subr.mxu0 0.0
    %1547 = vmatpush1.xpose.msra.mxu0 0.0
    %1548 = vmatprep.subr.mxu0 0.0
    %1549 = vmatpush1.xpose.msra.mxu0 0.0
    %1550 = vmatprep.subr.mxu0 0.0
    %1551 = vmatpush1.xpose.msra.mxu0 0.0
    %1552 = vmatprep.subr.mxu0 0.0
    %1553 = vmatpush1.xpose.msra.mxu0 0.0
    %1554 = vmatprep.subr.mxu0 0.0
    %1555 = vmatpush1.xpose.msra.mxu0 0.0
    %1556 = vmatprep.subr.mxu0 0.0
    %1557 = vmatpush1.xpose.msra.mxu0 0.0
    %1558 = vmatprep.subr.mxu0 0.0
    %1559 = vmatpush1.xpose.msra.mxu0 0.0
    %1560 = vmatprep.subr.mxu0 0.0
    %1561 = vmatpush1.xpose.msra.mxu0 0.0
    %1562 = vmatprep.subr.mxu0 0.0
    %1563 = vmatpush1.xpose.msra.mxu0 0.0
    %1564 = vmatprep.subr.mxu0 0.0
    %1565 = vmatpush1.xpose.msra.mxu0 0.0
    %1566 = vmatprep.subr.mxu0 0.0
    %1567 = vmatpush1.xpose.msra.mxu0 0.0
    %1568 = vmatprep.subr.mxu0 0.0
    %1569 = vmatpush1.xpose.msra.mxu0 0.0
    %1570 = vmatprep.subr.mxu0 0.0
    %1571 = vmatpush1.xpose.msra.mxu0 0.0
    %1572 = vmatprep.subr.mxu0 0.0
    %v1573 = vand.u32 %v1202, 4294901760
    %v1574 = vsub.f32 %v1202, %v1573
    %v1575 = vand.u32 %v1574, 4294901760
    %1576 = vmatpush1.xpose.msra.mxu0 %v1575
    %1577 = vmatprep.subr.mxu0 0.0
    %v1578 = vand.u32 %v1199, 4294901760
    %v1579 = vsub.f32 %v1199, %v1578
    %v1580 = vand.u32 %v1579, 4294901760
    %1581 = vmatpush1.xpose.msra.mxu0 %v1580
    %1582 = vmatprep.subr.mxu0 0.0
    %1583 = vmatpush2.xpose.msra.mxu0 0.0
    %1584 = vmatprep.subr.mxu0 0.0
    %1585 = vmatpush2.xpose.msra.mxu0 0.0
    %1586 = vmatprep.subr.mxu0 0.0
    %1587 = vmatpush2.xpose.msra.mxu0 0.0
    %1588 = vmatprep.subr.mxu0 0.0
    %1589 = vmatpush2.xpose.msra.mxu0 0.0
    %1590 = vmatprep.subr.mxu0 0.0
    %1591 = vmatpush2.xpose.msra.mxu0 0.0
    %1592 = vmatprep.subr.mxu0 0.0
    %1593 = vmatpush2.xpose.msra.mxu0 0.0
    %1594 = vmatprep.subr.mxu0 0.0
    %1595 = vmatpush2.xpose.msra.mxu0 0.0
    %1596 = vmatprep.subr.mxu0 0.0
    %1597 = vmatpush2.xpose.msra.mxu0 0.0
    %1598 = vmatprep.subr.mxu0 0.0
    %1599 = vmatpush2.xpose.msra.mxu0 0.0
    %1600 = vmatprep.subr.mxu0 0.0
    %1601 = vmatpush2.xpose.msra.mxu0 0.0
    %1602 = vmatprep.subr.mxu0 0.0
    %1603 = vmatpush2.xpose.msra.mxu0 0.0
    %1604 = vmatprep.subr.mxu0 0.0
    %1605 = vmatpush2.xpose.msra.mxu0 0.0
    %1606 = vmatprep.subr.mxu0 0.0
    %1607 = vmatpush2.xpose.msra.mxu0 0.0
    %1608 = vmatprep.subr.mxu0 0.0
    %1609 = vmatpush2.xpose.msra.mxu0 0.0
    %1610 = vmatprep.subr.mxu0 0.0
    %1611 = vmatpush2.xpose.msra.mxu0 0.0
    %1612 = vmatprep.subr.mxu0 0.0
    %1613 = vmatpush2.xpose.msra.mxu0 0.0
    %1614 = vmatprep.mubr.f32.mxu0 0.0
    %v1615 = vand.u32 %v1193, 4294901760
    %1616 = vmatmul.mubr.f32.gmra.mxu0 %v1615
    %v1617 = vpop.f32.mrf.mxu0
    %v1618 = vadd.f32 %v1533, %v1617
    %v1619 = vpop.f32.mrf.mxu0
    %1620 = vmatprep.mubr.f32.mxu0 0.0
    %v1621 = vand.u32 %v1196, 4294901760
    %1622 = vmatmul.mubr.f32.gmra.mxu0 %v1621
    %v1623 = vpop.f32.mrf.mxu0
    %v1624 = vadd.f32 %v1541, %v1623
    %v1625 = vpop.f32.mrf.mxu0
    %1626 = vdwg.mxu0
    %1627 = vmatprep.subr.mxu0 0.0
    %1628 = vmatpush1.xpose.msra.mxu0 0.0
    %1629 = vmatprep.subr.mxu0 0.0
    %1630 = vmatpush1.xpose.msra.mxu0 0.0
    %1631 = vmatprep.subr.mxu0 0.0
    %1632 = vmatpush1.xpose.msra.mxu0 0.0
    %1633 = vmatprep.subr.mxu0 0.0
    %1634 = vmatpush1.xpose.msra.mxu0 0.0
    %1635 = vmatprep.subr.mxu0 0.0
    %1636 = vmatpush1.xpose.msra.mxu0 0.0
    %1637 = vmatprep.subr.mxu0 0.0
    %1638 = vmatpush1.xpose.msra.mxu0 0.0
    %1639 = vmatprep.subr.mxu0 0.0
    %1640 = vmatpush1.xpose.msra.mxu0 0.0
    %1641 = vmatprep.subr.mxu0 0.0
    %1642 = vmatpush1.xpose.msra.mxu0 0.0
    %1643 = vmatprep.subr.mxu0 0.0
    %1644 = vmatpush1.xpose.msra.mxu0 0.0
    %1645 = vmatprep.subr.mxu0 0.0
    %1646 = vmatpush1.xpose.msra.mxu0 0.0
    %1647 = vmatprep.subr.mxu0 0.0
    %1648 = vmatpush1.xpose.msra.mxu0 0.0
    %1649 = vmatprep.subr.mxu0 0.0
    %1650 = vmatpush1.xpose.msra.mxu0 0.0
    %1651 = vmatprep.subr.mxu0 0.0
    %1652 = vmatpush1.xpose.msra.mxu0 0.0
    %1653 = vmatprep.subr.mxu0 0.0
    %1654 = vmatpush1.xpose.msra.mxu0 0.0
    %1655 = vmatprep.subr.mxu0 0.0
    %v1656 = vand.u32 %v1202, 4294901760
    %1657 = vmatpush1.xpose.msra.mxu0 %v1656
    %1658 = vmatprep.subr.mxu0 0.0
    %v1659 = vand.u32 %v1199, 4294901760
    %1660 = vmatpush1.xpose.msra.mxu0 %v1659
    %1661 = vmatprep.subr.mxu0 0.0
    %1662 = vmatpush2.xpose.msra.mxu0 0.0
    %1663 = vmatprep.subr.mxu0 0.0
    %1664 = vmatpush2.xpose.msra.mxu0 0.0
    %1665 = vmatprep.subr.mxu0 0.0
    %1666 = vmatpush2.xpose.msra.mxu0 0.0
    %1667 = vmatprep.subr.mxu0 0.0
    %1668 = vmatpush2.xpose.msra.mxu0 0.0
    %1669 = vmatprep.subr.mxu0 0.0
    %1670 = vmatpush2.xpose.msra.mxu0 0.0
    %1671 = vmatprep.subr.mxu0 0.0
    %1672 = vmatpush2.xpose.msra.mxu0 0.0
    %1673 = vmatprep.subr.mxu0 0.0
    %1674 = vmatpush2.xpose.msra.mxu0 0.0
    %1675 = vmatprep.subr.mxu0 0.0
    %1676 = vmatpush2.xpose.msra.mxu0 0.0
    %1677 = vmatprep.subr.mxu0 0.0
    %1678 = vmatpush2.xpose.msra.mxu0 0.0
    %1679 = vmatprep.subr.mxu0 0.0
    %1680 = vmatpush2.xpose.msra.mxu0 0.0
    %1681 = vmatprep.subr.mxu0 0.0
    %1682 = vmatpush2.xpose.msra.mxu0 0.0
    %1683 = vmatprep.subr.mxu0 0.0
    %1684 = vmatpush2.xpose.msra.mxu0 0.0
    %1685 = vmatprep.subr.mxu0 0.0
    %1686 = vmatpush2.xpose.msra.mxu0 0.0
    %1687 = vmatprep.subr.mxu0 0.0
    %1688 = vmatpush2.xpose.msra.mxu0 0.0
    %1689 = vmatprep.subr.mxu0 0.0
    %1690 = vmatpush2.xpose.msra.mxu0 0.0
    %1691 = vmatprep.subr.mxu0 0.0
    %1692 = vmatpush2.xpose.msra.mxu0 0.0
    %1693 = vmatprep.mubr.f32.mxu0 0.0
    %v1694 = vand.u32 %v1193, 4294901760
    %1695 = vmatmul.mubr.f32.gmra.mxu0 %v1694
    %v1696 = vpop.f32.mrf.mxu0
    %v1697 = vadd.f32 %v1618, %v1696
    %v1698 = vpop.f32.mrf.mxu0
    %1699 = vmatprep.mubr.f32.mxu0 0.0
    %v1700 = vand.u32 %v1196, 4294901760
    %1701 = vmatmul.mubr.f32.gmra.mxu0 %v1700
    %v1702 = vpop.f32.mrf.mxu0
    %v1703 = vadd.f32 %v1624, %v1702
    %v1704 = vpop.f32.mrf.mxu0
    %1705 = vdwg.mxu0
    %v1707 = vsel %vm163, %v153, 0
    %v1710 = vsel %vm163, %v154, 0
    %v1713 = vsel %vm163, %v44, 0
    %v1716 = vsel %vm163, %v45, 0
    %1718 = vmatprep.subr.mxu0 0.0
    %1719 = vmatpush1.xpose.msra.mxu0 0.0
    %1720 = vmatprep.subr.mxu0 0.0
    %1721 = vmatpush1.xpose.msra.mxu0 0.0
    %1722 = vmatprep.subr.mxu0 0.0
    %1723 = vmatpush1.xpose.msra.mxu0 0.0
    %1724 = vmatprep.subr.mxu0 0.0
    %1725 = vmatpush1.xpose.msra.mxu0 0.0
    %1726 = vmatprep.subr.mxu0 0.0
    %1727 = vmatpush1.xpose.msra.mxu0 0.0
    %1728 = vmatprep.subr.mxu0 0.0
    %1729 = vmatpush1.xpose.msra.mxu0 0.0
    %1730 = vmatprep.subr.mxu0 0.0
    %1731 = vmatpush1.xpose.msra.mxu0 0.0
    %1732 = vmatprep.subr.mxu0 0.0
    %1733 = vmatpush1.xpose.msra.mxu0 0.0
    %1734 = vmatprep.subr.mxu0 0.0
    %1735 = vmatpush1.xpose.msra.mxu0 0.0
    %1736 = vmatprep.subr.mxu0 0.0
    %1737 = vmatpush1.xpose.msra.mxu0 0.0
    %1738 = vmatprep.subr.mxu0 0.0
    %1739 = vmatpush1.xpose.msra.mxu0 0.0
    %1740 = vmatprep.subr.mxu0 0.0
    %1741 = vmatpush1.xpose.msra.mxu0 0.0
    %1742 = vmatprep.subr.mxu0 0.0
    %1743 = vmatpush1.xpose.msra.mxu0 0.0
    %1744 = vmatprep.subr.mxu0 0.0
    %1745 = vmatpush1.xpose.msra.mxu0 0.0
    %1746 = vmatprep.subr.mxu0 0.0
    %v1747 = vand.u32 %v1716, 4294901760
    %1748 = vmatpush1.xpose.msra.mxu0 %v1747
    %1749 = vmatprep.subr.mxu0 0.0
    %v1750 = vand.u32 %v1713, 4294901760
    %1751 = vmatpush1.xpose.msra.mxu0 %v1750
    %1752 = vmatprep.subr.mxu0 0.0
    %1753 = vmatpush2.xpose.msra.mxu0 0.0
    %1754 = vmatprep.subr.mxu0 0.0
    %1755 = vmatpush2.xpose.msra.mxu0 0.0
    %1756 = vmatprep.subr.mxu0 0.0
    %1757 = vmatpush2.xpose.msra.mxu0 0.0
    %1758 = vmatprep.subr.mxu0 0.0
    %1759 = vmatpush2.xpose.msra.mxu0 0.0
    %1760 = vmatprep.subr.mxu0 0.0
    %1761 = vmatpush2.xpose.msra.mxu0 0.0
    %1762 = vmatprep.subr.mxu0 0.0
    %1763 = vmatpush2.xpose.msra.mxu0 0.0
    %1764 = vmatprep.subr.mxu0 0.0
    %1765 = vmatpush2.xpose.msra.mxu0 0.0
    %1766 = vmatprep.subr.mxu0 0.0
    %1767 = vmatpush2.xpose.msra.mxu0 0.0
    %1768 = vmatprep.subr.mxu0 0.0
    %1769 = vmatpush2.xpose.msra.mxu0 0.0
    %1770 = vmatprep.subr.mxu0 0.0
    %1771 = vmatpush2.xpose.msra.mxu0 0.0
    %1772 = vmatprep.subr.mxu0 0.0
    %1773 = vmatpush2.xpose.msra.mxu0 0.0
    %1774 = vmatprep.subr.mxu0 0.0
    %1775 = vmatpush2.xpose.msra.mxu0 0.0
    %1776 = vmatprep.subr.mxu0 0.0
    %1777 = vmatpush2.xpose.msra.mxu0 0.0
    %1778 = vmatprep.subr.mxu0 0.0
    %1779 = vmatpush2.xpose.msra.mxu0 0.0
    %1780 = vmatprep.subr.mxu0 0.0
    %1781 = vmatpush2.xpose.msra.mxu0 0.0
    %1782 = vmatprep.subr.mxu0 0.0
    %1783 = vmatpush2.xpose.msra.mxu0 0.0
    %1784 = vmatprep.mubr.f32.mxu0 0.0
    %v1785 = vand.u32 %v1707, 4294901760
    %v1786 = vsub.f32 %v1707, %v1785
    %v1787 = vand.u32 %v1786, 4294901760
    %v1788 = vsub.f32 %v1786, %v1787
    %v1789 = vand.u32 %v1788, 4294901760
    %1790 = vmatmul.mubr.f32.gmra.mxu0 %v1789
    %v1791 = vpop.f32.mrf.mxu0
    %v1792 = vadd.f32 0.0, %v1791
    %v1793 = vpop.f32.mrf.mxu0
    %1794 = vmatprep.mubr.f32.mxu0 0.0
    %v1795 = vand.u32 %v1710, 4294901760
    %v1796 = vsub.f32 %v1710, %v1795
    %v1797 = vand.u32 %v1796, 4294901760
    %v1798 = vsub.f32 %v1796, %v1797
    %v1799 = vand.u32 %v1798, 4294901760
    %1800 = vmatmul.mubr.f32.gmra.mxu0 %v1799
    %v1801 = vpop.f32.mrf.mxu0
    %v1802 = vadd.f32 0.0, %v1801
    %v1803 = vpop.f32.mrf.mxu0
    %1804 = vdwg.mxu0
    %1805 = vmatprep.subr.mxu0 0.0
    %1806 = vmatpush1.xpose.msra.mxu0 0.0
    %1807 = vmatprep.subr.mxu0 0.0
    %1808 = vmatpush1.xpose.msra.mxu0 0.0
    %1809 = vmatprep.subr.mxu0 0.0
    %1810 = vmatpush1.xpose.msra.mxu0 0.0
    %1811 = vmatprep.subr.mxu0 0.0
    %1812 = vmatpush1.xpose.msra.mxu0 0.0
    %1813 = vmatprep.subr.mxu0 0.0
    %1814 = vmatpush1.xpose.msra.mxu0 0.0
    %1815 = vmatprep.subr.mxu0 0.0
    %1816 = vmatpush1.xpose.msra.mxu0 0.0
    %1817 = vmatprep.subr.mxu0 0.0
    %1818 = vmatpush1.xpose.msra.mxu0 0.0
    %1819 = vmatprep.subr.mxu0 0.0
    %1820 = vmatpush1.xpose.msra.mxu0 0.0
    %1821 = vmatprep.subr.mxu0 0.0
    %1822 = vmatpush1.xpose.msra.mxu0 0.0
    %1823 = vmatprep.subr.mxu0 0.0
    %1824 = vmatpush1.xpose.msra.mxu0 0.0
    %1825 = vmatprep.subr.mxu0 0.0
    %1826 = vmatpush1.xpose.msra.mxu0 0.0
    %1827 = vmatprep.subr.mxu0 0.0
    %1828 = vmatpush1.xpose.msra.mxu0 0.0
    %1829 = vmatprep.subr.mxu0 0.0
    %1830 = vmatpush1.xpose.msra.mxu0 0.0
    %1831 = vmatprep.subr.mxu0 0.0
    %1832 = vmatpush1.xpose.msra.mxu0 0.0
    %1833 = vmatprep.subr.mxu0 0.0
    %v1834 = vand.u32 %v1716, 4294901760
    %v1835 = vsub.f32 %v1716, %v1834
    %v1836 = vand.u32 %v1835, 4294901760
    %v1837 = vsub.f32 %v1835, %v1836
    %v1838 = vand.u32 %v1837, 4294901760
    %1839 = vmatpush1.xpose.msra.mxu0 %v1838
    %1840 = vmatprep.subr.mxu0 0.0
    %v1841 = vand.u32 %v1713, 4294901760
    %v1842 = vsub.f32 %v1713, %v1841
    %v1843 = vand.u32 %v1842, 4294901760
    %v1844 = vsub.f32 %v1842, %v1843
    %v1845 = vand.u32 %v1844, 4294901760
    %1846 = vmatpush1.xpose.msra.mxu0 %v1845
    %1847 = vmatprep.subr.mxu0 0.0
    %1848 = vmatpush2.xpose.msra.mxu0 0.0
    %1849 = vmatprep.subr.mxu0 0.0
    %1850 = vmatpush2.xpose.msra.mxu0 0.0
    %1851 = vmatprep.subr.mxu0 0.0
    %1852 = vmatpush2.xpose.msra.mxu0 0.0
    %1853 = vmatprep.subr.mxu0 0.0
    %1854 = vmatpush2.xpose.msra.mxu0 0.0
    %1855 = vmatprep.subr.mxu0 0.0
    %1856 = vmatpush2.xpose.msra.mxu0 0.0
    %1857 = vmatprep.subr.mxu0 0.0
    %1858 = vmatpush2.xpose.msra.mxu0 0.0
    %1859 = vmatprep.subr.mxu0 0.0
    %1860 = vmatpush2.xpose.msra.mxu0 0.0
    %1861 = vmatprep.subr.mxu0 0.0
    %1862 = vmatpush2.xpose.msra.mxu0 0.0
    %1863 = vmatprep.subr.mxu0 0.0
    %1864 = vmatpush2.xpose.msra.mxu0 0.0
    %1865 = vmatprep.subr.mxu0 0.0
    %1866 = vmatpush2.xpose.msra.mxu0 0.0
    %1867 = vmatprep.subr.mxu0 0.0
    %1868 = vmatpush2.xpose.msra.mxu0 0.0
    %1869 = vmatprep.subr.mxu0 0.0
    %1870 = vmatpush2.xpose.msra.mxu0 0.0
    %1871 = vmatprep.subr.mxu0 0.0
    %1872 = vmatpush2.xpose.msra.mxu0 0.0
    %1873 = vmatprep.subr.mxu0 0.0
    %1874 = vmatpush2.xpose.msra.mxu0 0.0
    %1875 = vmatprep.subr.mxu0 0.0
    %1876 = vmatpush2.xpose.msra.mxu0 0.0
    %1877 = vmatprep.subr.mxu0 0.0
    %1878 = vmatpush2.xpose.msra.mxu0 0.0
    %1879 = vmatprep.mubr.f32.mxu0 0.0
    %v1880 = vand.u32 %v1707, 4294901760
    %1881 = vmatmul.mubr.f32.gmra.mxu0 %v1880
    %v1882 = vpop.f32.mrf.mxu0
    %v1883 = vadd.f32 %v1792, %v1882
    %v1884 = vpop.f32.mrf.mxu0
    %1885 = vmatprep.mubr.f32.mxu0 0.0
    %v1886 = vand.u32 %v1710, 4294901760
    %1887 = vmatmul.mubr.f32.gmra.mxu0 %v1886
    %v1888 = vpop.f32.mrf.mxu0
    %v1889 = vadd.f32 %v1802, %v1888
    %v1890 = vpop.f32.mrf.mxu0
    %1891 = vdwg.mxu0
    %1892 = vmatprep.subr.mxu0 0.0
    %1893 = vmatpush1.xpose.msra.mxu0 0.0
    %1894 = vmatprep.subr.mxu0 0.0
    %1895 = vmatpush1.xpose.msra.mxu0 0.0
    %1896 = vmatprep.subr.mxu0 0.0
    %1897 = vmatpush1.xpose.msra.mxu0 0.0
    %1898 = vmatprep.subr.mxu0 0.0
    %1899 = vmatpush1.xpose.msra.mxu0 0.0
    %1900 = vmatprep.subr.mxu0 0.0
    %1901 = vmatpush1.xpose.msra.mxu0 0.0
    %1902 = vmatprep.subr.mxu0 0.0
    %1903 = vmatpush1.xpose.msra.mxu0 0.0
    %1904 = vmatprep.subr.mxu0 0.0
    %1905 = vmatpush1.xpose.msra.mxu0 0.0
    %1906 = vmatprep.subr.mxu0 0.0
    %1907 = vmatpush1.xpose.msra.mxu0 0.0
    %1908 = vmatprep.subr.mxu0 0.0
    %1909 = vmatpush1.xpose.msra.mxu0 0.0
    %1910 = vmatprep.subr.mxu0 0.0
    %1911 = vmatpush1.xpose.msra.mxu0 0.0
    %1912 = vmatprep.subr.mxu0 0.0
    %1913 = vmatpush1.xpose.msra.mxu0 0.0
    %1914 = vmatprep.subr.mxu0 0.0
    %1915 = vmatpush1.xpose.msra.mxu0 0.0
    %1916 = vmatprep.subr.mxu0 0.0
    %1917 = vmatpush1.xpose.msra.mxu0 0.0
    %1918 = vmatprep.subr.mxu0 0.0
    %1919 = vmatpush1.xpose.msra.mxu0 0.0
    %1920 = vmatprep.subr.mxu0 0.0
    %v1921 = vand.u32 %v1716, 4294901760
    %v1922 = vsub.f32 %v1716, %v1921
    %1923 = vmatpush1.xpose.msra.mxu0 %v1922
    %1924 = vmatprep.subr.mxu0 0.0
    %v1925 = vand.u32 %v1713, 4294901760
    %v1926 = vsub.f32 %v1713, %v1925
    %1927 = vmatpush1.xpose.msra.mxu0 %v1926
    %1928 = vmatprep.subr.mxu0 0.0
    %1929 = vmatpush2.xpose.msra.mxu0 0.0
    %1930 = vmatprep.subr.mxu0 0.0
    %1931 = vmatpush2.xpose.msra.mxu0 0.0
    %1932 = vmatprep.subr.mxu0 0.0
    %1933 = vmatpush2.xpose.msra.mxu0 0.0
    %1934 = vmatprep.subr.mxu0 0.0
    %1935 = vmatpush2.xpose.msra.mxu0 0.0
    %1936 = vmatprep.subr.mxu0 0.0
    %1937 = vmatpush2.xpose.msra.mxu0 0.0
    %1938 = vmatprep.subr.mxu0 0.0
    %1939 = vmatpush2.xpose.msra.mxu0 0.0
    %1940 = vmatprep.subr.mxu0 0.0
    %1941 = vmatpush2.xpose.msra.mxu0 0.0
    %1942 = vmatprep.subr.mxu0 0.0
    %1943 = vmatpush2.xpose.msra.mxu0 0.0
    %1944 = vmatprep.subr.mxu0 0.0
    %1945 = vmatpush2.xpose.msra.mxu0 0.0
    %1946 = vmatprep.subr.mxu0 0.0
    %1947 = vmatpush2.xpose.msra.mxu0 0.0
    %1948 = vmatprep.subr.mxu0 0.0
    %1949 = vmatpush2.xpose.msra.mxu0 0.0
    %1950 = vmatprep.subr.mxu0 0.0
    %1951 = vmatpush2.xpose.msra.mxu0 0.0
    %1952 = vmatprep.subr.mxu0 0.0
    %1953 = vmatpush2.xpose.msra.mxu0 0.0
    %1954 = vmatprep.subr.mxu0 0.0
    %1955 = vmatpush2.xpose.msra.mxu0 0.0
    %1956 = vmatprep.subr.mxu0 0.0
    %1957 = vmatpush2.xpose.msra.mxu0 0.0
    %1958 = vmatprep.subr.mxu0 0.0
    %1959 = vmatpush2.xpose.msra.mxu0 0.0
    %1960 = vmatprep.mubr.f32.mxu0 0.0
    %v1961 = vand.u32 %v1707, 4294901760
    %v1962 = vsub.f32 %v1707, %v1961
    %1963 = vmatmul.mubr.f32.gmra.mxu0 %v1962
    %v1964 = vpop.f32.mrf.mxu0
    %v1965 = vadd.f32 %v1883, %v1964
    %v1966 = vpop.f32.mrf.mxu0
    %1967 = vmatprep.mubr.f32.mxu0 0.0
    %v1968 = vand.u32 %v1710, 4294901760
    %v1969 = vsub.f32 %v1710, %v1968
    %1970 = vmatmul.mubr.f32.gmra.mxu0 %v1969
    %v1971 = vpop.f32.mrf.mxu0
    %v1972 = vadd.f32 %v1889, %v1971
    %v1973 = vpop.f32.mrf.mxu0
    %1974 = vdwg.mxu0
    %1975 = vmatprep.subr.mxu0 0.0
    %1976 = vmatpush1.xpose.msra.mxu0 0.0
    %1977 = vmatprep.subr.mxu0 0.0
    %1978 = vmatpush1.xpose.msra.mxu0 0.0
    %1979 = vmatprep.subr.mxu0 0.0
    %1980 = vmatpush1.xpose.msra.mxu0 0.0
    %1981 = vmatprep.subr.mxu0 0.0
    %1982 = vmatpush1.xpose.msra.mxu0 0.0
    %1983 = vmatprep.subr.mxu0 0.0
    %1984 = vmatpush1.xpose.msra.mxu0 0.0
    %1985 = vmatprep.subr.mxu0 0.0
    %1986 = vmatpush1.xpose.msra.mxu0 0.0
    %1987 = vmatprep.subr.mxu0 0.0
    %1988 = vmatpush1.xpose.msra.mxu0 0.0
    %1989 = vmatprep.subr.mxu0 0.0
    %1990 = vmatpush1.xpose.msra.mxu0 0.0
    %1991 = vmatprep.subr.mxu0 0.0
    %1992 = vmatpush1.xpose.msra.mxu0 0.0
    %1993 = vmatprep.subr.mxu0 0.0
    %1994 = vmatpush1.xpose.msra.mxu0 0.0
    %1995 = vmatprep.subr.mxu0 0.0
    %1996 = vmatpush1.xpose.msra.mxu0 0.0
    %1997 = vmatprep.subr.mxu0 0.0
    %1998 = vmatpush1.xpose.msra.mxu0 0.0
    %1999 = vmatprep.subr.mxu0 0.0
    %2000 = vmatpush1.xpose.msra.mxu0 0.0
    %2001 = vmatprep.subr.mxu0 0.0
    %2002 = vmatpush1.xpose.msra.mxu0 0.0
    %2003 = vmatprep.subr.mxu0 0.0
    %v2004 = vand.u32 %v1716, 4294901760
    %2005 = vmatpush1.xpose.msra.mxu0 %v2004
    %2006 = vmatprep.subr.mxu0 0.0
    %v2007 = vand.u32 %v1713, 4294901760
    %2008 = vmatpush1.xpose.msra.mxu0 %v2007
    %2009 = vmatprep.subr.mxu0 0.0
    %2010 = vmatpush2.xpose.msra.mxu0 0.0
    %2011 = vmatprep.subr.mxu0 0.0
    %2012 = vmatpush2.xpose.msra.mxu0 0.0
    %2013 = vmatprep.subr.mxu0 0.0
    %2014 = vmatpush2.xpose.msra.mxu0 0.0
    %2015 = vmatprep.subr.mxu0 0.0
    %2016 = vmatpush2.xpose.msra.mxu0 0.0
    %2017 = vmatprep.subr.mxu0 0.0
    %2018 = vmatpush2.xpose.msra.mxu0 0.0
    %2019 = vmatprep.subr.mxu0 0.0
    %2020 = vmatpush2.xpose.msra.mxu0 0.0
    %2021 = vmatprep.subr.mxu0 0.0
    %2022 = vmatpush2.xpose.msra.mxu0 0.0
    %2023 = vmatprep.subr.mxu0 0.0
    %2024 = vmatpush2.xpose.msra.mxu0 0.0
    %2025 = vmatprep.subr.mxu0 0.0
    %2026 = vmatpush2.xpose.msra.mxu0 0.0
    %2027 = vmatprep.subr.mxu0 0.0
    %2028 = vmatpush2.xpose.msra.mxu0 0.0
    %2029 = vmatprep.subr.mxu0 0.0
    %2030 = vmatpush2.xpose.msra.mxu0 0.0
    %2031 = vmatprep.subr.mxu0 0.0
    %2032 = vmatpush2.xpose.msra.mxu0 0.0
    %2033 = vmatprep.subr.mxu0 0.0
    %2034 = vmatpush2.xpose.msra.mxu0 0.0
    %2035 = vmatprep.subr.mxu0 0.0
    %2036 = vmatpush2.xpose.msra.mxu0 0.0
    %2037 = vmatprep.subr.mxu0 0.0
    %2038 = vmatpush2.xpose.msra.mxu0 0.0
    %2039 = vmatprep.subr.mxu0 0.0
    %2040 = vmatpush2.xpose.msra.mxu0 0.0
    %2041 = vmatprep.mubr.f32.mxu0 0.0
    %v2042 = vand.u32 %v1707, 4294901760
    %v2043 = vsub.f32 %v1707, %v2042
    %v2044 = vand.u32 %v2043, 4294901760
    %2045 = vmatmul.mubr.f32.gmra.mxu0 %v2044
    %v2046 = vpop.f32.mrf.mxu0
    %v2047 = vadd.f32 %v1965, %v2046
    %v2048 = vpop.f32.mrf.mxu0
    %2049 = vmatprep.mubr.f32.mxu0 0.0
    %v2050 = vand.u32 %v1710, 4294901760
    %v2051 = vsub.f32 %v1710, %v2050
    %v2052 = vand.u32 %v2051, 4294901760
    %2053 = vmatmul.mubr.f32.gmra.mxu0 %v2052
    %v2054 = vpop.f32.mrf.mxu0
    %v2055 = vadd.f32 %v1972, %v2054
    %v2056 = vpop.f32.mrf.mxu0
    %2057 = vdwg.mxu0
    %2058 = vmatprep.subr.mxu0 0.0
    %2059 = vmatpush1.xpose.msra.mxu0 0.0
    %2060 = vmatprep.subr.mxu0 0.0
    %2061 = vmatpush1.xpose.msra.mxu0 0.0
    %2062 = vmatprep.subr.mxu0 0.0
    %2063 = vmatpush1.xpose.msra.mxu0 0.0
    %2064 = vmatprep.subr.mxu0 0.0
    %2065 = vmatpush1.xpose.msra.mxu0 0.0
    %2066 = vmatprep.subr.mxu0 0.0
    %2067 = vmatpush1.xpose.msra.mxu0 0.0
    %2068 = vmatprep.subr.mxu0 0.0
    %2069 = vmatpush1.xpose.msra.mxu0 0.0
    %2070 = vmatprep.subr.mxu0 0.0
    %2071 = vmatpush1.xpose.msra.mxu0 0.0
    %2072 = vmatprep.subr.mxu0 0.0
    %2073 = vmatpush1.xpose.msra.mxu0 0.0
    %2074 = vmatprep.subr.mxu0 0.0
    %2075 = vmatpush1.xpose.msra.mxu0 0.0
    %2076 = vmatprep.subr.mxu0 0.0
    %2077 = vmatpush1.xpose.msra.mxu0 0.0
    %2078 = vmatprep.subr.mxu0 0.0
    %2079 = vmatpush1.xpose.msra.mxu0 0.0
    %2080 = vmatprep.subr.mxu0 0.0
    %2081 = vmatpush1.xpose.msra.mxu0 0.0
    %2082 = vmatprep.subr.mxu0 0.0
    %2083 = vmatpush1.xpose.msra.mxu0 0.0
    %2084 = vmatprep.subr.mxu0 0.0
    %2085 = vmatpush1.xpose.msra.mxu0 0.0
    %2086 = vmatprep.subr.mxu0 0.0
    %v2087 = vand.u32 %v1716, 4294901760
    %v2088 = vsub.f32 %v1716, %v2087
    %v2089 = vand.u32 %v2088, 4294901760
    %2090 = vmatpush1.xpose.msra.mxu0 %v2089
    %2091 = vmatprep.subr.mxu0 0.0
    %v2092 = vand.u32 %v1713, 4294901760
    %v2093 = vsub.f32 %v1713, %v2092
    %v2094 = vand.u32 %v2093, 4294901760
    %2095 = vmatpush1.xpose.msra.mxu0 %v2094
    %2096 = vmatprep.subr.mxu0 0.0
    %2097 = vmatpush2.xpose.msra.mxu0 0.0
    %2098 = vmatprep.subr.mxu0 0.0
    %2099 = vmatpush2.xpose.msra.mxu0 0.0
    %2100 = vmatprep.subr.mxu0 0.0
    %2101 = vmatpush2.xpose.msra.mxu0 0.0
    %2102 = vmatprep.subr.mxu0 0.0
    %2103 = vmatpush2.xpose.msra.mxu0 0.0
    %2104 = vmatprep.subr.mxu0 0.0
    %2105 = vmatpush2.xpose.msra.mxu0 0.0
    %2106 = vmatprep.subr.mxu0 0.0
    %2107 = vmatpush2.xpose.msra.mxu0 0.0
    %2108 = vmatprep.subr.mxu0 0.0
    %2109 = vmatpush2.xpose.msra.mxu0 0.0
    %2110 = vmatprep.subr.mxu0 0.0
    %2111 = vmatpush2.xpose.msra.mxu0 0.0
    %2112 = vmatprep.subr.mxu0 0.0
    %2113 = vmatpush2.xpose.msra.mxu0 0.0
    %2114 = vmatprep.subr.mxu0 0.0
    %2115 = vmatpush2.xpose.msra.mxu0 0.0
    %2116 = vmatprep.subr.mxu0 0.0
    %2117 = vmatpush2.xpose.msra.mxu0 0.0
    %2118 = vmatprep.subr.mxu0 0.0
    %2119 = vmatpush2.xpose.msra.mxu0 0.0
    %2120 = vmatprep.subr.mxu0 0.0
    %2121 = vmatpush2.xpose.msra.mxu0 0.0
    %2122 = vmatprep.subr.mxu0 0.0
    %2123 = vmatpush2.xpose.msra.mxu0 0.0
    %2124 = vmatprep.subr.mxu0 0.0
    %2125 = vmatpush2.xpose.msra.mxu0 0.0
    %2126 = vmatprep.subr.mxu0 0.0
    %2127 = vmatpush2.xpose.msra.mxu0 0.0
    %2128 = vmatprep.mubr.f32.mxu0 0.0
    %v2129 = vand.u32 %v1707, 4294901760
    %2130 = vmatmul.mubr.f32.gmra.mxu0 %v2129
    %v2131 = vpop.f32.mrf.mxu0
    %v2132 = vadd.f32 %v2047, %v2131
    %v2133 = vpop.f32.mrf.mxu0
    %2134 = vmatprep.mubr.f32.mxu0 0.0
    %v2135 = vand.u32 %v1710, 4294901760
    %2136 = vmatmul.mubr.f32.gmra.mxu0 %v2135
    %v2137 = vpop.f32.mrf.mxu0
    %v2138 = vadd.f32 %v2055, %v2137
    %v2139 = vpop.f32.mrf.mxu0
    %2140 = vdwg.mxu0
    %2141 = vmatprep.subr.mxu0 0.0
    %2142 = vmatpush1.xpose.msra.mxu0 0.0
    %2143 = vmatprep.subr.mxu0 0.0
    %2144 = vmatpush1.xpose.msra.mxu0 0.0
    %2145 = vmatprep.subr.mxu0 0.0
    %2146 = vmatpush1.xpose.msra.mxu0 0.0
    %2147 = vmatprep.subr.mxu0 0.0
    %2148 = vmatpush1.xpose.msra.mxu0 0.0
    %2149 = vmatprep.subr.mxu0 0.0
    %2150 = vmatpush1.xpose.msra.mxu0 0.0
    %2151 = vmatprep.subr.mxu0 0.0
    %2152 = vmatpush1.xpose.msra.mxu0 0.0
    %2153 = vmatprep.subr.mxu0 0.0
    %2154 = vmatpush1.xpose.msra.mxu0 0.0
    %2155 = vmatprep.subr.mxu0 0.0
    %2156 = vmatpush1.xpose.msra.mxu0 0.0
    %2157 = vmatprep.subr.mxu0 0.0
    %2158 = vmatpush1.xpose.msra.mxu0 0.0
    %2159 = vmatprep.subr.mxu0 0.0
    %2160 = vmatpush1.xpose.msra.mxu0 0.0
    %2161 = vmatprep.subr.mxu0 0.0
    %2162 = vmatpush1.xpose.msra.mxu0 0.0
    %2163 = vmatprep.subr.mxu0 0.0
    %2164 = vmatpush1.xpose.msra.mxu0 0.0
    %2165 = vmatprep.subr.mxu0 0.0
    %2166 = vmatpush1.xpose.msra.mxu0 0.0
    %2167 = vmatprep.subr.mxu0 0.0
    %2168 = vmatpush1.xpose.msra.mxu0 0.0
    %2169 = vmatprep.subr.mxu0 0.0
    %v2170 = vand.u32 %v1716, 4294901760
    %2171 = vmatpush1.xpose.msra.mxu0 %v2170
    %2172 = vmatprep.subr.mxu0 0.0
    %v2173 = vand.u32 %v1713, 4294901760
    %2174 = vmatpush1.xpose.msra.mxu0 %v2173
    %2175 = vmatprep.subr.mxu0 0.0
    %2176 = vmatpush2.xpose.msra.mxu0 0.0
    %2177 = vmatprep.subr.mxu0 0.0
    %2178 = vmatpush2.xpose.msra.mxu0 0.0
    %2179 = vmatprep.subr.mxu0 0.0
    %2180 = vmatpush2.xpose.msra.mxu0 0.0
    %2181 = vmatprep.subr.mxu0 0.0
    %2182 = vmatpush2.xpose.msra.mxu0 0.0
    %2183 = vmatprep.subr.mxu0 0.0
    %2184 = vmatpush2.xpose.msra.mxu0 0.0
    %2185 = vmatprep.subr.mxu0 0.0
    %2186 = vmatpush2.xpose.msra.mxu0 0.0
    %2187 = vmatprep.subr.mxu0 0.0
    %2188 = vmatpush2.xpose.msra.mxu0 0.0
    %2189 = vmatprep.subr.mxu0 0.0
    %2190 = vmatpush2.xpose.msra.mxu0 0.0
    %2191 = vmatprep.subr.mxu0 0.0
    %2192 = vmatpush2.xpose.msra.mxu0 0.0
    %2193 = vmatprep.subr.mxu0 0.0
    %2194 = vmatpush2.xpose.msra.mxu0 0.0
    %2195 = vmatprep.subr.mxu0 0.0
    %2196 = vmatpush2.xpose.msra.mxu0 0.0
    %2197 = vmatprep.subr.mxu0 0.0
    %2198 = vmatpush2.xpose.msra.mxu0 0.0
    %2199 = vmatprep.subr.mxu0 0.0
    %2200 = vmatpush2.xpose.msra.mxu0 0.0
    %2201 = vmatprep.subr.mxu0 0.0
    %2202 = vmatpush2.xpose.msra.mxu0 0.0
    %2203 = vmatprep.subr.mxu0 0.0
    %2204 = vmatpush2.xpose.msra.mxu0 0.0
    %2205 = vmatprep.subr.mxu0 0.0
    %2206 = vmatpush2.xpose.msra.mxu0 0.0
    %2207 = vmatprep.mubr.f32.mxu0 0.0
    %v2208 = vand.u32 %v1707, 4294901760
    %2209 = vmatmul.mubr.f32.gmra.mxu0 %v2208
    %v2210 = vpop.f32.mrf.mxu0
    %v2211 = vadd.f32 %v2132, %v2210
    %v2212 = vpop.f32.mrf.mxu0
    %2213 = vmatprep.mubr.f32.mxu0 0.0
    %v2214 = vand.u32 %v1710, 4294901760
    %2215 = vmatmul.mubr.f32.gmra.mxu0 %v2214
    %v2216 = vpop.f32.mrf.mxu0
    %v2217 = vadd.f32 %v2138, %v2216
    %v2218 = vpop.f32.mrf.mxu0
    %2219 = vdwg.mxu0
    %v2221 = vsel %vm163, %v155, 0
    %v2224 = vsel %vm163, %v156, 0
    %v2227 = vsel %vm163, %v46, 0
    %v2230 = vsel %vm163, %v47, 0
    %2232 = vmatprep.subr.mxu0 0.0
    %2233 = vmatpush1.xpose.msra.mxu0 0.0
    %2234 = vmatprep.subr.mxu0 0.0
    %2235 = vmatpush1.xpose.msra.mxu0 0.0
    %2236 = vmatprep.subr.mxu0 0.0
    %2237 = vmatpush1.xpose.msra.mxu0 0.0
    %2238 = vmatprep.subr.mxu0 0.0
    %2239 = vmatpush1.xpose.msra.mxu0 0.0
    %2240 = vmatprep.subr.mxu0 0.0
    %2241 = vmatpush1.xpose.msra.mxu0 0.0
    %2242 = vmatprep.subr.mxu0 0.0
    %2243 = vmatpush1.xpose.msra.mxu0 0.0
    %2244 = vmatprep.subr.mxu0 0.0
    %2245 = vmatpush1.xpose.msra.mxu0 0.0
    %2246 = vmatprep.subr.mxu0 0.0
    %2247 = vmatpush1.xpose.msra.mxu0 0.0
    %2248 = vmatprep.subr.mxu0 0.0
    %2249 = vmatpush1.xpose.msra.mxu0 0.0
    %2250 = vmatprep.subr.mxu0 0.0
    %2251 = vmatpush1.xpose.msra.mxu0 0.0
    %2252 = vmatprep.subr.mxu0 0.0
    %2253 = vmatpush1.xpose.msra.mxu0 0.0
    %2254 = vmatprep.subr.mxu0 0.0
    %2255 = vmatpush1.xpose.msra.mxu0 0.0
    %2256 = vmatprep.subr.mxu0 0.0
    %2257 = vmatpush1.xpose.msra.mxu0 0.0
    %2258 = vmatprep.subr.mxu0 0.0
    %2259 = vmatpush1.xpose.msra.mxu0 0.0
    %2260 = vmatprep.subr.mxu0 0.0
    %v2261 = vand.u32 %v2230, 4294901760
    %2262 = vmatpush1.xpose.msra.mxu0 %v2261
    %2263 = vmatprep.subr.mxu0 0.0
    %v2264 = vand.u32 %v2227, 4294901760
    %2265 = vmatpush1.xpose.msra.mxu0 %v2264
    %2266 = vmatprep.subr.mxu0 0.0
    %2267 = vmatpush2.xpose.msra.mxu0 0.0
    %2268 = vmatprep.subr.mxu0 0.0
    %2269 = vmatpush2.xpose.msra.mxu0 0.0
    %2270 = vmatprep.subr.mxu0 0.0
    %2271 = vmatpush2.xpose.msra.mxu0 0.0
    %2272 = vmatprep.subr.mxu0 0.0
    %2273 = vmatpush2.xpose.msra.mxu0 0.0
    %2274 = vmatprep.subr.mxu0 0.0
    %2275 = vmatpush2.xpose.msra.mxu0 0.0
    %2276 = vmatprep.subr.mxu0 0.0
    %2277 = vmatpush2.xpose.msra.mxu0 0.0
    %2278 = vmatprep.subr.mxu0 0.0
    %2279 = vmatpush2.xpose.msra.mxu0 0.0
    %2280 = vmatprep.subr.mxu0 0.0
    %2281 = vmatpush2.xpose.msra.mxu0 0.0
    %2282 = vmatprep.subr.mxu0 0.0
    %2283 = vmatpush2.xpose.msra.mxu0 0.0
    %2284 = vmatprep.subr.mxu0 0.0
    %2285 = vmatpush2.xpose.msra.mxu0 0.0
    %2286 = vmatprep.subr.mxu0 0.0
    %2287 = vmatpush2.xpose.msra.mxu0 0.0
    %2288 = vmatprep.subr.mxu0 0.0
    %2289 = vmatpush2.xpose.msra.mxu0 0.0
    %2290 = vmatprep.subr.mxu0 0.0
    %2291 = vmatpush2.xpose.msra.mxu0 0.0
    %2292 = vmatprep.subr.mxu0 0.0
    %2293 = vmatpush2.xpose.msra.mxu0 0.0
    %2294 = vmatprep.subr.mxu0 0.0
    %2295 = vmatpush2.xpose.msra.mxu0 0.0
    %2296 = vmatprep.subr.mxu0 0.0
    %2297 = vmatpush2.xpose.msra.mxu0 0.0
    %2298 = vmatprep.mubr.f32.mxu0 0.0
    %v2299 = vand.u32 %v2221, 4294901760
    %v2300 = vsub.f32 %v2221, %v2299
    %v2301 = vand.u32 %v2300, 4294901760
    %v2302 = vsub.f32 %v2300, %v2301
    %v2303 = vand.u32 %v2302, 4294901760
    %2304 = vmatmul.mubr.f32.gmra.mxu0 %v2303
    %v2305 = vpop.f32.mrf.mxu0
    %v2306 = vadd.f32 0.0, %v2305
    %v2307 = vpop.f32.mrf.mxu0
    %2308 = vmatprep.mubr.f32.mxu0 0.0
    %v2309 = vand.u32 %v2224, 4294901760
    %v2310 = vsub.f32 %v2224, %v2309
    %v2311 = vand.u32 %v2310, 4294901760
    %v2312 = vsub.f32 %v2310, %v2311
    %v2313 = vand.u32 %v2312, 4294901760
    %2314 = vmatmul.mubr.f32.gmra.mxu0 %v2313
    %v2315 = vpop.f32.mrf.mxu0
    %v2316 = vadd.f32 0.0, %v2315
    %v2317 = vpop.f32.mrf.mxu0
    %2318 = vdwg.mxu0
    %2319 = vmatprep.subr.mxu0 0.0
    %2320 = vmatpush1.xpose.msra.mxu0 0.0
    %2321 = vmatprep.subr.mxu0 0.0
    %2322 = vmatpush1.xpose.msra.mxu0 0.0
    %2323 = vmatprep.subr.mxu0 0.0
    %2324 = vmatpush1.xpose.msra.mxu0 0.0
    %2325 = vmatprep.subr.mxu0 0.0
    %2326 = vmatpush1.xpose.msra.mxu0 0.0
    %2327 = vmatprep.subr.mxu0 0.0
    %2328 = vmatpush1.xpose.msra.mxu0 0.0
    %2329 = vmatprep.subr.mxu0 0.0
    %2330 = vmatpush1.xpose.msra.mxu0 0.0
    %2331 = vmatprep.subr.mxu0 0.0
    %2332 = vmatpush1.xpose.msra.mxu0 0.0
    %2333 = vmatprep.subr.mxu0 0.0
    %2334 = vmatpush1.xpose.msra.mxu0 0.0
    %2335 = vmatprep.subr.mxu0 0.0
    %2336 = vmatpush1.xpose.msra.mxu0 0.0
    %2337 = vmatprep.subr.mxu0 0.0
    %2338 = vmatpush1.xpose.msra.mxu0 0.0
    %2339 = vmatprep.subr.mxu0 0.0
    %2340 = vmatpush1.xpose.msra.mxu0 0.0
    %2341 = vmatprep.subr.mxu0 0.0
    %2342 = vmatpush1.xpose.msra.mxu0 0.0
    %2343 = vmatprep.subr.mxu0 0.0
    %2344 = vmatpush1.xpose.msra.mxu0 0.0
    %2345 = vmatprep.subr.mxu0 0.0
    %2346 = vmatpush1.xpose.msra.mxu0 0.0
    %2347 = vmatprep.subr.mxu0 0.0
    %v2348 = vand.u32 %v2230, 4294901760
    %v2349 = vsub.f32 %v2230, %v2348
    %v2350 = vand.u32 %v2349, 4294901760
    %v2351 = vsub.f32 %v2349, %v2350
    %v2352 = vand.u32 %v2351, 4294901760
    %2353 = vmatpush1.xpose.msra.mxu0 %v2352
    %2354 = vmatprep.subr.mxu0 0.0
    %v2355 = vand.u32 %v2227, 4294901760
    %v2356 = vsub.f32 %v2227, %v2355
    %v2357 = vand.u32 %v2356, 4294901760
    %v2358 = vsub.f32 %v2356, %v2357
    %v2359 = vand.u32 %v2358, 4294901760
    %2360 = vmatpush1.xpose.msra.mxu0 %v2359
    %2361 = vmatprep.subr.mxu0 0.0
    %2362 = vmatpush2.xpose.msra.mxu0 0.0
    %2363 = vmatprep.subr.mxu0 0.0
    %2364 = vmatpush2.xpose.msra.mxu0 0.0
    %2365 = vmatprep.subr.mxu0 0.0
    %2366 = vmatpush2.xpose.msra.mxu0 0.0
    %2367 = vmatprep.subr.mxu0 0.0
    %2368 = vmatpush2.xpose.msra.mxu0 0.0
    %2369 = vmatprep.subr.mxu0 0.0
    %2370 = vmatpush2.xpose.msra.mxu0 0.0
    %2371 = vmatprep.subr.mxu0 0.0
    %2372 = vmatpush2.xpose.msra.mxu0 0.0
    %2373 = vmatprep.subr.mxu0 0.0
    %2374 = vmatpush2.xpose.msra.mxu0 0.0
    %2375 = vmatprep.subr.mxu0 0.0
    %2376 = vmatpush2.xpose.msra.mxu0 0.0
    %2377 = vmatprep.subr.mxu0 0.0
    %2378 = vmatpush2.xpose.msra.mxu0 0.0
    %2379 = vmatprep.subr.mxu0 0.0
    %2380 = vmatpush2.xpose.msra.mxu0 0.0
    %2381 = vmatprep.subr.mxu0 0.0
    %2382 = vmatpush2.xpose.msra.mxu0 0.0
    %2383 = vmatprep.subr.mxu0 0.0
    %2384 = vmatpush2.xpose.msra.mxu0 0.0
    %2385 = vmatprep.subr.mxu0 0.0
    %2386 = vmatpush2.xpose.msra.mxu0 0.0
    %2387 = vmatprep.subr.mxu0 0.0
    %2388 = vmatpush2.xpose.msra.mxu0 0.0
    %2389 = vmatprep.subr.mxu0 0.0
    %2390 = vmatpush2.xpose.msra.mxu0 0.0
    %2391 = vmatprep.subr.mxu0 0.0
    %2392 = vmatpush2.xpose.msra.mxu0 0.0
    %2393 = vmatprep.mubr.f32.mxu0 0.0
    %v2394 = vand.u32 %v2221, 4294901760
    %2395 = vmatmul.mubr.f32.gmra.mxu0 %v2394
    %v2396 = vpop.f32.mrf.mxu0
    %v2397 = vadd.f32 %v2306, %v2396
    %v2398 = vpop.f32.mrf.mxu0
    %2399 = vmatprep.mubr.f32.mxu0 0.0
    %v2400 = vand.u32 %v2224, 4294901760
    %2401 = vmatmul.mubr.f32.gmra.mxu0 %v2400
    %v2402 = vpop.f32.mrf.mxu0
    %v2403 = vadd.f32 %v2316, %v2402
    %v2404 = vpop.f32.mrf.mxu0
    %2405 = vdwg.mxu0
    %2406 = vmatprep.subr.mxu0 0.0
    %2407 = vmatpush1.xpose.msra.mxu0 0.0
    %2408 = vmatprep.subr.mxu0 0.0
    %2409 = vmatpush1.xpose.msra.mxu0 0.0
    %2410 = vmatprep.subr.mxu0 0.0
    %2411 = vmatpush1.xpose.msra.mxu0 0.0
    %2412 = vmatprep.subr.mxu0 0.0
    %2413 = vmatpush1.xpose.msra.mxu0 0.0
    %2414 = vmatprep.subr.mxu0 0.0
    %2415 = vmatpush1.xpose.msra.mxu0 0.0
    %2416 = vmatprep.subr.mxu0 0.0
    %2417 = vmatpush1.xpose.msra.mxu0 0.0
    %2418 = vmatprep.subr.mxu0 0.0
    %2419 = vmatpush1.xpose.msra.mxu0 0.0
    %2420 = vmatprep.subr.mxu0 0.0
    %2421 = vmatpush1.xpose.msra.mxu0 0.0
    %2422 = vmatprep.subr.mxu0 0.0
    %2423 = vmatpush1.xpose.msra.mxu0 0.0
    %2424 = vmatprep.subr.mxu0 0.0
    %2425 = vmatpush1.xpose.msra.mxu0 0.0
    %2426 = vmatprep.subr.mxu0 0.0
    %2427 = vmatpush1.xpose.msra.mxu0 0.0
    %2428 = vmatprep.subr.mxu0 0.0
    %2429 = vmatpush1.xpose.msra.mxu0 0.0
    %2430 = vmatprep.subr.mxu0 0.0
    %2431 = vmatpush1.xpose.msra.mxu0 0.0
    %2432 = vmatprep.subr.mxu0 0.0
    %2433 = vmatpush1.xpose.msra.mxu0 0.0
    %2434 = vmatprep.subr.mxu0 0.0
    %v2435 = vand.u32 %v2230, 4294901760
    %v2436 = vsub.f32 %v2230, %v2435
    %2437 = vmatpush1.xpose.msra.mxu0 %v2436
    %2438 = vmatprep.subr.mxu0 0.0
    %v2439 = vand.u32 %v2227, 4294901760
    %v2440 = vsub.f32 %v2227, %v2439
    %2441 = vmatpush1.xpose.msra.mxu0 %v2440
    %2442 = vmatprep.subr.mxu0 0.0
    %2443 = vmatpush2.xpose.msra.mxu0 0.0
    %2444 = vmatprep.subr.mxu0 0.0
    %2445 = vmatpush2.xpose.msra.mxu0 0.0
    %2446 = vmatprep.subr.mxu0 0.0
    %2447 = vmatpush2.xpose.msra.mxu0 0.0
    %2448 = vmatprep.subr.mxu0 0.0
    %2449 = vmatpush2.xpose.msra.mxu0 0.0
    %2450 = vmatprep.subr.mxu0 0.0
    %2451 = vmatpush2.xpose.msra.mxu0 0.0
    %2452 = vmatprep.subr.mxu0 0.0
    %2453 = vmatpush2.xpose.msra.mxu0 0.0
    %2454 = vmatprep.subr.mxu0 0.0
    %2455 = vmatpush2.xpose.msra.mxu0 0.0
    %2456 = vmatprep.subr.mxu0 0.0
    %2457 = vmatpush2.xpose.msra.mxu0 0.0
    %2458 = vmatprep.subr.mxu0 0.0
    %2459 = vmatpush2.xpose.msra.mxu0 0.0
    %2460 = vmatprep.subr.mxu0 0.0
    %2461 = vmatpush2.xpose.msra.mxu0 0.0
    %2462 = vmatprep.subr.mxu0 0.0
    %2463 = vmatpush2.xpose.msra.mxu0 0.0
    %2464 = vmatprep.subr.mxu0 0.0
    %2465 = vmatpush2.xpose.msra.mxu0 0.0
    %2466 = vmatprep.subr.mxu0 0.0
    %2467 = vmatpush2.xpose.msra.mxu0 0.0
    %2468 = vmatprep.subr.mxu0 0.0
    %2469 = vmatpush2.xpose.msra.mxu0 0.0
    %2470 = vmatprep.subr.mxu0 0.0
    %2471 = vmatpush2.xpose.msra.mxu0 0.0
    %2472 = vmatprep.subr.mxu0 0.0
    %2473 = vmatpush2.xpose.msra.mxu0 0.0
    %2474 = vmatprep.mubr.f32.mxu0 0.0
    %v2475 = vand.u32 %v2221, 4294901760
    %v2476 = vsub.f32 %v2221, %v2475
    %2477 = vmatmul.mubr.f32.gmra.mxu0 %v2476
    %v2478 = vpop.f32.mrf.mxu0
    %v2479 = vadd.f32 %v2397, %v2478
    %v2480 = vpop.f32.mrf.mxu0
    %2481 = vmatprep.mubr.f32.mxu0 0.0
    %v2482 = vand.u32 %v2224, 4294901760
    %v2483 = vsub.f32 %v2224, %v2482
    %2484 = vmatmul.mubr.f32.gmra.mxu0 %v2483
    %v2485 = vpop.f32.mrf.mxu0
    %v2486 = vadd.f32 %v2403, %v2485
    %v2487 = vpop.f32.mrf.mxu0
    %2488 = vdwg.mxu0
    %2489 = vmatprep.subr.mxu0 0.0
    %2490 = vmatpush1.xpose.msra.mxu0 0.0
    %2491 = vmatprep.subr.mxu0 0.0
    %2492 = vmatpush1.xpose.msra.mxu0 0.0
    %2493 = vmatprep.subr.mxu0 0.0
    %2494 = vmatpush1.xpose.msra.mxu0 0.0
    %2495 = vmatprep.subr.mxu0 0.0
    %2496 = vmatpush1.xpose.msra.mxu0 0.0
    %2497 = vmatprep.subr.mxu0 0.0
    %2498 = vmatpush1.xpose.msra.mxu0 0.0
    %2499 = vmatprep.subr.mxu0 0.0
    %2500 = vmatpush1.xpose.msra.mxu0 0.0
    %2501 = vmatprep.subr.mxu0 0.0
    %2502 = vmatpush1.xpose.msra.mxu0 0.0
    %2503 = vmatprep.subr.mxu0 0.0
    %2504 = vmatpush1.xpose.msra.mxu0 0.0
    %2505 = vmatprep.subr.mxu0 0.0
    %2506 = vmatpush1.xpose.msra.mxu0 0.0
    %2507 = vmatprep.subr.mxu0 0.0
    %2508 = vmatpush1.xpose.msra.mxu0 0.0
    %2509 = vmatprep.subr.mxu0 0.0
    %2510 = vmatpush1.xpose.msra.mxu0 0.0
    %2511 = vmatprep.subr.mxu0 0.0
    %2512 = vmatpush1.xpose.msra.mxu0 0.0
    %2513 = vmatprep.subr.mxu0 0.0
    %2514 = vmatpush1.xpose.msra.mxu0 0.0
    %2515 = vmatprep.subr.mxu0 0.0
    %2516 = vmatpush1.xpose.msra.mxu0 0.0
    %2517 = vmatprep.subr.mxu0 0.0
    %v2518 = vand.u32 %v2230, 4294901760
    %2519 = vmatpush1.xpose.msra.mxu0 %v2518
    %2520 = vmatprep.subr.mxu0 0.0
    %v2521 = vand.u32 %v2227, 4294901760
    %2522 = vmatpush1.xpose.msra.mxu0 %v2521
    %2523 = vmatprep.subr.mxu0 0.0
    %2524 = vmatpush2.xpose.msra.mxu0 0.0
    %2525 = vmatprep.subr.mxu0 0.0
    %2526 = vmatpush2.xpose.msra.mxu0 0.0
    %2527 = vmatprep.subr.mxu0 0.0
    %2528 = vmatpush2.xpose.msra.mxu0 0.0
    %2529 = vmatprep.subr.mxu0 0.0
    %2530 = vmatpush2.xpose.msra.mxu0 0.0
    %2531 = vmatprep.subr.mxu0 0.0
    %2532 = vmatpush2.xpose.msra.mxu0 0.0
    %2533 = vmatprep.subr.mxu0 0.0
    %2534 = vmatpush2.xpose.msra.mxu0 0.0
    %2535 = vmatprep.subr.mxu0 0.0
    %2536 = vmatpush2.xpose.msra.mxu0 0.0
    %2537 = vmatprep.subr.mxu0 0.0
    %2538 = vmatpush2.xpose.msra.mxu0 0.0
    %2539 = vmatprep.subr.mxu0 0.0
    %2540 = vmatpush2.xpose.msra.mxu0 0.0
    %2541 = vmatprep.subr.mxu0 0.0
    %2542 = vmatpush2.xpose.msra.mxu0 0.0
    %2543 = vmatprep.subr.mxu0 0.0
    %2544 = vmatpush2.xpose.msra.mxu0 0.0
    %2545 = vmatprep.subr.mxu0 0.0
    %2546 = vmatpush2.xpose.msra.mxu0 0.0
    %2547 = vmatprep.subr.mxu0 0.0
    %2548 = vmatpush2.xpose.msra.mxu0 0.0
    %2549 = vmatprep.subr.mxu0 0.0
    %2550 = vmatpush2.xpose.msra.mxu0 0.0
    %2551 = vmatprep.subr.mxu0 0.0
    %2552 = vmatpush2.xpose.msra.mxu0 0.0
    %2553 = vmatprep.subr.mxu0 0.0
    %2554 = vmatpush2.xpose.msra.mxu0 0.0
    %2555 = vmatprep.mubr.f32.mxu0 0.0
    %v2556 = vand.u32 %v2221, 4294901760
    %v2557 = vsub.f32 %v2221, %v2556
    %v2558 = vand.u32 %v2557, 4294901760
    %2559 = vmatmul.mubr.f32.gmra.mxu0 %v2558
    %v2560 = vpop.f32.mrf.mxu0
    %v2561 = vadd.f32 %v2479, %v2560
    %v2562 = vpop.f32.mrf.mxu0
    %2563 = vmatprep.mubr.f32.mxu0 0.0
    %v2564 = vand.u32 %v2224, 4294901760
    %v2565 = vsub.f32 %v2224, %v2564
    %v2566 = vand.u32 %v2565, 4294901760
    %2567 = vmatmul.mubr.f32.gmra.mxu0 %v2566
    %v2568 = vpop.f32.mrf.mxu0
    %v2569 = vadd.f32 %v2486, %v2568
    %v2570 = vpop.f32.mrf.mxu0
    %2571 = vdwg.mxu0
    %2572 = vmatprep.subr.mxu0 0.0
    %2573 = vmatpush1.xpose.msra.mxu0 0.0
    %2574 = vmatprep.subr.mxu0 0.0
    %2575 = vmatpush1.xpose.msra.mxu0 0.0
    %2576 = vmatprep.subr.mxu0 0.0
    %2577 = vmatpush1.xpose.msra.mxu0 0.0
    %2578 = vmatprep.subr.mxu0 0.0
    %2579 = vmatpush1.xpose.msra.mxu0 0.0
    %2580 = vmatprep.subr.mxu0 0.0
    %2581 = vmatpush1.xpose.msra.mxu0 0.0
    %2582 = vmatprep.subr.mxu0 0.0
    %2583 = vmatpush1.xpose.msra.mxu0 0.0
    %2584 = vmatprep.subr.mxu0 0.0
    %2585 = vmatpush1.xpose.msra.mxu0 0.0
    %2586 = vmatprep.subr.mxu0 0.0
    %2587 = vmatpush1.xpose.msra.mxu0 0.0
    %2588 = vmatprep.subr.mxu0 0.0
    %2589 = vmatpush1.xpose.msra.mxu0 0.0
    %2590 = vmatprep.subr.mxu0 0.0
    %2591 = vmatpush1.xpose.msra.mxu0 0.0
    %2592 = vmatprep.subr.mxu0 0.0
    %2593 = vmatpush1.xpose.msra.mxu0 0.0
    %2594 = vmatprep.subr.mxu0 0.0
    %2595 = vmatpush1.xpose.msra.mxu0 0.0
    %2596 = vmatprep.subr.mxu0 0.0
    %2597 = vmatpush1.xpose.msra.mxu0 0.0
    %2598 = vmatprep.subr.mxu0 0.0
    %2599 = vmatpush1.xpose.msra.mxu0 0.0
    %2600 = vmatprep.subr.mxu0 0.0
    %v2601 = vand.u32 %v2230, 4294901760
    %v2602 = vsub.f32 %v2230, %v2601
    %v2603 = vand.u32 %v2602, 4294901760
    %2604 = vmatpush1.xpose.msra.mxu0 %v2603
    %2605 = vmatprep.subr.mxu0 0.0
    %v2606 = vand.u32 %v2227, 4294901760
    %v2607 = vsub.f32 %v2227, %v2606
    %v2608 = vand.u32 %v2607, 4294901760
    %2609 = vmatpush1.xpose.msra.mxu0 %v2608
    %2610 = vmatprep.subr.mxu0 0.0
    %2611 = vmatpush2.xpose.msra.mxu0 0.0
    %2612 = vmatprep.subr.mxu0 0.0
    %2613 = vmatpush2.xpose.msra.mxu0 0.0
    %2614 = vmatprep.subr.mxu0 0.0
    %2615 = vmatpush2.xpose.msra.mxu0 0.0
    %2616 = vmatprep.subr.mxu0 0.0
    %2617 = vmatpush2.xpose.msra.mxu0 0.0
    %2618 = vmatprep.subr.mxu0 0.0
    %2619 = vmatpush2.xpose.msra.mxu0 0.0
    %2620 = vmatprep.subr.mxu0 0.0
    %2621 = vmatpush2.xpose.msra.mxu0 0.0
    %2622 = vmatprep.subr.mxu0 0.0
    %2623 = vmatpush2.xpose.msra.mxu0 0.0
    %2624 = vmatprep.subr.mxu0 0.0
    %2625 = vmatpush2.xpose.msra.mxu0 0.0
    %2626 = vmatprep.subr.mxu0 0.0
    %2627 = vmatpush2.xpose.msra.mxu0 0.0
    %2628 = vmatprep.subr.mxu0 0.0
    %2629 = vmatpush2.xpose.msra.mxu0 0.0
    %2630 = vmatprep.subr.mxu0 0.0
    %2631 = vmatpush2.xpose.msra.mxu0 0.0
    %2632 = vmatprep.subr.mxu0 0.0
    %2633 = vmatpush2.xpose.msra.mxu0 0.0
    %2634 = vmatprep.subr.mxu0 0.0
    %2635 = vmatpush2.xpose.msra.mxu0 0.0
    %2636 = vmatprep.subr.mxu0 0.0
    %2637 = vmatpush2.xpose.msra.mxu0 0.0
    %2638 = vmatprep.subr.mxu0 0.0
    %2639 = vmatpush2.xpose.msra.mxu0 0.0
    %2640 = vmatprep.subr.mxu0 0.0
    %2641 = vmatpush2.xpose.msra.mxu0 0.0
    %2642 = vmatprep.mubr.f32.mxu0 0.0
    %v2643 = vand.u32 %v2221, 4294901760
    %2644 = vmatmul.mubr.f32.gmra.mxu0 %v2643
    %v2645 = vpop.f32.mrf.mxu0
    %v2646 = vadd.f32 %v2561, %v2645
    %v2647 = vpop.f32.mrf.mxu0
    %2648 = vmatprep.mubr.f32.mxu0 0.0
    %v2649 = vand.u32 %v2224, 4294901760
    %2650 = vmatmul.mubr.f32.gmra.mxu0 %v2649
    %v2651 = vpop.f32.mrf.mxu0
    %v2652 = vadd.f32 %v2569, %v2651
    %v2653 = vpop.f32.mrf.mxu0
    %2654 = vdwg.mxu0
    %2655 = vmatprep.subr.mxu0 0.0
    %2656 = vmatpush1.xpose.msra.mxu0 0.0
    %2657 = vmatprep.subr.mxu0 0.0
    %2658 = vmatpush1.xpose.msra.mxu0 0.0
    %2659 = vmatprep.subr.mxu0 0.0
    %2660 = vmatpush1.xpose.msra.mxu0 0.0
    %2661 = vmatprep.subr.mxu0 0.0
    %2662 = vmatpush1.xpose.msra.mxu0 0.0
    %2663 = vmatprep.subr.mxu0 0.0
    %2664 = vmatpush1.xpose.msra.mxu0 0.0
    %2665 = vmatprep.subr.mxu0 0.0
    %2666 = vmatpush1.xpose.msra.mxu0 0.0
    %2667 = vmatprep.subr.mxu0 0.0
    %2668 = vmatpush1.xpose.msra.mxu0 0.0
    %2669 = vmatprep.subr.mxu0 0.0
    %2670 = vmatpush1.xpose.msra.mxu0 0.0
    %2671 = vmatprep.subr.mxu0 0.0
    %2672 = vmatpush1.xpose.msra.mxu0 0.0
    %2673 = vmatprep.subr.mxu0 0.0
    %2674 = vmatpush1.xpose.msra.mxu0 0.0
    %2675 = vmatprep.subr.mxu0 0.0
    %2676 = vmatpush1.xpose.msra.mxu0 0.0
    %2677 = vmatprep.subr.mxu0 0.0
    %2678 = vmatpush1.xpose.msra.mxu0 0.0
    %2679 = vmatprep.subr.mxu0 0.0
    %2680 = vmatpush1.xpose.msra.mxu0 0.0
    %2681 = vmatprep.subr.mxu0 0.0
    %2682 = vmatpush1.xpose.msra.mxu0 0.0
    %2683 = vmatprep.subr.mxu0 0.0
    %v2684 = vand.u32 %v2230, 4294901760
    %2685 = vmatpush1.xpose.msra.mxu0 %v2684
    %2686 = vmatprep.subr.mxu0 0.0
    %v2687 = vand.u32 %v2227, 4294901760
    %2688 = vmatpush1.xpose.msra.mxu0 %v2687
    %2689 = vmatprep.subr.mxu0 0.0
    %2690 = vmatpush2.xpose.msra.mxu0 0.0
    %2691 = vmatprep.subr.mxu0 0.0
    %2692 = vmatpush2.xpose.msra.mxu0 0.0
    %2693 = vmatprep.subr.mxu0 0.0
    %2694 = vmatpush2.xpose.msra.mxu0 0.0
    %2695 = vmatprep.subr.mxu0 0.0
    %2696 = vmatpush2.xpose.msra.mxu0 0.0
    %2697 = vmatprep.subr.mxu0 0.0
    %2698 = vmatpush2.xpose.msra.mxu0 0.0
    %2699 = vmatprep.subr.mxu0 0.0
    %2700 = vmatpush2.xpose.msra.mxu0 0.0
    %2701 = vmatprep.subr.mxu0 0.0
    %2702 = vmatpush2.xpose.msra.mxu0 0.0
    %2703 = vmatprep.subr.mxu0 0.0
    %2704 = vmatpush2.xpose.msra.mxu0 0.0
    %2705 = vmatprep.subr.mxu0 0.0
    %2706 = vmatpush2.xpose.msra.mxu0 0.0
    %2707 = vmatprep.subr.mxu0 0.0
    %2708 = vmatpush2.xpose.msra.mxu0 0.0
    %2709 = vmatprep.subr.mxu0 0.0
    %2710 = vmatpush2.xpose.msra.mxu0 0.0
    %2711 = vmatprep.subr.mxu0 0.0
    %2712 = vmatpush2.xpose.msra.mxu0 0.0
    %2713 = vmatprep.subr.mxu0 0.0
    %2714 = vmatpush2.xpose.msra.mxu0 0.0
    %2715 = vmatprep.subr.mxu0 0.0
    %2716 = vmatpush2.xpose.msra.mxu0 0.0
    %2717 = vmatprep.subr.mxu0 0.0
    %2718 = vmatpush2.xpose.msra.mxu0 0.0
    %2719 = vmatprep.subr.mxu0 0.0
    %2720 = vmatpush2.xpose.msra.mxu0 0.0
    %2721 = vmatprep.mubr.f32.mxu0 0.0
    %v2722 = vand.u32 %v2221, 4294901760
    %2723 = vmatmul.mubr.f32.gmra.mxu0 %v2722
    %v2724 = vpop.f32.mrf.mxu0
    %v2725 = vadd.f32 %v2646, %v2724
    %v2726 = vpop.f32.mrf.mxu0
    %2727 = vmatprep.mubr.f32.mxu0 0.0
    %v2728 = vand.u32 %v2224, 4294901760
    %2729 = vmatmul.mubr.f32.gmra.mxu0 %v2728
    %v2730 = vpop.f32.mrf.mxu0
    %v2731 = vadd.f32 %v2652, %v2730
    %v2732 = vpop.f32.mrf.mxu0
    %2733 = vdwg.mxu0
    %v2735 = vsel %vm163, %v157, 0
    %v2738 = vsel %vm163, %v158, 0
    %v2741 = vsel %vm163, %v48, 0
    %v2744 = vsel %vm163, %v49, 0
    %2746 = vmatprep.subr.mxu0 0.0
    %2747 = vmatpush1.xpose.msra.mxu0 0.0
    %2748 = vmatprep.subr.mxu0 0.0
    %2749 = vmatpush1.xpose.msra.mxu0 0.0
    %2750 = vmatprep.subr.mxu0 0.0
    %2751 = vmatpush1.xpose.msra.mxu0 0.0
    %2752 = vmatprep.subr.mxu0 0.0
    %2753 = vmatpush1.xpose.msra.mxu0 0.0
    %2754 = vmatprep.subr.mxu0 0.0
    %2755 = vmatpush1.xpose.msra.mxu0 0.0
    %2756 = vmatprep.subr.mxu0 0.0
    %2757 = vmatpush1.xpose.msra.mxu0 0.0
    %2758 = vmatprep.subr.mxu0 0.0
    %2759 = vmatpush1.xpose.msra.mxu0 0.0
    %2760 = vmatprep.subr.mxu0 0.0
    %2761 = vmatpush1.xpose.msra.mxu0 0.0
    %2762 = vmatprep.subr.mxu0 0.0
    %2763 = vmatpush1.xpose.msra.mxu0 0.0
    %2764 = vmatprep.subr.mxu0 0.0
    %2765 = vmatpush1.xpose.msra.mxu0 0.0
    %2766 = vmatprep.subr.mxu0 0.0
    %2767 = vmatpush1.xpose.msra.mxu0 0.0
    %2768 = vmatprep.subr.mxu0 0.0
    %2769 = vmatpush1.xpose.msra.mxu0 0.0
    %2770 = vmatprep.subr.mxu0 0.0
    %2771 = vmatpush1.xpose.msra.mxu0 0.0
    %2772 = vmatprep.subr.mxu0 0.0
    %2773 = vmatpush1.xpose.msra.mxu0 0.0
    %2774 = vmatprep.subr.mxu0 0.0
    %v2775 = vand.u32 %v2744, 4294901760
    %2776 = vmatpush1.xpose.msra.mxu0 %v2775
    %2777 = vmatprep.subr.mxu0 0.0
    %v2778 = vand.u32 %v2741, 4294901760
    %2779 = vmatpush1.xpose.msra.mxu0 %v2778
    %2780 = vmatprep.subr.mxu0 0.0
    %2781 = vmatpush2.xpose.msra.mxu0 0.0
    %2782 = vmatprep.subr.mxu0 0.0
    %2783 = vmatpush2.xpose.msra.mxu0 0.0
    %2784 = vmatprep.subr.mxu0 0.0
    %2785 = vmatpush2.xpose.msra.mxu0 0.0
    %2786 = vmatprep.subr.mxu0 0.0
    %2787 = vmatpush2.xpose.msra.mxu0 0.0
    %2788 = vmatprep.subr.mxu0 0.0
    %2789 = vmatpush2.xpose.msra.mxu0 0.0
    %2790 = vmatprep.subr.mxu0 0.0
    %2791 = vmatpush2.xpose.msra.mxu0 0.0
    %2792 = vmatprep.subr.mxu0 0.0
    %2793 = vmatpush2.xpose.msra.mxu0 0.0
    %2794 = vmatprep.subr.mxu0 0.0
    %2795 = vmatpush2.xpose.msra.mxu0 0.0
    %2796 = vmatprep.subr.mxu0 0.0
    %2797 = vmatpush2.xpose.msra.mxu0 0.0
    %2798 = vmatprep.subr.mxu0 0.0
    %2799 = vmatpush2.xpose.msra.mxu0 0.0
    %2800 = vmatprep.subr.mxu0 0.0
    %2801 = vmatpush2.xpose.msra.mxu0 0.0
    %2802 = vmatprep.subr.mxu0 0.0
    %2803 = vmatpush2.xpose.msra.mxu0 0.0
    %2804 = vmatprep.subr.mxu0 0.0
    %2805 = vmatpush2.xpose.msra.mxu0 0.0
    %2806 = vmatprep.subr.mxu0 0.0
    %2807 = vmatpush2.xpose.msra.mxu0 0.0
    %2808 = vmatprep.subr.mxu0 0.0
    %2809 = vmatpush2.xpose.msra.mxu0 0.0
    %2810 = vmatprep.subr.mxu0 0.0
    %2811 = vmatpush2.xpose.msra.mxu0 0.0
    %2812 = vmatprep.mubr.f32.mxu0 0.0
    %v2813 = vand.u32 %v2735, 4294901760
    %v2814 = vsub.f32 %v2735, %v2813
    %v2815 = vand.u32 %v2814, 4294901760
    %v2816 = vsub.f32 %v2814, %v2815
    %v2817 = vand.u32 %v2816, 4294901760
    %2818 = vmatmul.mubr.f32.gmra.mxu0 %v2817
    %v2819 = vpop.f32.mrf.mxu0
    %v2820 = vadd.f32 0.0, %v2819
    %v2821 = vpop.f32.mrf.mxu0
    %2822 = vmatprep.mubr.f32.mxu0 0.0
    %v2823 = vand.u32 %v2738, 4294901760
    %v2824 = vsub.f32 %v2738, %v2823
    %v2825 = vand.u32 %v2824, 4294901760
    %v2826 = vsub.f32 %v2824, %v2825
    %v2827 = vand.u32 %v2826, 4294901760
    %2828 = vmatmul.mubr.f32.gmra.mxu0 %v2827
    %v2829 = vpop.f32.mrf.mxu0
    %v2830 = vadd.f32 0.0, %v2829
    %v2831 = vpop.f32.mrf.mxu0
    %2832 = vdwg.mxu0
    %2833 = vmatprep.subr.mxu0 0.0
    %2834 = vmatpush1.xpose.msra.mxu0 0.0
    %2835 = vmatprep.subr.mxu0 0.0
    %2836 = vmatpush1.xpose.msra.mxu0 0.0
    %2837 = vmatprep.subr.mxu0 0.0
    %2838 = vmatpush1.xpose.msra.mxu0 0.0
    %2839 = vmatprep.subr.mxu0 0.0
    %2840 = vmatpush1.xpose.msra.mxu0 0.0
    %2841 = vmatprep.subr.mxu0 0.0
    %2842 = vmatpush1.xpose.msra.mxu0 0.0
    %2843 = vmatprep.subr.mxu0 0.0
    %2844 = vmatpush1.xpose.msra.mxu0 0.0
    %2845 = vmatprep.subr.mxu0 0.0
    %2846 = vmatpush1.xpose.msra.mxu0 0.0
    %2847 = vmatprep.subr.mxu0 0.0
    %2848 = vmatpush1.xpose.msra.mxu0 0.0
    %2849 = vmatprep.subr.mxu0 0.0
    %2850 = vmatpush1.xpose.msra.mxu0 0.0
    %2851 = vmatprep.subr.mxu0 0.0
    %2852 = vmatpush1.xpose.msra.mxu0 0.0
    %2853 = vmatprep.subr.mxu0 0.0
    %2854 = vmatpush1.xpose.msra.mxu0 0.0
    %2855 = vmatprep.subr.mxu0 0.0
    %2856 = vmatpush1.xpose.msra.mxu0 0.0
    %2857 = vmatprep.subr.mxu0 0.0
    %2858 = vmatpush1.xpose.msra.mxu0 0.0
    %2859 = vmatprep.subr.mxu0 0.0
    %2860 = vmatpush1.xpose.msra.mxu0 0.0
    %2861 = vmatprep.subr.mxu0 0.0
    %v2862 = vand.u32 %v2744, 4294901760
    %v2863 = vsub.f32 %v2744, %v2862
    %v2864 = vand.u32 %v2863, 4294901760
    %v2865 = vsub.f32 %v2863, %v2864
    %v2866 = vand.u32 %v2865, 4294901760
    %2867 = vmatpush1.xpose.msra.mxu0 %v2866
    %2868 = vmatprep.subr.mxu0 0.0
    %v2869 = vand.u32 %v2741, 4294901760
    %v2870 = vsub.f32 %v2741, %v2869
    %v2871 = vand.u32 %v2870, 4294901760
    %v2872 = vsub.f32 %v2870, %v2871
    %v2873 = vand.u32 %v2872, 4294901760
    %2874 = vmatpush1.xpose.msra.mxu0 %v2873
    %2875 = vmatprep.subr.mxu0 0.0
    %2876 = vmatpush2.xpose.msra.mxu0 0.0
    %2877 = vmatprep.subr.mxu0 0.0
    %2878 = vmatpush2.xpose.msra.mxu0 0.0
    %2879 = vmatprep.subr.mxu0 0.0
    %2880 = vmatpush2.xpose.msra.mxu0 0.0
    %2881 = vmatprep.subr.mxu0 0.0
    %2882 = vmatpush2.xpose.msra.mxu0 0.0
    %2883 = vmatprep.subr.mxu0 0.0
    %2884 = vmatpush2.xpose.msra.mxu0 0.0
    %2885 = vmatprep.subr.mxu0 0.0
    %2886 = vmatpush2.xpose.msra.mxu0 0.0
    %2887 = vmatprep.subr.mxu0 0.0
    %2888 = vmatpush2.xpose.msra.mxu0 0.0
    %2889 = vmatprep.subr.mxu0 0.0
    %2890 = vmatpush2.xpose.msra.mxu0 0.0
    %2891 = vmatprep.subr.mxu0 0.0
    %2892 = vmatpush2.xpose.msra.mxu0 0.0
    %2893 = vmatprep.subr.mxu0 0.0
    %2894 = vmatpush2.xpose.msra.mxu0 0.0
    %2895 = vmatprep.subr.mxu0 0.0
    %2896 = vmatpush2.xpose.msra.mxu0 0.0
    %2897 = vmatprep.subr.mxu0 0.0
    %2898 = vmatpush2.xpose.msra.mxu0 0.0
    %2899 = vmatprep.subr.mxu0 0.0
    %2900 = vmatpush2.xpose.msra.mxu0 0.0
    %2901 = vmatprep.subr.mxu0 0.0
    %2902 = vmatpush2.xpose.msra.mxu0 0.0
    %2903 = vmatprep.subr.mxu0 0.0
    %2904 = vmatpush2.xpose.msra.mxu0 0.0
    %2905 = vmatprep.subr.mxu0 0.0
    %2906 = vmatpush2.xpose.msra.mxu0 0.0
    %2907 = vmatprep.mubr.f32.mxu0 0.0
    %v2908 = vand.u32 %v2735, 4294901760
    %2909 = vmatmul.mubr.f32.gmra.mxu0 %v2908
    %v2910 = vpop.f32.mrf.mxu0
    %v2911 = vadd.f32 %v2820, %v2910
    %v2912 = vpop.f32.mrf.mxu0
    %2913 = vmatprep.mubr.f32.mxu0 0.0
    %v2914 = vand.u32 %v2738, 4294901760
    %2915 = vmatmul.mubr.f32.gmra.mxu0 %v2914
    %v2916 = vpop.f32.mrf.mxu0
    %v2917 = vadd.f32 %v2830, %v2916
    %v2918 = vpop.f32.mrf.mxu0
    %2919 = vdwg.mxu0
    %2920 = vmatprep.subr.mxu0 0.0
    %2921 = vmatpush1.xpose.msra.mxu0 0.0
    %2922 = vmatprep.subr.mxu0 0.0
    %2923 = vmatpush1.xpose.msra.mxu0 0.0
    %2924 = vmatprep.subr.mxu0 0.0
    %2925 = vmatpush1.xpose.msra.mxu0 0.0
    %2926 = vmatprep.subr.mxu0 0.0
    %2927 = vmatpush1.xpose.msra.mxu0 0.0
    %2928 = vmatprep.subr.mxu0 0.0
    %2929 = vmatpush1.xpose.msra.mxu0 0.0
    %2930 = vmatprep.subr.mxu0 0.0
    %2931 = vmatpush1.xpose.msra.mxu0 0.0
    %2932 = vmatprep.subr.mxu0 0.0
    %2933 = vmatpush1.xpose.msra.mxu0 0.0
    %2934 = vmatprep.subr.mxu0 0.0
    %2935 = vmatpush1.xpose.msra.mxu0 0.0
    %2936 = vmatprep.subr.mxu0 0.0
    %2937 = vmatpush1.xpose.msra.mxu0 0.0
    %2938 = vmatprep.subr.mxu0 0.0
    %2939 = vmatpush1.xpose.msra.mxu0 0.0
    %2940 = vmatprep.subr.mxu0 0.0
    %2941 = vmatpush1.xpose.msra.mxu0 0.0
    %2942 = vmatprep.subr.mxu0 0.0
    %2943 = vmatpush1.xpose.msra.mxu0 0.0
    %2944 = vmatprep.subr.mxu0 0.0
    %2945 = vmatpush1.xpose.msra.mxu0 0.0
    %2946 = vmatprep.subr.mxu0 0.0
    %2947 = vmatpush1.xpose.msra.mxu0 0.0
    %2948 = vmatprep.subr.mxu0 0.0
    %v2949 = vand.u32 %v2744, 4294901760
    %v2950 = vsub.f32 %v2744, %v2949
    %2951 = vmatpush1.xpose.msra.mxu0 %v2950
    %2952 = vmatprep.subr.mxu0 0.0
    %v2953 = vand.u32 %v2741, 4294901760
    %v2954 = vsub.f32 %v2741, %v2953
    %2955 = vmatpush1.xpose.msra.mxu0 %v2954
    %2956 = vmatprep.subr.mxu0 0.0
    %2957 = vmatpush2.xpose.msra.mxu0 0.0
    %2958 = vmatprep.subr.mxu0 0.0
    %2959 = vmatpush2.xpose.msra.mxu0 0.0
    %2960 = vmatprep.subr.mxu0 0.0
    %2961 = vmatpush2.xpose.msra.mxu0 0.0
    %2962 = vmatprep.subr.mxu0 0.0
    %2963 = vmatpush2.xpose.msra.mxu0 0.0
    %2964 = vmatprep.subr.mxu0 0.0
    %2965 = vmatpush2.xpose.msra.mxu0 0.0
    %2966 = vmatprep.subr.mxu0 0.0
    %2967 = vmatpush2.xpose.msra.mxu0 0.0
    %2968 = vmatprep.subr.mxu0 0.0
    %2969 = vmatpush2.xpose.msra.mxu0 0.0
    %2970 = vmatprep.subr.mxu0 0.0
    %2971 = vmatpush2.xpose.msra.mxu0 0.0
    %2972 = vmatprep.subr.mxu0 0.0
    %2973 = vmatpush2.xpose.msra.mxu0 0.0
    %2974 = vmatprep.subr.mxu0 0.0
    %2975 = vmatpush2.xpose.msra.mxu0 0.0
    %2976 = vmatprep.subr.mxu0 0.0
    %2977 = vmatpush2.xpose.msra.mxu0 0.0
    %2978 = vmatprep.subr.mxu0 0.0
    %2979 = vmatpush2.xpose.msra.mxu0 0.0
    %2980 = vmatprep.subr.mxu0 0.0
    %2981 = vmatpush2.xpose.msra.mxu0 0.0
    %2982 = vmatprep.subr.mxu0 0.0
    %2983 = vmatpush2.xpose.msra.mxu0 0.0
    %2984 = vmatprep.subr.mxu0 0.0
    %2985 = vmatpush2.xpose.msra.mxu0 0.0
    %2986 = vmatprep.subr.mxu0 0.0
    %2987 = vmatpush2.xpose.msra.mxu0 0.0
    %2988 = vmatprep.mubr.f32.mxu0 0.0
    %v2989 = vand.u32 %v2735, 4294901760
    %v2990 = vsub.f32 %v2735, %v2989
    %2991 = vmatmul.mubr.f32.gmra.mxu0 %v2990
    %v2992 = vpop.f32.mrf.mxu0
    %v2993 = vadd.f32 %v2911, %v2992
    %v2994 = vpop.f32.mrf.mxu0
    %2995 = vmatprep.mubr.f32.mxu0 0.0
    %v2996 = vand.u32 %v2738, 4294901760
    %v2997 = vsub.f32 %v2738, %v2996
    %2998 = vmatmul.mubr.f32.gmra.mxu0 %v2997
    %v2999 = vpop.f32.mrf.mxu0
    %v3000 = vadd.f32 %v2917, %v2999
    %v3001 = vpop.f32.mrf.mxu0
    %3002 = vdwg.mxu0
    %3003 = vmatprep.subr.mxu0 0.0
    %3004 = vmatpush1.xpose.msra.mxu0 0.0
    %3005 = vmatprep.subr.mxu0 0.0
    %3006 = vmatpush1.xpose.msra.mxu0 0.0
    %3007 = vmatprep.subr.mxu0 0.0
    %3008 = vmatpush1.xpose.msra.mxu0 0.0
    %3009 = vmatprep.subr.mxu0 0.0
    %3010 = vmatpush1.xpose.msra.mxu0 0.0
    %3011 = vmatprep.subr.mxu0 0.0
    %3012 = vmatpush1.xpose.msra.mxu0 0.0
    %3013 = vmatprep.subr.mxu0 0.0
    %3014 = vmatpush1.xpose.msra.mxu0 0.0
    %3015 = vmatprep.subr.mxu0 0.0
    %3016 = vmatpush1.xpose.msra.mxu0 0.0
    %3017 = vmatprep.subr.mxu0 0.0
    %3018 = vmatpush1.xpose.msra.mxu0 0.0
    %3019 = vmatprep.subr.mxu0 0.0
    %3020 = vmatpush1.xpose.msra.mxu0 0.0
    %3021 = vmatprep.subr.mxu0 0.0
    %3022 = vmatpush1.xpose.msra.mxu0 0.0
    %3023 = vmatprep.subr.mxu0 0.0
    %3024 = vmatpush1.xpose.msra.mxu0 0.0
    %3025 = vmatprep.subr.mxu0 0.0
    %3026 = vmatpush1.xpose.msra.mxu0 0.0
    %3027 = vmatprep.subr.mxu0 0.0
    %3028 = vmatpush1.xpose.msra.mxu0 0.0
    %3029 = vmatprep.subr.mxu0 0.0
    %3030 = vmatpush1.xpose.msra.mxu0 0.0
    %3031 = vmatprep.subr.mxu0 0.0
    %v3032 = vand.u32 %v2744, 4294901760
    %3033 = vmatpush1.xpose.msra.mxu0 %v3032
    %3034 = vmatprep.subr.mxu0 0.0
    %v3035 = vand.u32 %v2741, 4294901760
    %3036 = vmatpush1.xpose.msra.mxu0 %v3035
    %3037 = vmatprep.subr.mxu0 0.0
    %3038 = vmatpush2.xpose.msra.mxu0 0.0
    %3039 = vmatprep.subr.mxu0 0.0
    %3040 = vmatpush2.xpose.msra.mxu0 0.0
    %3041 = vmatprep.subr.mxu0 0.0
    %3042 = vmatpush2.xpose.msra.mxu0 0.0
    %3043 = vmatprep.subr.mxu0 0.0
    %3044 = vmatpush2.xpose.msra.mxu0 0.0
    %3045 = vmatprep.subr.mxu0 0.0
    %3046 = vmatpush2.xpose.msra.mxu0 0.0
    %3047 = vmatprep.subr.mxu0 0.0
    %3048 = vmatpush2.xpose.msra.mxu0 0.0
    %3049 = vmatprep.subr.mxu0 0.0
    %3050 = vmatpush2.xpose.msra.mxu0 0.0
    %3051 = vmatprep.subr.mxu0 0.0
    %3052 = vmatpush2.xpose.msra.mxu0 0.0
    %3053 = vmatprep.subr.mxu0 0.0
    %3054 = vmatpush2.xpose.msra.mxu0 0.0
    %3055 = vmatprep.subr.mxu0 0.0
    %3056 = vmatpush2.xpose.msra.mxu0 0.0
    %3057 = vmatprep.subr.mxu0 0.0
    %3058 = vmatpush2.xpose.msra.mxu0 0.0
    %3059 = vmatprep.subr.mxu0 0.0
    %3060 = vmatpush2.xpose.msra.mxu0 0.0
    %3061 = vmatprep.subr.mxu0 0.0
    %3062 = vmatpush2.xpose.msra.mxu0 0.0
    %3063 = vmatprep.subr.mxu0 0.0
    %3064 = vmatpush2.xpose.msra.mxu0 0.0
    %3065 = vmatprep.subr.mxu0 0.0
    %3066 = vmatpush2.xpose.msra.mxu0 0.0
    %3067 = vmatprep.subr.mxu0 0.0
    %3068 = vmatpush2.xpose.msra.mxu0 0.0
    %3069 = vmatprep.mubr.f32.mxu0 0.0
    %v3070 = vand.u32 %v2735, 4294901760
    %v3071 = vsub.f32 %v2735, %v3070
    %v3072 = vand.u32 %v3071, 4294901760
    %3073 = vmatmul.mubr.f32.gmra.mxu0 %v3072
    %v3074 = vpop.f32.mrf.mxu0
    %v3075 = vadd.f32 %v2993, %v3074
    %v3076 = vpop.f32.mrf.mxu0
    %3077 = vmatprep.mubr.f32.mxu0 0.0
    %v3078 = vand.u32 %v2738, 4294901760
    %v3079 = vsub.f32 %v2738, %v3078
    %v3080 = vand.u32 %v3079, 4294901760
    %3081 = vmatmul.mubr.f32.gmra.mxu0 %v3080
    %v3082 = vpop.f32.mrf.mxu0
    %v3083 = vadd.f32 %v3000, %v3082
    %v3084 = vpop.f32.mrf.mxu0
    %3085 = vdwg.mxu0
    %3086 = vmatprep.subr.mxu0 0.0
    %3087 = vmatpush1.xpose.msra.mxu0 0.0
    %3088 = vmatprep.subr.mxu0 0.0
    %3089 = vmatpush1.xpose.msra.mxu0 0.0
    %3090 = vmatprep.subr.mxu0 0.0
    %3091 = vmatpush1.xpose.msra.mxu0 0.0
    %3092 = vmatprep.subr.mxu0 0.0
    %3093 = vmatpush1.xpose.msra.mxu0 0.0
    %3094 = vmatprep.subr.mxu0 0.0
    %3095 = vmatpush1.xpose.msra.mxu0 0.0
    %3096 = vmatprep.subr.mxu0 0.0
    %3097 = vmatpush1.xpose.msra.mxu0 0.0
    %3098 = vmatprep.subr.mxu0 0.0
    %3099 = vmatpush1.xpose.msra.mxu0 0.0
    %3100 = vmatprep.subr.mxu0 0.0
    %3101 = vmatpush1.xpose.msra.mxu0 0.0
    %3102 = vmatprep.subr.mxu0 0.0
    %3103 = vmatpush1.xpose.msra.mxu0 0.0
    %3104 = vmatprep.subr.mxu0 0.0
    %3105 = vmatpush1.xpose.msra.mxu0 0.0
    %3106 = vmatprep.subr.mxu0 0.0
    %3107 = vmatpush1.xpose.msra.mxu0 0.0
    %3108 = vmatprep.subr.mxu0 0.0
    %3109 = vmatpush1.xpose.msra.mxu0 0.0
    %3110 = vmatprep.subr.mxu0 0.0
    %3111 = vmatpush1.xpose.msra.mxu0 0.0
    %3112 = vmatprep.subr.mxu0 0.0
    %3113 = vmatpush1.xpose.msra.mxu0 0.0
    %3114 = vmatprep.subr.mxu0 0.0
    %v3115 = vand.u32 %v2744, 4294901760
    %v3116 = vsub.f32 %v2744, %v3115
    %v3117 = vand.u32 %v3116, 4294901760
    %3118 = vmatpush1.xpose.msra.mxu0 %v3117
    %3119 = vmatprep.subr.mxu0 0.0
    %v3120 = vand.u32 %v2741, 4294901760
    %v3121 = vsub.f32 %v2741, %v3120
    %v3122 = vand.u32 %v3121, 4294901760
    %3123 = vmatpush1.xpose.msra.mxu0 %v3122
    %3124 = vmatprep.subr.mxu0 0.0
    %3125 = vmatpush2.xpose.msra.mxu0 0.0
    %3126 = vmatprep.subr.mxu0 0.0
    %3127 = vmatpush2.xpose.msra.mxu0 0.0
    %3128 = vmatprep.subr.mxu0 0.0
    %3129 = vmatpush2.xpose.msra.mxu0 0.0
    %3130 = vmatprep.subr.mxu0 0.0
    %3131 = vmatpush2.xpose.msra.mxu0 0.0
    %3132 = vmatprep.subr.mxu0 0.0
    %3133 = vmatpush2.xpose.msra.mxu0 0.0
    %3134 = vmatprep.subr.mxu0 0.0
    %3135 = vmatpush2.xpose.msra.mxu0 0.0
    %3136 = vmatprep.subr.mxu0 0.0
    %3137 = vmatpush2.xpose.msra.mxu0 0.0
    %3138 = vmatprep.subr.mxu0 0.0
    %3139 = vmatpush2.xpose.msra.mxu0 0.0
    %3140 = vmatprep.subr.mxu0 0.0
    %3141 = vmatpush2.xpose.msra.mxu0 0.0
    %3142 = vmatprep.subr.mxu0 0.0
    %3143 = vmatpush2.xpose.msra.mxu0 0.0
    %3144 = vmatprep.subr.mxu0 0.0
    %3145 = vmatpush2.xpose.msra.mxu0 0.0
    %3146 = vmatprep.subr.mxu0 0.0
    %3147 = vmatpush2.xpose.msra.mxu0 0.0
    %3148 = vmatprep.subr.mxu0 0.0
    %3149 = vmatpush2.xpose.msra.mxu0 0.0
    %3150 = vmatprep.subr.mxu0 0.0
    %3151 = vmatpush2.xpose.msra.mxu0 0.0
    %3152 = vmatprep.subr.mxu0 0.0
    %3153 = vmatpush2.xpose.msra.mxu0 0.0
    %3154 = vmatprep.subr.mxu0 0.0
    %3155 = vmatpush2.xpose.msra.mxu0 0.0
    %3156 = vmatprep.mubr.f32.mxu0 0.0
    %v3157 = vand.u32 %v2735, 4294901760
    %3158 = vmatmul.mubr.f32.gmra.mxu0 %v3157
    %v3159 = vpop.f32.mrf.mxu0
    %v3160 = vadd.f32 %v3075, %v3159
    %v3161 = vpop.f32.mrf.mxu0
    %3162 = vmatprep.mubr.f32.mxu0 0.0
    %v3163 = vand.u32 %v2738, 4294901760
    %3164 = vmatmul.mubr.f32.gmra.mxu0 %v3163
    %v3165 = vpop.f32.mrf.mxu0
    %v3166 = vadd.f32 %v3083, %v3165
    %v3167 = vpop.f32.mrf.mxu0
    %3168 = vdwg.mxu0
    %3169 = vmatprep.subr.mxu0 0.0
    %3170 = vmatpush1.xpose.msra.mxu0 0.0
    %3171 = vmatprep.subr.mxu0 0.0
    %3172 = vmatpush1.xpose.msra.mxu0 0.0
    %3173 = vmatprep.subr.mxu0 0.0
    %3174 = vmatpush1.xpose.msra.mxu0 0.0
    %3175 = vmatprep.subr.mxu0 0.0
    %3176 = vmatpush1.xpose.msra.mxu0 0.0
    %3177 = vmatprep.subr.mxu0 0.0
    %3178 = vmatpush1.xpose.msra.mxu0 0.0
    %3179 = vmatprep.subr.mxu0 0.0
    %3180 = vmatpush1.xpose.msra.mxu0 0.0
    %3181 = vmatprep.subr.mxu0 0.0
    %3182 = vmatpush1.xpose.msra.mxu0 0.0
    %3183 = vmatprep.subr.mxu0 0.0
    %3184 = vmatpush1.xpose.msra.mxu0 0.0
    %3185 = vmatprep.subr.mxu0 0.0
    %3186 = vmatpush1.xpose.msra.mxu0 0.0
    %3187 = vmatprep.subr.mxu0 0.0
    %3188 = vmatpush1.xpose.msra.mxu0 0.0
    %3189 = vmatprep.subr.mxu0 0.0
    %3190 = vmatpush1.xpose.msra.mxu0 0.0
    %3191 = vmatprep.subr.mxu0 0.0
    %3192 = vmatpush1.xpose.msra.mxu0 0.0
    %3193 = vmatprep.subr.mxu0 0.0
    %3194 = vmatpush1.xpose.msra.mxu0 0.0
    %3195 = vmatprep.subr.mxu0 0.0
    %3196 = vmatpush1.xpose.msra.mxu0 0.0
    %3197 = vmatprep.subr.mxu0 0.0
    %v3198 = vand.u32 %v2744, 4294901760
    %3199 = vmatpush1.xpose.msra.mxu0 %v3198
    %3200 = vmatprep.subr.mxu0 0.0
    %v3201 = vand.u32 %v2741, 4294901760
    %3202 = vmatpush1.xpose.msra.mxu0 %v3201
    %3203 = vmatprep.subr.mxu0 0.0
    %3204 = vmatpush2.xpose.msra.mxu0 0.0
    %3205 = vmatprep.subr.mxu0 0.0
    %3206 = vmatpush2.xpose.msra.mxu0 0.0
    %3207 = vmatprep.subr.mxu0 0.0
    %3208 = vmatpush2.xpose.msra.mxu0 0.0
    %3209 = vmatprep.subr.mxu0 0.0
    %3210 = vmatpush2.xpose.msra.mxu0 0.0
    %3211 = vmatprep.subr.mxu0 0.0
    %3212 = vmatpush2.xpose.msra.mxu0 0.0
    %3213 = vmatprep.subr.mxu0 0.0
    %3214 = vmatpush2.xpose.msra.mxu0 0.0
    %3215 = vmatprep.subr.mxu0 0.0
    %3216 = vmatpush2.xpose.msra.mxu0 0.0
    %3217 = vmatprep.subr.mxu0 0.0
    %3218 = vmatpush2.xpose.msra.mxu0 0.0
    %3219 = vmatprep.subr.mxu0 0.0
    %3220 = vmatpush2.xpose.msra.mxu0 0.0
    %3221 = vmatprep.subr.mxu0 0.0
    %3222 = vmatpush2.xpose.msra.mxu0 0.0
    %3223 = vmatprep.subr.mxu0 0.0
    %3224 = vmatpush2.xpose.msra.mxu0 0.0
    %3225 = vmatprep.subr.mxu0 0.0
    %3226 = vmatpush2.xpose.msra.mxu0 0.0
    %3227 = vmatprep.subr.mxu0 0.0
    %3228 = vmatpush2.xpose.msra.mxu0 0.0
    %3229 = vmatprep.subr.mxu0 0.0
    %3230 = vmatpush2.xpose.msra.mxu0 0.0
    %3231 = vmatprep.subr.mxu0 0.0
    %3232 = vmatpush2.xpose.msra.mxu0 0.0
    %3233 = vmatprep.subr.mxu0 0.0
    %3234 = vmatpush2.xpose.msra.mxu0 0.0
    %3235 = vmatprep.mubr.f32.mxu0 0.0
    %v3236 = vand.u32 %v2735, 4294901760
    %3237 = vmatmul.mubr.f32.gmra.mxu0 %v3236
    %v3238 = vpop.f32.mrf.mxu0
    %v3239 = vadd.f32 %v3160, %v3238
    %v3240 = vpop.f32.mrf.mxu0
    %3241 = vmatprep.mubr.f32.mxu0 0.0
    %v3242 = vand.u32 %v2738, 4294901760
    %3243 = vmatmul.mubr.f32.gmra.mxu0 %v3242
    %v3244 = vpop.f32.mrf.mxu0
    %v3245 = vadd.f32 %v3166, %v3244
    %v3246 = vpop.f32.mrf.mxu0
    %3247 = vdwg.mxu0
    %v3249 = vsel %vm163, %v159, 0
    %v3252 = vsel %vm163, %v160, 0
    %v3255 = vsel %vm163, %v50, 0
    %v3258 = vsel %vm163, %v51, 0
    %3260 = vmatprep.subr.mxu0 0.0
    %3261 = vmatpush1.xpose.msra.mxu0 0.0
    %3262 = vmatprep.subr.mxu0 0.0
    %3263 = vmatpush1.xpose.msra.mxu0 0.0
    %3264 = vmatprep.subr.mxu0 0.0
    %3265 = vmatpush1.xpose.msra.mxu0 0.0
    %3266 = vmatprep.subr.mxu0 0.0
    %3267 = vmatpush1.xpose.msra.mxu0 0.0
    %3268 = vmatprep.subr.mxu0 0.0
    %3269 = vmatpush1.xpose.msra.mxu0 0.0
    %3270 = vmatprep.subr.mxu0 0.0
    %3271 = vmatpush1.xpose.msra.mxu0 0.0
    %3272 = vmatprep.subr.mxu0 0.0
    %3273 = vmatpush1.xpose.msra.mxu0 0.0
    %3274 = vmatprep.subr.mxu0 0.0
    %3275 = vmatpush1.xpose.msra.mxu0 0.0
    %3276 = vmatprep.subr.mxu0 0.0
    %3277 = vmatpush1.xpose.msra.mxu0 0.0
    %3278 = vmatprep.subr.mxu0 0.0
    %3279 = vmatpush1.xpose.msra.mxu0 0.0
    %3280 = vmatprep.subr.mxu0 0.0
    %3281 = vmatpush1.xpose.msra.mxu0 0.0
    %3282 = vmatprep.subr.mxu0 0.0
    %3283 = vmatpush1.xpose.msra.mxu0 0.0
    %3284 = vmatprep.subr.mxu0 0.0
    %3285 = vmatpush1.xpose.msra.mxu0 0.0
    %3286 = vmatprep.subr.mxu0 0.0
    %3287 = vmatpush1.xpose.msra.mxu0 0.0
    %3288 = vmatprep.subr.mxu0 0.0
    %v3289 = vand.u32 %v3258, 4294901760
    %3290 = vmatpush1.xpose.msra.mxu0 %v3289
    %3291 = vmatprep.subr.mxu0 0.0
    %v3292 = vand.u32 %v3255, 4294901760
    %3293 = vmatpush1.xpose.msra.mxu0 %v3292
    %3294 = vmatprep.subr.mxu0 0.0
    %3295 = vmatpush2.xpose.msra.mxu0 0.0
    %3296 = vmatprep.subr.mxu0 0.0
    %3297 = vmatpush2.xpose.msra.mxu0 0.0
    %3298 = vmatprep.subr.mxu0 0.0
    %3299 = vmatpush2.xpose.msra.mxu0 0.0
    %3300 = vmatprep.subr.mxu0 0.0
    %3301 = vmatpush2.xpose.msra.mxu0 0.0
    %3302 = vmatprep.subr.mxu0 0.0
    %3303 = vmatpush2.xpose.msra.mxu0 0.0
    %3304 = vmatprep.subr.mxu0 0.0
    %3305 = vmatpush2.xpose.msra.mxu0 0.0
    %3306 = vmatprep.subr.mxu0 0.0
    %3307 = vmatpush2.xpose.msra.mxu0 0.0
    %3308 = vmatprep.subr.mxu0 0.0
    %3309 = vmatpush2.xpose.msra.mxu0 0.0
    %3310 = vmatprep.subr.mxu0 0.0
    %3311 = vmatpush2.xpose.msra.mxu0 0.0
    %3312 = vmatprep.subr.mxu0 0.0
    %3313 = vmatpush2.xpose.msra.mxu0 0.0
    %3314 = vmatprep.subr.mxu0 0.0
    %3315 = vmatpush2.xpose.msra.mxu0 0.0
    %3316 = vmatprep.subr.mxu0 0.0
    %3317 = vmatpush2.xpose.msra.mxu0 0.0
    %3318 = vmatprep.subr.mxu0 0.0
    %3319 = vmatpush2.xpose.msra.mxu0 0.0
    %3320 = vmatprep.subr.mxu0 0.0
    %3321 = vmatpush2.xpose.msra.mxu0 0.0
    %3322 = vmatprep.subr.mxu0 0.0
    %3323 = vmatpush2.xpose.msra.mxu0 0.0
    %3324 = vmatprep.subr.mxu0 0.0
    %3325 = vmatpush2.xpose.msra.mxu0 0.0
    %3326 = vmatprep.mubr.f32.mxu0 0.0
    %v3327 = vand.u32 %v3249, 4294901760
    %v3328 = vsub.f32 %v3249, %v3327
    %v3329 = vand.u32 %v3328, 4294901760
    %v3330 = vsub.f32 %v3328, %v3329
    %v3331 = vand.u32 %v3330, 4294901760
    %3332 = vmatmul.mubr.f32.gmra.mxu0 %v3331
    %v3333 = vpop.f32.mrf.mxu0
    %v3334 = vadd.f32 0.0, %v3333
    %v3335 = vpop.f32.mrf.mxu0
    %3336 = vmatprep.mubr.f32.mxu0 0.0
    %v3337 = vand.u32 %v3252, 4294901760
    %v3338 = vsub.f32 %v3252, %v3337
    %v3339 = vand.u32 %v3338, 4294901760
    %v3340 = vsub.f32 %v3338, %v3339
    %v3341 = vand.u32 %v3340, 4294901760
    %3342 = vmatmul.mubr.f32.gmra.mxu0 %v3341
    %v3343 = vpop.f32.mrf.mxu0
    %v3344 = vadd.f32 0.0, %v3343
    %v3345 = vpop.f32.mrf.mxu0
    %3346 = vdwg.mxu0
    %3347 = vmatprep.subr.mxu0 0.0
    %3348 = vmatpush1.xpose.msra.mxu0 0.0
    %3349 = vmatprep.subr.mxu0 0.0
    %3350 = vmatpush1.xpose.msra.mxu0 0.0
    %3351 = vmatprep.subr.mxu0 0.0
    %3352 = vmatpush1.xpose.msra.mxu0 0.0
    %3353 = vmatprep.subr.mxu0 0.0
    %3354 = vmatpush1.xpose.msra.mxu0 0.0
    %3355 = vmatprep.subr.mxu0 0.0
    %3356 = vmatpush1.xpose.msra.mxu0 0.0
    %3357 = vmatprep.subr.mxu0 0.0
    %3358 = vmatpush1.xpose.msra.mxu0 0.0
    %3359 = vmatprep.subr.mxu0 0.0
    %3360 = vmatpush1.xpose.msra.mxu0 0.0
    %3361 = vmatprep.subr.mxu0 0.0
    %3362 = vmatpush1.xpose.msra.mxu0 0.0
    %3363 = vmatprep.subr.mxu0 0.0
    %3364 = vmatpush1.xpose.msra.mxu0 0.0
    %3365 = vmatprep.subr.mxu0 0.0
    %3366 = vmatpush1.xpose.msra.mxu0 0.0
    %3367 = vmatprep.subr.mxu0 0.0
    %3368 = vmatpush1.xpose.msra.mxu0 0.0
    %3369 = vmatprep.subr.mxu0 0.0
    %3370 = vmatpush1.xpose.msra.mxu0 0.0
    %3371 = vmatprep.subr.mxu0 0.0
    %3372 = vmatpush1.xpose.msra.mxu0 0.0
    %3373 = vmatprep.subr.mxu0 0.0
    %3374 = vmatpush1.xpose.msra.mxu0 0.0
    %3375 = vmatprep.subr.mxu0 0.0
    %v3376 = vand.u32 %v3258, 4294901760
    %v3377 = vsub.f32 %v3258, %v3376
    %v3378 = vand.u32 %v3377, 4294901760
    %v3379 = vsub.f32 %v3377, %v3378
    %v3380 = vand.u32 %v3379, 4294901760
    %3381 = vmatpush1.xpose.msra.mxu0 %v3380
    %3382 = vmatprep.subr.mxu0 0.0
    %v3383 = vand.u32 %v3255, 4294901760
    %v3384 = vsub.f32 %v3255, %v3383
    %v3385 = vand.u32 %v3384, 4294901760
    %v3386 = vsub.f32 %v3384, %v3385
    %v3387 = vand.u32 %v3386, 4294901760
    %3388 = vmatpush1.xpose.msra.mxu0 %v3387
    %3389 = vmatprep.subr.mxu0 0.0
    %3390 = vmatpush2.xpose.msra.mxu0 0.0
    %3391 = vmatprep.subr.mxu0 0.0
    %3392 = vmatpush2.xpose.msra.mxu0 0.0
    %3393 = vmatprep.subr.mxu0 0.0
    %3394 = vmatpush2.xpose.msra.mxu0 0.0
    %3395 = vmatprep.subr.mxu0 0.0
    %3396 = vmatpush2.xpose.msra.mxu0 0.0
    %3397 = vmatprep.subr.mxu0 0.0
    %3398 = vmatpush2.xpose.msra.mxu0 0.0
    %3399 = vmatprep.subr.mxu0 0.0
    %3400 = vmatpush2.xpose.msra.mxu0 0.0
    %3401 = vmatprep.subr.mxu0 0.0
    %3402 = vmatpush2.xpose.msra.mxu0 0.0
    %3403 = vmatprep.subr.mxu0 0.0
    %3404 = vmatpush2.xpose.msra.mxu0 0.0
    %3405 = vmatprep.subr.mxu0 0.0
    %3406 = vmatpush2.xpose.msra.mxu0 0.0
    %3407 = vmatprep.subr.mxu0 0.0
    %3408 = vmatpush2.xpose.msra.mxu0 0.0
    %3409 = vmatprep.subr.mxu0 0.0
    %3410 = vmatpush2.xpose.msra.mxu0 0.0
    %3411 = vmatprep.subr.mxu0 0.0
    %3412 = vmatpush2.xpose.msra.mxu0 0.0
    %3413 = vmatprep.subr.mxu0 0.0
    %3414 = vmatpush2.xpose.msra.mxu0 0.0
    %3415 = vmatprep.subr.mxu0 0.0
    %3416 = vmatpush2.xpose.msra.mxu0 0.0
    %3417 = vmatprep.subr.mxu0 0.0
    %3418 = vmatpush2.xpose.msra.mxu0 0.0
    %3419 = vmatprep.subr.mxu0 0.0
    %3420 = vmatpush2.xpose.msra.mxu0 0.0
    %3421 = vmatprep.mubr.f32.mxu0 0.0
    %v3422 = vand.u32 %v3249, 4294901760
    %3423 = vmatmul.mubr.f32.gmra.mxu0 %v3422
    %v3424 = vpop.f32.mrf.mxu0
    %v3425 = vadd.f32 %v3334, %v3424
    %v3426 = vpop.f32.mrf.mxu0
    %3427 = vmatprep.mubr.f32.mxu0 0.0
    %v3428 = vand.u32 %v3252, 4294901760
    %3429 = vmatmul.mubr.f32.gmra.mxu0 %v3428
    %v3430 = vpop.f32.mrf.mxu0
    %v3431 = vadd.f32 %v3344, %v3430
    %v3432 = vpop.f32.mrf.mxu0
    %3433 = vdwg.mxu0
    %3434 = vmatprep.subr.mxu0 0.0
    %3435 = vmatpush1.xpose.msra.mxu0 0.0
    %3436 = vmatprep.subr.mxu0 0.0
    %3437 = vmatpush1.xpose.msra.mxu0 0.0
    %3438 = vmatprep.subr.mxu0 0.0
    %3439 = vmatpush1.xpose.msra.mxu0 0.0
    %3440 = vmatprep.subr.mxu0 0.0
    %3441 = vmatpush1.xpose.msra.mxu0 0.0
    %3442 = vmatprep.subr.mxu0 0.0
    %3443 = vmatpush1.xpose.msra.mxu0 0.0
    %3444 = vmatprep.subr.mxu0 0.0
    %3445 = vmatpush1.xpose.msra.mxu0 0.0
    %3446 = vmatprep.subr.mxu0 0.0
    %3447 = vmatpush1.xpose.msra.mxu0 0.0
    %3448 = vmatprep.subr.mxu0 0.0
    %3449 = vmatpush1.xpose.msra.mxu0 0.0
    %3450 = vmatprep.subr.mxu0 0.0
    %3451 = vmatpush1.xpose.msra.mxu0 0.0
    %3452 = vmatprep.subr.mxu0 0.0
    %3453 = vmatpush1.xpose.msra.mxu0 0.0
    %3454 = vmatprep.subr.mxu0 0.0
    %3455 = vmatpush1.xpose.msra.mxu0 0.0
    %3456 = vmatprep.subr.mxu0 0.0
    %3457 = vmatpush1.xpose.msra.mxu0 0.0
    %3458 = vmatprep.subr.mxu0 0.0
    %3459 = vmatpush1.xpose.msra.mxu0 0.0
    %3460 = vmatprep.subr.mxu0 0.0
    %3461 = vmatpush1.xpose.msra.mxu0 0.0
    %3462 = vmatprep.subr.mxu0 0.0
    %v3463 = vand.u32 %v3258, 4294901760
    %v3464 = vsub.f32 %v3258, %v3463
    %3465 = vmatpush1.xpose.msra.mxu0 %v3464
    %3466 = vmatprep.subr.mxu0 0.0
    %v3467 = vand.u32 %v3255, 4294901760
    %v3468 = vsub.f32 %v3255, %v3467
    %3469 = vmatpush1.xpose.msra.mxu0 %v3468
    %3470 = vmatprep.subr.mxu0 0.0
    %3471 = vmatpush2.xpose.msra.mxu0 0.0
    %3472 = vmatprep.subr.mxu0 0.0
    %3473 = vmatpush2.xpose.msra.mxu0 0.0
    %3474 = vmatprep.subr.mxu0 0.0
    %3475 = vmatpush2.xpose.msra.mxu0 0.0
    %3476 = vmatprep.subr.mxu0 0.0
    %3477 = vmatpush2.xpose.msra.mxu0 0.0
    %3478 = vmatprep.subr.mxu0 0.0
    %3479 = vmatpush2.xpose.msra.mxu0 0.0
    %3480 = vmatprep.subr.mxu0 0.0
    %3481 = vmatpush2.xpose.msra.mxu0 0.0
    %3482 = vmatprep.subr.mxu0 0.0
    %3483 = vmatpush2.xpose.msra.mxu0 0.0
    %3484 = vmatprep.subr.mxu0 0.0
    %3485 = vmatpush2.xpose.msra.mxu0 0.0
    %3486 = vmatprep.subr.mxu0 0.0
    %3487 = vmatpush2.xpose.msra.mxu0 0.0
    %3488 = vmatprep.subr.mxu0 0.0
    %3489 = vmatpush2.xpose.msra.mxu0 0.0
    %3490 = vmatprep.subr.mxu0 0.0
    %3491 = vmatpush2.xpose.msra.mxu0 0.0
    %3492 = vmatprep.subr.mxu0 0.0
    %3493 = vmatpush2.xpose.msra.mxu0 0.0
    %3494 = vmatprep.subr.mxu0 0.0
    %3495 = vmatpush2.xpose.msra.mxu0 0.0
    %3496 = vmatprep.subr.mxu0 0.0
    %3497 = vmatpush2.xpose.msra.mxu0 0.0
    %3498 = vmatprep.subr.mxu0 0.0
    %3499 = vmatpush2.xpose.msra.mxu0 0.0
    %3500 = vmatprep.subr.mxu0 0.0
    %3501 = vmatpush2.xpose.msra.mxu0 0.0
    %3502 = vmatprep.mubr.f32.mxu0 0.0
    %v3503 = vand.u32 %v3249, 4294901760
    %v3504 = vsub.f32 %v3249, %v3503
    %3505 = vmatmul.mubr.f32.gmra.mxu0 %v3504
    %v3506 = vpop.f32.mrf.mxu0
    %v3507 = vadd.f32 %v3425, %v3506
    %v3508 = vpop.f32.mrf.mxu0
    %3509 = vmatprep.mubr.f32.mxu0 0.0
    %v3510 = vand.u32 %v3252, 4294901760
    %v3511 = vsub.f32 %v3252, %v3510
    %3512 = vmatmul.mubr.f32.gmra.mxu0 %v3511
    %v3513 = vpop.f32.mrf.mxu0
    %v3514 = vadd.f32 %v3431, %v3513
    %v3515 = vpop.f32.mrf.mxu0
    %3516 = vdwg.mxu0
    %3517 = vmatprep.subr.mxu0 0.0
    %3518 = vmatpush1.xpose.msra.mxu0 0.0
    %3519 = vmatprep.subr.mxu0 0.0
    %3520 = vmatpush1.xpose.msra.mxu0 0.0
    %3521 = vmatprep.subr.mxu0 0.0
    %3522 = vmatpush1.xpose.msra.mxu0 0.0
    %3523 = vmatprep.subr.mxu0 0.0
    %3524 = vmatpush1.xpose.msra.mxu0 0.0
    %3525 = vmatprep.subr.mxu0 0.0
    %3526 = vmatpush1.xpose.msra.mxu0 0.0
    %3527 = vmatprep.subr.mxu0 0.0
    %3528 = vmatpush1.xpose.msra.mxu0 0.0
    %3529 = vmatprep.subr.mxu0 0.0
    %3530 = vmatpush1.xpose.msra.mxu0 0.0
    %3531 = vmatprep.subr.mxu0 0.0
    %3532 = vmatpush1.xpose.msra.mxu0 0.0
    %3533 = vmatprep.subr.mxu0 0.0
    %3534 = vmatpush1.xpose.msra.mxu0 0.0
    %3535 = vmatprep.subr.mxu0 0.0
    %3536 = vmatpush1.xpose.msra.mxu0 0.0
    %3537 = vmatprep.subr.mxu0 0.0
    %3538 = vmatpush1.xpose.msra.mxu0 0.0
    %3539 = vmatprep.subr.mxu0 0.0
    %3540 = vmatpush1.xpose.msra.mxu0 0.0
    %3541 = vmatprep.subr.mxu0 0.0
    %3542 = vmatpush1.xpose.msra.mxu0 0.0
    %3543 = vmatprep.subr.mxu0 0.0
    %3544 = vmatpush1.xpose.msra.mxu0 0.0
    %3545 = vmatprep.subr.mxu0 0.0
    %v3546 = vand.u32 %v3258, 4294901760
    %3547 = vmatpush1.xpose.msra.mxu0 %v3546
    %3548 = vmatprep.subr.mxu0 0.0
    %v3549 = vand.u32 %v3255, 4294901760
    %3550 = vmatpush1.xpose.msra.mxu0 %v3549
    %3551 = vmatprep.subr.mxu0 0.0
    %3552 = vmatpush2.xpose.msra.mxu0 0.0
    %3553 = vmatprep.subr.mxu0 0.0
    %3554 = vmatpush2.xpose.msra.mxu0 0.0
    %3555 = vmatprep.subr.mxu0 0.0
    %3556 = vmatpush2.xpose.msra.mxu0 0.0
    %3557 = vmatprep.subr.mxu0 0.0
    %3558 = vmatpush2.xpose.msra.mxu0 0.0
    %3559 = vmatprep.subr.mxu0 0.0
    %3560 = vmatpush2.xpose.msra.mxu0 0.0
    %3561 = vmatprep.subr.mxu0 0.0
    %3562 = vmatpush2.xpose.msra.mxu0 0.0
    %3563 = vmatprep.subr.mxu0 0.0
    %3564 = vmatpush2.xpose.msra.mxu0 0.0
    %3565 = vmatprep.subr.mxu0 0.0
    %3566 = vmatpush2.xpose.msra.mxu0 0.0
    %3567 = vmatprep.subr.mxu0 0.0
    %3568 = vmatpush2.xpose.msra.mxu0 0.0
    %3569 = vmatprep.subr.mxu0 0.0
    %3570 = vmatpush2.xpose.msra.mxu0 0.0
    %3571 = vmatprep.subr.mxu0 0.0
    %3572 = vmatpush2.xpose.msra.mxu0 0.0
    %3573 = vmatprep.subr.mxu0 0.0
    %3574 = vmatpush2.xpose.msra.mxu0 0.0
    %3575 = vmatprep.subr.mxu0 0.0
    %3576 = vmatpush2.xpose.msra.mxu0 0.0
    %3577 = vmatprep.subr.mxu0 0.0
    %3578 = vmatpush2.xpose.msra.mxu0 0.0
    %3579 = vmatprep.subr.mxu0 0.0
    %3580 = vmatpush2.xpose.msra.mxu0 0.0
    %3581 = vmatprep.subr.mxu0 0.0
    %3582 = vmatpush2.xpose.msra.mxu0 0.0
    %3583 = vmatprep.mubr.f32.mxu0 0.0
    %v3584 = vand.u32 %v3249, 4294901760
    %v3585 = vsub.f32 %v3249, %v3584
    %v3586 = vand.u32 %v3585, 4294901760
    %3587 = vmatmul.mubr.f32.gmra.mxu0 %v3586
    %v3588 = vpop.f32.mrf.mxu0
    %v3589 = vadd.f32 %v3507, %v3588
    %v3590 = vpop.f32.mrf.mxu0
    %3591 = vmatprep.mubr.f32.mxu0 0.0
    %v3592 = vand.u32 %v3252, 4294901760
    %v3593 = vsub.f32 %v3252, %v3592
    %v3594 = vand.u32 %v3593, 4294901760
    %3595 = vmatmul.mubr.f32.gmra.mxu0 %v3594
    %v3596 = vpop.f32.mrf.mxu0
    %v3597 = vadd.f32 %v3514, %v3596
    %v3598 = vpop.f32.mrf.mxu0
    %3599 = vdwg.mxu0
    %3600 = vmatprep.subr.mxu0 0.0
    %3601 = vmatpush1.xpose.msra.mxu0 0.0
    %3602 = vmatprep.subr.mxu0 0.0
    %3603 = vmatpush1.xpose.msra.mxu0 0.0
    %3604 = vmatprep.subr.mxu0 0.0
    %3605 = vmatpush1.xpose.msra.mxu0 0.0
    %3606 = vmatprep.subr.mxu0 0.0
    %3607 = vmatpush1.xpose.msra.mxu0 0.0
    %3608 = vmatprep.subr.mxu0 0.0
    %3609 = vmatpush1.xpose.msra.mxu0 0.0
    %3610 = vmatprep.subr.mxu0 0.0
    %3611 = vmatpush1.xpose.msra.mxu0 0.0
    %3612 = vmatprep.subr.mxu0 0.0
    %3613 = vmatpush1.xpose.msra.mxu0 0.0
    %3614 = vmatprep.subr.mxu0 0.0
    %3615 = vmatpush1.xpose.msra.mxu0 0.0
    %3616 = vmatprep.subr.mxu0 0.0
    %3617 = vmatpush1.xpose.msra.mxu0 0.0
    %3618 = vmatprep.subr.mxu0 0.0
    %3619 = vmatpush1.xpose.msra.mxu0 0.0
    %3620 = vmatprep.subr.mxu0 0.0
    %3621 = vmatpush1.xpose.msra.mxu0 0.0
    %3622 = vmatprep.subr.mxu0 0.0
    %3623 = vmatpush1.xpose.msra.mxu0 0.0
    %3624 = vmatprep.subr.mxu0 0.0
    %3625 = vmatpush1.xpose.msra.mxu0 0.0
    %3626 = vmatprep.subr.mxu0 0.0
    %3627 = vmatpush1.xpose.msra.mxu0 0.0
    %3628 = vmatprep.subr.mxu0 0.0
    %v3629 = vand.u32 %v3258, 4294901760
    %v3630 = vsub.f32 %v3258, %v3629
    %v3631 = vand.u32 %v3630, 4294901760
    %3632 = vmatpush1.xpose.msra.mxu0 %v3631
    %3633 = vmatprep.subr.mxu0 0.0
    %v3634 = vand.u32 %v3255, 4294901760
    %v3635 = vsub.f32 %v3255, %v3634
    %v3636 = vand.u32 %v3635, 4294901760
    %3637 = vmatpush1.xpose.msra.mxu0 %v3636
    %3638 = vmatprep.subr.mxu0 0.0
    %3639 = vmatpush2.xpose.msra.mxu0 0.0
    %3640 = vmatprep.subr.mxu0 0.0
    %3641 = vmatpush2.xpose.msra.mxu0 0.0
    %3642 = vmatprep.subr.mxu0 0.0
    %3643 = vmatpush2.xpose.msra.mxu0 0.0
    %3644 = vmatprep.subr.mxu0 0.0
    %3645 = vmatpush2.xpose.msra.mxu0 0.0
    %3646 = vmatprep.subr.mxu0 0.0
    %3647 = vmatpush2.xpose.msra.mxu0 0.0
    %3648 = vmatprep.subr.mxu0 0.0
    %3649 = vmatpush2.xpose.msra.mxu0 0.0
    %3650 = vmatprep.subr.mxu0 0.0
    %3651 = vmatpush2.xpose.msra.mxu0 0.0
    %3652 = vmatprep.subr.mxu0 0.0
    %3653 = vmatpush2.xpose.msra.mxu0 0.0
    %3654 = vmatprep.subr.mxu0 0.0
    %3655 = vmatpush2.xpose.msra.mxu0 0.0
    %3656 = vmatprep.subr.mxu0 0.0
    %3657 = vmatpush2.xpose.msra.mxu0 0.0
    %3658 = vmatprep.subr.mxu0 0.0
    %3659 = vmatpush2.xpose.msra.mxu0 0.0
    %3660 = vmatprep.subr.mxu0 0.0
    %3661 = vmatpush2.xpose.msra.mxu0 0.0
    %3662 = vmatprep.subr.mxu0 0.0
    %3663 = vmatpush2.xpose.msra.mxu0 0.0
    %3664 = vmatprep.subr.mxu0 0.0
    %3665 = vmatpush2.xpose.msra.mxu0 0.0
    %3666 = vmatprep.subr.mxu0 0.0
    %3667 = vmatpush2.xpose.msra.mxu0 0.0
    %3668 = vmatprep.subr.mxu0 0.0
    %3669 = vmatpush2.xpose.msra.mxu0 0.0
    %3670 = vmatprep.mubr.f32.mxu0 0.0
    %v3671 = vand.u32 %v3249, 4294901760
    %3672 = vmatmul.mubr.f32.gmra.mxu0 %v3671
    %v3673 = vpop.f32.mrf.mxu0
    %v3674 = vadd.f32 %v3589, %v3673
    %v3675 = vpop.f32.mrf.mxu0
    %3676 = vmatprep.mubr.f32.mxu0 0.0
    %v3677 = vand.u32 %v3252, 4294901760
    %3678 = vmatmul.mubr.f32.gmra.mxu0 %v3677
    %v3679 = vpop.f32.mrf.mxu0
    %v3680 = vadd.f32 %v3597, %v3679
    %v3681 = vpop.f32.mrf.mxu0
    %3682 = vdwg.mxu0
    %3683 = vmatprep.subr.mxu0 0.0
    %3684 = vmatpush1.xpose.msra.mxu0 0.0
    %3685 = vmatprep.subr.mxu0 0.0
    %3686 = vmatpush1.xpose.msra.mxu0 0.0
    %3687 = vmatprep.subr.mxu0 0.0
    %3688 = vmatpush1.xpose.msra.mxu0 0.0
    %3689 = vmatprep.subr.mxu0 0.0
    %3690 = vmatpush1.xpose.msra.mxu0 0.0
    %3691 = vmatprep.subr.mxu0 0.0
    %3692 = vmatpush1.xpose.msra.mxu0 0.0
    %3693 = vmatprep.subr.mxu0 0.0
    %3694 = vmatpush1.xpose.msra.mxu0 0.0
    %3695 = vmatprep.subr.mxu0 0.0
    %3696 = vmatpush1.xpose.msra.mxu0 0.0
    %3697 = vmatprep.subr.mxu0 0.0
    %3698 = vmatpush1.xpose.msra.mxu0 0.0
    %3699 = vmatprep.subr.mxu0 0.0
    %3700 = vmatpush1.xpose.msra.mxu0 0.0
    %3701 = vmatprep.subr.mxu0 0.0
    %3702 = vmatpush1.xpose.msra.mxu0 0.0
    %3703 = vmatprep.subr.mxu0 0.0
    %3704 = vmatpush1.xpose.msra.mxu0 0.0
    %3705 = vmatprep.subr.mxu0 0.0
    %3706 = vmatpush1.xpose.msra.mxu0 0.0
    %3707 = vmatprep.subr.mxu0 0.0
    %3708 = vmatpush1.xpose.msra.mxu0 0.0
    %3709 = vmatprep.subr.mxu0 0.0
    %3710 = vmatpush1.xpose.msra.mxu0 0.0
    %3711 = vmatprep.subr.mxu0 0.0
    %v3712 = vand.u32 %v3258, 4294901760
    %3713 = vmatpush1.xpose.msra.mxu0 %v3712
    %3714 = vmatprep.subr.mxu0 0.0
    %v3715 = vand.u32 %v3255, 4294901760
    %3716 = vmatpush1.xpose.msra.mxu0 %v3715
    %3717 = vmatprep.subr.mxu0 0.0
    %3718 = vmatpush2.xpose.msra.mxu0 0.0
    %3719 = vmatprep.subr.mxu0 0.0
    %3720 = vmatpush2.xpose.msra.mxu0 0.0
    %3721 = vmatprep.subr.mxu0 0.0
    %3722 = vmatpush2.xpose.msra.mxu0 0.0
    %3723 = vmatprep.subr.mxu0 0.0
    %3724 = vmatpush2.xpose.msra.mxu0 0.0
    %3725 = vmatprep.subr.mxu0 0.0
    %3726 = vmatpush2.xpose.msra.mxu0 0.0
    %3727 = vmatprep.subr.mxu0 0.0
    %3728 = vmatpush2.xpose.msra.mxu0 0.0
    %3729 = vmatprep.subr.mxu0 0.0
    %3730 = vmatpush2.xpose.msra.mxu0 0.0
    %3731 = vmatprep.subr.mxu0 0.0
    %3732 = vmatpush2.xpose.msra.mxu0 0.0
    %3733 = vmatprep.subr.mxu0 0.0
    %3734 = vmatpush2.xpose.msra.mxu0 0.0
    %3735 = vmatprep.subr.mxu0 0.0
    %3736 = vmatpush2.xpose.msra.mxu0 0.0
    %3737 = vmatprep.subr.mxu0 0.0
    %3738 = vmatpush2.xpose.msra.mxu0 0.0
    %3739 = vmatprep.subr.mxu0 0.0
    %3740 = vmatpush2.xpose.msra.mxu0 0.0
    %3741 = vmatprep.subr.mxu0 0.0
    %3742 = vmatpush2.xpose.msra.mxu0 0.0
    %3743 = vmatprep.subr.mxu0 0.0
    %3744 = vmatpush2.xpose.msra.mxu0 0.0
    %3745 = vmatprep.subr.mxu0 0.0
    %3746 = vmatpush2.xpose.msra.mxu0 0.0
    %3747 = vmatprep.subr.mxu0 0.0
    %3748 = vmatpush2.xpose.msra.mxu0 0.0
    %3749 = vmatprep.mubr.f32.mxu0 0.0
    %v3750 = vand.u32 %v3249, 4294901760
    %3751 = vmatmul.mubr.f32.gmra.mxu0 %v3750
    %v3752 = vpop.f32.mrf.mxu0
    %v3753 = vadd.f32 %v3674, %v3752
    %v3754 = vpop.f32.mrf.mxu0
    %3755 = vmatprep.mubr.f32.mxu0 0.0
    %v3756 = vand.u32 %v3252, 4294901760
    %3757 = vmatmul.mubr.f32.gmra.mxu0 %v3756
    %v3758 = vpop.f32.mrf.mxu0
    %v3759 = vadd.f32 %v3680, %v3758
    %v3760 = vpop.f32.mrf.mxu0
    %3761 = vdwg.mxu0
    %v3763 = vsel %vm163, %v161, 0
    %v3766 = vsel %vm163, %v162, 0
    %v3769 = vsel %vm163, %v52, 0
    %v3772 = vsel %vm163, %v53, 0
    %3774 = vmatprep.subr.mxu0 0.0
    %3775 = vmatpush1.xpose.msra.mxu0 0.0
    %3776 = vmatprep.subr.mxu0 0.0
    %3777 = vmatpush1.xpose.msra.mxu0 0.0
    %3778 = vmatprep.subr.mxu0 0.0
    %3779 = vmatpush1.xpose.msra.mxu0 0.0
    %3780 = vmatprep.subr.mxu0 0.0
    %3781 = vmatpush1.xpose.msra.mxu0 0.0
    %3782 = vmatprep.subr.mxu0 0.0
    %3783 = vmatpush1.xpose.msra.mxu0 0.0
    %3784 = vmatprep.subr.mxu0 0.0
    %3785 = vmatpush1.xpose.msra.mxu0 0.0
    %3786 = vmatprep.subr.mxu0 0.0
    %3787 = vmatpush1.xpose.msra.mxu0 0.0
    %3788 = vmatprep.subr.mxu0 0.0
    %3789 = vmatpush1.xpose.msra.mxu0 0.0
    %3790 = vmatprep.subr.mxu0 0.0
    %3791 = vmatpush1.xpose.msra.mxu0 0.0
    %3792 = vmatprep.subr.mxu0 0.0
    %3793 = vmatpush1.xpose.msra.mxu0 0.0
    %3794 = vmatprep.subr.mxu0 0.0
    %3795 = vmatpush1.xpose.msra.mxu0 0.0
    %3796 = vmatprep.subr.mxu0 0.0
    %3797 = vmatpush1.xpose.msra.mxu0 0.0
    %3798 = vmatprep.subr.mxu0 0.0
    %3799 = vmatpush1.xpose.msra.mxu0 0.0
    %3800 = vmatprep.subr.mxu0 0.0
    %3801 = vmatpush1.xpose.msra.mxu0 0.0
    %3802 = vmatprep.subr.mxu0 0.0
    %v3803 = vand.u32 %v3772, 4294901760
    %3804 = vmatpush1.xpose.msra.mxu0 %v3803
    %3805 = vmatprep.subr.mxu0 0.0
    %v3806 = vand.u32 %v3769, 4294901760
    %3807 = vmatpush1.xpose.msra.mxu0 %v3806
    %3808 = vmatprep.subr.mxu0 0.0
    %3809 = vmatpush2.xpose.msra.mxu0 0.0
    %3810 = vmatprep.subr.mxu0 0.0
    %3811 = vmatpush2.xpose.msra.mxu0 0.0
    %3812 = vmatprep.subr.mxu0 0.0
    %3813 = vmatpush2.xpose.msra.mxu0 0.0
    %3814 = vmatprep.subr.mxu0 0.0
    %3815 = vmatpush2.xpose.msra.mxu0 0.0
    %3816 = vmatprep.subr.mxu0 0.0
    %3817 = vmatpush2.xpose.msra.mxu0 0.0
    %3818 = vmatprep.subr.mxu0 0.0
    %3819 = vmatpush2.xpose.msra.mxu0 0.0
    %3820 = vmatprep.subr.mxu0 0.0
    %3821 = vmatpush2.xpose.msra.mxu0 0.0
    %3822 = vmatprep.subr.mxu0 0.0
    %3823 = vmatpush2.xpose.msra.mxu0 0.0
    %3824 = vmatprep.subr.mxu0 0.0
    %3825 = vmatpush2.xpose.msra.mxu0 0.0
    %3826 = vmatprep.subr.mxu0 0.0
    %3827 = vmatpush2.xpose.msra.mxu0 0.0
    %3828 = vmatprep.subr.mxu0 0.0
    %3829 = vmatpush2.xpose.msra.mxu0 0.0
    %3830 = vmatprep.subr.mxu0 0.0
    %3831 = vmatpush2.xpose.msra.mxu0 0.0
    %3832 = vmatprep.subr.mxu0 0.0
    %3833 = vmatpush2.xpose.msra.mxu0 0.0
    %3834 = vmatprep.subr.mxu0 0.0
    %3835 = vmatpush2.xpose.msra.mxu0 0.0
    %3836 = vmatprep.subr.mxu0 0.0
    %3837 = vmatpush2.xpose.msra.mxu0 0.0
    %3838 = vmatprep.subr.mxu0 0.0
    %3839 = vmatpush2.xpose.msra.mxu0 0.0
    %3840 = vmatprep.mubr.f32.mxu0 0.0
    %v3841 = vand.u32 %v3763, 4294901760
    %v3842 = vsub.f32 %v3763, %v3841
    %v3843 = vand.u32 %v3842, 4294901760
    %v3844 = vsub.f32 %v3842, %v3843
    %v3845 = vand.u32 %v3844, 4294901760
    %3846 = vmatmul.mubr.f32.gmra.mxu0 %v3845
    %v3847 = vpop.f32.mrf.mxu0
    %v3848 = vadd.f32 0.0, %v3847
    %v3849 = vpop.f32.mrf.mxu0
    %3850 = vmatprep.mubr.f32.mxu0 0.0
    %v3851 = vand.u32 %v3766, 4294901760
    %v3852 = vsub.f32 %v3766, %v3851
    %v3853 = vand.u32 %v3852, 4294901760
    %v3854 = vsub.f32 %v3852, %v3853
    %v3855 = vand.u32 %v3854, 4294901760
    %3856 = vmatmul.mubr.f32.gmra.mxu0 %v3855
    %v3857 = vpop.f32.mrf.mxu0
    %v3858 = vadd.f32 0.0, %v3857
    %v3859 = vpop.f32.mrf.mxu0
    %3860 = vdwg.mxu0
    %3861 = vmatprep.subr.mxu0 0.0
    %3862 = vmatpush1.xpose.msra.mxu0 0.0
    %3863 = vmatprep.subr.mxu0 0.0
    %3864 = vmatpush1.xpose.msra.mxu0 0.0
    %3865 = vmatprep.subr.mxu0 0.0
    %3866 = vmatpush1.xpose.msra.mxu0 0.0
    %3867 = vmatprep.subr.mxu0 0.0
    %3868 = vmatpush1.xpose.msra.mxu0 0.0
    %3869 = vmatprep.subr.mxu0 0.0
    %3870 = vmatpush1.xpose.msra.mxu0 0.0
    %3871 = vmatprep.subr.mxu0 0.0
    %3872 = vmatpush1.xpose.msra.mxu0 0.0
    %3873 = vmatprep.subr.mxu0 0.0
    %3874 = vmatpush1.xpose.msra.mxu0 0.0
    %3875 = vmatprep.subr.mxu0 0.0
    %3876 = vmatpush1.xpose.msra.mxu0 0.0
    %3877 = vmatprep.subr.mxu0 0.0
    %3878 = vmatpush1.xpose.msra.mxu0 0.0
    %3879 = vmatprep.subr.mxu0 0.0
    %3880 = vmatpush1.xpose.msra.mxu0 0.0
    %3881 = vmatprep.subr.mxu0 0.0
    %3882 = vmatpush1.xpose.msra.mxu0 0.0
    %3883 = vmatprep.subr.mxu0 0.0
    %3884 = vmatpush1.xpose.msra.mxu0 0.0
    %3885 = vmatprep.subr.mxu0 0.0
    %3886 = vmatpush1.xpose.msra.mxu0 0.0
    %3887 = vmatprep.subr.mxu0 0.0
    %3888 = vmatpush1.xpose.msra.mxu0 0.0
    %3889 = vmatprep.subr.mxu0 0.0
    %v3890 = vand.u32 %v3772, 4294901760
    %v3891 = vsub.f32 %v3772, %v3890
    %v3892 = vand.u32 %v3891, 4294901760
    %v3893 = vsub.f32 %v3891, %v3892
    %v3894 = vand.u32 %v3893, 4294901760
    %3895 = vmatpush1.xpose.msra.mxu0 %v3894
    %3896 = vmatprep.subr.mxu0 0.0
    %v3897 = vand.u32 %v3769, 4294901760
    %v3898 = vsub.f32 %v3769, %v3897
    %v3899 = vand.u32 %v3898, 4294901760
    %v3900 = vsub.f32 %v3898, %v3899
    %v3901 = vand.u32 %v3900, 4294901760
    %3902 = vmatpush1.xpose.msra.mxu0 %v3901
    %3903 = vmatprep.subr.mxu0 0.0
    %3904 = vmatpush2.xpose.msra.mxu0 0.0
    %3905 = vmatprep.subr.mxu0 0.0
    %3906 = vmatpush2.xpose.msra.mxu0 0.0
    %3907 = vmatprep.subr.mxu0 0.0
    %3908 = vmatpush2.xpose.msra.mxu0 0.0
    %3909 = vmatprep.subr.mxu0 0.0
    %3910 = vmatpush2.xpose.msra.mxu0 0.0
    %3911 = vmatprep.subr.mxu0 0.0
    %3912 = vmatpush2.xpose.msra.mxu0 0.0
    %3913 = vmatprep.subr.mxu0 0.0
    %3914 = vmatpush2.xpose.msra.mxu0 0.0
    %3915 = vmatprep.subr.mxu0 0.0
    %3916 = vmatpush2.xpose.msra.mxu0 0.0
    %3917 = vmatprep.subr.mxu0 0.0
    %3918 = vmatpush2.xpose.msra.mxu0 0.0
    %3919 = vmatprep.subr.mxu0 0.0
    %3920 = vmatpush2.xpose.msra.mxu0 0.0
    %3921 = vmatprep.subr.mxu0 0.0
    %3922 = vmatpush2.xpose.msra.mxu0 0.0
    %3923 = vmatprep.subr.mxu0 0.0
    %3924 = vmatpush2.xpose.msra.mxu0 0.0
    %3925 = vmatprep.subr.mxu0 0.0
    %3926 = vmatpush2.xpose.msra.mxu0 0.0
    %3927 = vmatprep.subr.mxu0 0.0
    %3928 = vmatpush2.xpose.msra.mxu0 0.0
    %3929 = vmatprep.subr.mxu0 0.0
    %3930 = vmatpush2.xpose.msra.mxu0 0.0
    %3931 = vmatprep.subr.mxu0 0.0
    %3932 = vmatpush2.xpose.msra.mxu0 0.0
    %3933 = vmatprep.subr.mxu0 0.0
    %3934 = vmatpush2.xpose.msra.mxu0 0.0
    %3935 = vmatprep.mubr.f32.mxu0 0.0
    %v3936 = vand.u32 %v3763, 4294901760
    %3937 = vmatmul.mubr.f32.gmra.mxu0 %v3936
    %v3938 = vpop.f32.mrf.mxu0
    %v3939 = vadd.f32 %v3848, %v3938
    %v3940 = vpop.f32.mrf.mxu0
    %3941 = vmatprep.mubr.f32.mxu0 0.0
    %v3942 = vand.u32 %v3766, 4294901760
    %3943 = vmatmul.mubr.f32.gmra.mxu0 %v3942
    %v3944 = vpop.f32.mrf.mxu0
    %v3945 = vadd.f32 %v3858, %v3944
    %v3946 = vpop.f32.mrf.mxu0
    %3947 = vdwg.mxu0
    %3948 = vmatprep.subr.mxu0 0.0
    %3949 = vmatpush1.xpose.msra.mxu0 0.0
    %3950 = vmatprep.subr.mxu0 0.0
    %3951 = vmatpush1.xpose.msra.mxu0 0.0
    %3952 = vmatprep.subr.mxu0 0.0
    %3953 = vmatpush1.xpose.msra.mxu0 0.0
    %3954 = vmatprep.subr.mxu0 0.0
    %3955 = vmatpush1.xpose.msra.mxu0 0.0
    %3956 = vmatprep.subr.mxu0 0.0
    %3957 = vmatpush1.xpose.msra.mxu0 0.0
    %3958 = vmatprep.subr.mxu0 0.0
    %3959 = vmatpush1.xpose.msra.mxu0 0.0
    %3960 = vmatprep.subr.mxu0 0.0
    %3961 = vmatpush1.xpose.msra.mxu0 0.0
    %3962 = vmatprep.subr.mxu0 0.0
    %3963 = vmatpush1.xpose.msra.mxu0 0.0
    %3964 = vmatprep.subr.mxu0 0.0
    %3965 = vmatpush1.xpose.msra.mxu0 0.0
    %3966 = vmatprep.subr.mxu0 0.0
    %3967 = vmatpush1.xpose.msra.mxu0 0.0
    %3968 = vmatprep.subr.mxu0 0.0
    %3969 = vmatpush1.xpose.msra.mxu0 0.0
    %3970 = vmatprep.subr.mxu0 0.0
    %3971 = vmatpush1.xpose.msra.mxu0 0.0
    %3972 = vmatprep.subr.mxu0 0.0
    %3973 = vmatpush1.xpose.msra.mxu0 0.0
    %3974 = vmatprep.subr.mxu0 0.0
    %3975 = vmatpush1.xpose.msra.mxu0 0.0
    %3976 = vmatprep.subr.mxu0 0.0
    %v3977 = vand.u32 %v3772, 4294901760
    %v3978 = vsub.f32 %v3772, %v3977
    %3979 = vmatpush1.xpose.msra.mxu0 %v3978
    %3980 = vmatprep.subr.mxu0 0.0
    %v3981 = vand.u32 %v3769, 4294901760
    %v3982 = vsub.f32 %v3769, %v3981
    %3983 = vmatpush1.xpose.msra.mxu0 %v3982
    %3984 = vmatprep.subr.mxu0 0.0
    %3985 = vmatpush2.xpose.msra.mxu0 0.0
    %3986 = vmatprep.subr.mxu0 0.0
    %3987 = vmatpush2.xpose.msra.mxu0 0.0
    %3988 = vmatprep.subr.mxu0 0.0
    %3989 = vmatpush2.xpose.msra.mxu0 0.0
    %3990 = vmatprep.subr.mxu0 0.0
    %3991 = vmatpush2.xpose.msra.mxu0 0.0
    %3992 = vmatprep.subr.mxu0 0.0
    %3993 = vmatpush2.xpose.msra.mxu0 0.0
    %3994 = vmatprep.subr.mxu0 0.0
    %3995 = vmatpush2.xpose.msra.mxu0 0.0
    %3996 = vmatprep.subr.mxu0 0.0
    %3997 = vmatpush2.xpose.msra.mxu0 0.0
    %3998 = vmatprep.subr.mxu0 0.0
    %3999 = vmatpush2.xpose.msra.mxu0 0.0
    %4000 = vmatprep.subr.mxu0 0.0
    %4001 = vmatpush2.xpose.msra.mxu0 0.0
    %4002 = vmatprep.subr.mxu0 0.0
    %4003 = vmatpush2.xpose.msra.mxu0 0.0
    %4004 = vmatprep.subr.mxu0 0.0
    %4005 = vmatpush2.xpose.msra.mxu0 0.0
    %4006 = vmatprep.subr.mxu0 0.0
    %4007 = vmatpush2.xpose.msra.mxu0 0.0
    %4008 = vmatprep.subr.mxu0 0.0
    %4009 = vmatpush2.xpose.msra.mxu0 0.0
    %4010 = vmatprep.subr.mxu0 0.0
    %4011 = vmatpush2.xpose.msra.mxu0 0.0
    %4012 = vmatprep.subr.mxu0 0.0
    %4013 = vmatpush2.xpose.msra.mxu0 0.0
    %4014 = vmatprep.subr.mxu0 0.0
    %4015 = vmatpush2.xpose.msra.mxu0 0.0
    %4016 = vmatprep.mubr.f32.mxu0 0.0
    %v4017 = vand.u32 %v3763, 4294901760
    %v4018 = vsub.f32 %v3763, %v4017
    %4019 = vmatmul.mubr.f32.gmra.mxu0 %v4018
    %v4020 = vpop.f32.mrf.mxu0
    %v4021 = vadd.f32 %v3939, %v4020
    %v4022 = vpop.f32.mrf.mxu0
    %4023 = vmatprep.mubr.f32.mxu0 0.0
    %v4024 = vand.u32 %v3766, 4294901760
    %v4025 = vsub.f32 %v3766, %v4024
    %4026 = vmatmul.mubr.f32.gmra.mxu0 %v4025
    %v4027 = vpop.f32.mrf.mxu0
    %v4028 = vadd.f32 %v3945, %v4027
    %v4029 = vpop.f32.mrf.mxu0
    %4030 = vdwg.mxu0
    %4031 = vmatprep.subr.mxu0 0.0
    %4032 = vmatpush1.xpose.msra.mxu0 0.0
    %4033 = vmatprep.subr.mxu0 0.0
    %4034 = vmatpush1.xpose.msra.mxu0 0.0
    %4035 = vmatprep.subr.mxu0 0.0
    %4036 = vmatpush1.xpose.msra.mxu0 0.0
    %4037 = vmatprep.subr.mxu0 0.0
    %4038 = vmatpush1.xpose.msra.mxu0 0.0
    %4039 = vmatprep.subr.mxu0 0.0
    %4040 = vmatpush1.xpose.msra.mxu0 0.0
    %4041 = vmatprep.subr.mxu0 0.0
    %4042 = vmatpush1.xpose.msra.mxu0 0.0
    %4043 = vmatprep.subr.mxu0 0.0
    %4044 = vmatpush1.xpose.msra.mxu0 0.0
    %4045 = vmatprep.subr.mxu0 0.0
    %4046 = vmatpush1.xpose.msra.mxu0 0.0
    %4047 = vmatprep.subr.mxu0 0.0
    %4048 = vmatpush1.xpose.msra.mxu0 0.0
    %4049 = vmatprep.subr.mxu0 0.0
    %4050 = vmatpush1.xpose.msra.mxu0 0.0
    %4051 = vmatprep.subr.mxu0 0.0
    %4052 = vmatpush1.xpose.msra.mxu0 0.0
    %4053 = vmatprep.subr.mxu0 0.0
    %4054 = vmatpush1.xpose.msra.mxu0 0.0
    %4055 = vmatprep.subr.mxu0 0.0
    %4056 = vmatpush1.xpose.msra.mxu0 0.0
    %4057 = vmatprep.subr.mxu0 0.0
    %4058 = vmatpush1.xpose.msra.mxu0 0.0
    %4059 = vmatprep.subr.mxu0 0.0
    %v4060 = vand.u32 %v3772, 4294901760
    %4061 = vmatpush1.xpose.msra.mxu0 %v4060
    %4062 = vmatprep.subr.mxu0 0.0
    %v4063 = vand.u32 %v3769, 4294901760
    %4064 = vmatpush1.xpose.msra.mxu0 %v4063
    %4065 = vmatprep.subr.mxu0 0.0
    %4066 = vmatpush2.xpose.msra.mxu0 0.0
    %4067 = vmatprep.subr.mxu0 0.0
    %4068 = vmatpush2.xpose.msra.mxu0 0.0
    %4069 = vmatprep.subr.mxu0 0.0
    %4070 = vmatpush2.xpose.msra.mxu0 0.0
    %4071 = vmatprep.subr.mxu0 0.0
    %4072 = vmatpush2.xpose.msra.mxu0 0.0
    %4073 = vmatprep.subr.mxu0 0.0
    %4074 = vmatpush2.xpose.msra.mxu0 0.0
    %4075 = vmatprep.subr.mxu0 0.0
    %4076 = vmatpush2.xpose.msra.mxu0 0.0
    %4077 = vmatprep.subr.mxu0 0.0
    %4078 = vmatpush2.xpose.msra.mxu0 0.0
    %4079 = vmatprep.subr.mxu0 0.0
    %4080 = vmatpush2.xpose.msra.mxu0 0.0
    %4081 = vmatprep.subr.mxu0 0.0
    %4082 = vmatpush2.xpose.msra.mxu0 0.0
    %4083 = vmatprep.subr.mxu0 0.0
    %4084 = vmatpush2.xpose.msra.mxu0 0.0
    %4085 = vmatprep.subr.mxu0 0.0
    %4086 = vmatpush2.xpose.msra.mxu0 0.0
    %4087 = vmatprep.subr.mxu0 0.0
    %4088 = vmatpush2.xpose.msra.mxu0 0.0
    %4089 = vmatprep.subr.mxu0 0.0
    %4090 = vmatpush2.xpose.msra.mxu0 0.0
    %4091 = vmatprep.subr.mxu0 0.0
    %4092 = vmatpush2.xpose.msra.mxu0 0.0
    %4093 = vmatprep.subr.mxu0 0.0
    %4094 = vmatpush2.xpose.msra.mxu0 0.0
    %4095 = vmatprep.subr.mxu0 0.0
    %4096 = vmatpush2.xpose.msra.mxu0 0.0
    %4097 = vmatprep.mubr.f32.mxu0 0.0
    %v4098 = vand.u32 %v3763, 4294901760
    %v4099 = vsub.f32 %v3763, %v4098
    %v4100 = vand.u32 %v4099, 4294901760
    %4101 = vmatmul.mubr.f32.gmra.mxu0 %v4100
    %v4102 = vpop.f32.mrf.mxu0
    %v4103 = vadd.f32 %v4021, %v4102
    %v4104 = vpop.f32.mrf.mxu0
    %4105 = vmatprep.mubr.f32.mxu0 0.0
    %v4106 = vand.u32 %v3766, 4294901760
    %v4107 = vsub.f32 %v3766, %v4106
    %v4108 = vand.u32 %v4107, 4294901760
    %4109 = vmatmul.mubr.f32.gmra.mxu0 %v4108
    %v4110 = vpop.f32.mrf.mxu0
    %v4111 = vadd.f32 %v4028, %v4110
    %v4112 = vpop.f32.mrf.mxu0
    %4113 = vdwg.mxu0
    %4114 = vmatprep.subr.mxu0 0.0
    %4115 = vmatpush1.xpose.msra.mxu0 0.0
    %4116 = vmatprep.subr.mxu0 0.0
    %4117 = vmatpush1.xpose.msra.mxu0 0.0
    %4118 = vmatprep.subr.mxu0 0.0
    %4119 = vmatpush1.xpose.msra.mxu0 0.0
    %4120 = vmatprep.subr.mxu0 0.0
    %4121 = vmatpush1.xpose.msra.mxu0 0.0
    %4122 = vmatprep.subr.mxu0 0.0
    %4123 = vmatpush1.xpose.msra.mxu0 0.0
    %4124 = vmatprep.subr.mxu0 0.0
    %4125 = vmatpush1.xpose.msra.mxu0 0.0
    %4126 = vmatprep.subr.mxu0 0.0
    %4127 = vmatpush1.xpose.msra.mxu0 0.0
    %4128 = vmatprep.subr.mxu0 0.0
    %4129 = vmatpush1.xpose.msra.mxu0 0.0
    %4130 = vmatprep.subr.mxu0 0.0
    %4131 = vmatpush1.xpose.msra.mxu0 0.0
    %4132 = vmatprep.subr.mxu0 0.0
    %4133 = vmatpush1.xpose.msra.mxu0 0.0
    %4134 = vmatprep.subr.mxu0 0.0
    %4135 = vmatpush1.xpose.msra.mxu0 0.0
    %4136 = vmatprep.subr.mxu0 0.0
    %4137 = vmatpush1.xpose.msra.mxu0 0.0
    %4138 = vmatprep.subr.mxu0 0.0
    %4139 = vmatpush1.xpose.msra.mxu0 0.0
    %4140 = vmatprep.subr.mxu0 0.0
    %4141 = vmatpush1.xpose.msra.mxu0 0.0
    %4142 = vmatprep.subr.mxu0 0.0
    %v4143 = vand.u32 %v3772, 4294901760
    %v4144 = vsub.f32 %v3772, %v4143
    %v4145 = vand.u32 %v4144, 4294901760
    %4146 = vmatpush1.xpose.msra.mxu0 %v4145
    %4147 = vmatprep.subr.mxu0 0.0
    %v4148 = vand.u32 %v3769, 4294901760
    %v4149 = vsub.f32 %v3769, %v4148
    %v4150 = vand.u32 %v4149, 4294901760
    %4151 = vmatpush1.xpose.msra.mxu0 %v4150
    %4152 = vmatprep.subr.mxu0 0.0
    %4153 = vmatpush2.xpose.msra.mxu0 0.0
    %4154 = vmatprep.subr.mxu0 0.0
    %4155 = vmatpush2.xpose.msra.mxu0 0.0
    %4156 = vmatprep.subr.mxu0 0.0
    %4157 = vmatpush2.xpose.msra.mxu0 0.0
    %4158 = vmatprep.subr.mxu0 0.0
    %4159 = vmatpush2.xpose.msra.mxu0 0.0
    %4160 = vmatprep.subr.mxu0 0.0
    %4161 = vmatpush2.xpose.msra.mxu0 0.0
    %4162 = vmatprep.subr.mxu0 0.0
    %4163 = vmatpush2.xpose.msra.mxu0 0.0
    %4164 = vmatprep.subr.mxu0 0.0
    %4165 = vmatpush2.xpose.msra.mxu0 0.0
    %4166 = vmatprep.subr.mxu0 0.0
    %4167 = vmatpush2.xpose.msra.mxu0 0.0
    %4168 = vmatprep.subr.mxu0 0.0
    %4169 = vmatpush2.xpose.msra.mxu0 0.0
    %4170 = vmatprep.subr.mxu0 0.0
    %4171 = vmatpush2.xpose.msra.mxu0 0.0
    %4172 = vmatprep.subr.mxu0 0.0
    %4173 = vmatpush2.xpose.msra.mxu0 0.0
    %4174 = vmatprep.subr.mxu0 0.0
    %4175 = vmatpush2.xpose.msra.mxu0 0.0
    %4176 = vmatprep.subr.mxu0 0.0
    %4177 = vmatpush2.xpose.msra.mxu0 0.0
    %4178 = vmatprep.subr.mxu0 0.0
    %4179 = vmatpush2.xpose.msra.mxu0 0.0
    %4180 = vmatprep.subr.mxu0 0.0
    %4181 = vmatpush2.xpose.msra.mxu0 0.0
    %4182 = vmatprep.subr.mxu0 0.0
    %4183 = vmatpush2.xpose.msra.mxu0 0.0
    %4184 = vmatprep.mubr.f32.mxu0 0.0
    %v4185 = vand.u32 %v3763, 4294901760
    %4186 = vmatmul.mubr.f32.gmra.mxu0 %v4185
    %v4187 = vpop.f32.mrf.mxu0
    %v4188 = vadd.f32 %v4103, %v4187
    %v4189 = vpop.f32.mrf.mxu0
    %4190 = vmatprep.mubr.f32.mxu0 0.0
    %v4191 = vand.u32 %v3766, 4294901760
    %4192 = vmatmul.mubr.f32.gmra.mxu0 %v4191
    %v4193 = vpop.f32.mrf.mxu0
    %v4194 = vadd.f32 %v4111, %v4193
    %v4195 = vpop.f32.mrf.mxu0
    %4196 = vdwg.mxu0
    %4197 = vmatprep.subr.mxu0 0.0
    %4198 = vmatpush1.xpose.msra.mxu0 0.0
    %4199 = vmatprep.subr.mxu0 0.0
    %4200 = vmatpush1.xpose.msra.mxu0 0.0
    %4201 = vmatprep.subr.mxu0 0.0
    %4202 = vmatpush1.xpose.msra.mxu0 0.0
    %4203 = vmatprep.subr.mxu0 0.0
    %4204 = vmatpush1.xpose.msra.mxu0 0.0
    %4205 = vmatprep.subr.mxu0 0.0
    %4206 = vmatpush1.xpose.msra.mxu0 0.0
    %4207 = vmatprep.subr.mxu0 0.0
    %4208 = vmatpush1.xpose.msra.mxu0 0.0
    %4209 = vmatprep.subr.mxu0 0.0
    %4210 = vmatpush1.xpose.msra.mxu0 0.0
    %4211 = vmatprep.subr.mxu0 0.0
    %4212 = vmatpush1.xpose.msra.mxu0 0.0
    %4213 = vmatprep.subr.mxu0 0.0
    %4214 = vmatpush1.xpose.msra.mxu0 0.0
    %4215 = vmatprep.subr.mxu0 0.0
    %4216 = vmatpush1.xpose.msra.mxu0 0.0
    %4217 = vmatprep.subr.mxu0 0.0
    %4218 = vmatpush1.xpose.msra.mxu0 0.0
    %4219 = vmatprep.subr.mxu0 0.0
    %4220 = vmatpush1.xpose.msra.mxu0 0.0
    %4221 = vmatprep.subr.mxu0 0.0
    %4222 = vmatpush1.xpose.msra.mxu0 0.0
    %4223 = vmatprep.subr.mxu0 0.0
    %4224 = vmatpush1.xpose.msra.mxu0 0.0
    %4225 = vmatprep.subr.mxu0 0.0
    %v4226 = vand.u32 %v3772, 4294901760
    %4227 = vmatpush1.xpose.msra.mxu0 %v4226
    %4228 = vmatprep.subr.mxu0 0.0
    %v4229 = vand.u32 %v3769, 4294901760
    %4230 = vmatpush1.xpose.msra.mxu0 %v4229
    %4231 = vmatprep.subr.mxu0 0.0
    %4232 = vmatpush2.xpose.msra.mxu0 0.0
    %4233 = vmatprep.subr.mxu0 0.0
    %4234 = vmatpush2.xpose.msra.mxu0 0.0
    %4235 = vmatprep.subr.mxu0 0.0
    %4236 = vmatpush2.xpose.msra.mxu0 0.0
    %4237 = vmatprep.subr.mxu0 0.0
    %4238 = vmatpush2.xpose.msra.mxu0 0.0
    %4239 = vmatprep.subr.mxu0 0.0
    %4240 = vmatpush2.xpose.msra.mxu0 0.0
    %4241 = vmatprep.subr.mxu0 0.0
    %4242 = vmatpush2.xpose.msra.mxu0 0.0
    %4243 = vmatprep.subr.mxu0 0.0
    %4244 = vmatpush2.xpose.msra.mxu0 0.0
    %4245 = vmatprep.subr.mxu0 0.0
    %4246 = vmatpush2.xpose.msra.mxu0 0.0
    %4247 = vmatprep.subr.mxu0 0.0
    %4248 = vmatpush2.xpose.msra.mxu0 0.0
    %4249 = vmatprep.subr.mxu0 0.0
    %4250 = vmatpush2.xpose.msra.mxu0 0.0
    %4251 = vmatprep.subr.mxu0 0.0
    %4252 = vmatpush2.xpose.msra.mxu0 0.0
    %4253 = vmatprep.subr.mxu0 0.0
    %4254 = vmatpush2.xpose.msra.mxu0 0.0
    %4255 = vmatprep.subr.mxu0 0.0
    %4256 = vmatpush2.xpose.msra.mxu0 0.0
    %4257 = vmatprep.subr.mxu0 0.0
    %4258 = vmatpush2.xpose.msra.mxu0 0.0
    %4259 = vmatprep.subr.mxu0 0.0
    %4260 = vmatpush2.xpose.msra.mxu0 0.0
    %4261 = vmatprep.subr.mxu0 0.0
    %4262 = vmatpush2.xpose.msra.mxu0 0.0
    %4263 = vmatprep.mubr.f32.mxu0 0.0
    %v4264 = vand.u32 %v3763, 4294901760
    %4265 = vmatmul.mubr.f32.gmra.mxu0 %v4264
    %v4266 = vpop.f32.mrf.mxu0
    %v4267 = vadd.f32 %v4188, %v4266
    %v4268 = vpop.f32.mrf.mxu0
    %4269 = vmatprep.mubr.f32.mxu0 0.0
    %v4270 = vand.u32 %v3766, 4294901760
    %4271 = vmatmul.mubr.f32.gmra.mxu0 %v4270
    %v4272 = vpop.f32.mrf.mxu0
    %v4273 = vadd.f32 %v4194, %v4272
    %v4274 = vpop.f32.mrf.mxu0
    %4275 = vdwg.mxu0
    %4276 = vst.msk [vmem:[#allocation7] sm:$0xff] %vm163, %v669
    %4277 = vst.msk [vmem:[#allocation7 + $0x8] sm:$0xff] %vm163, %v675
    %4278 = vst.msk [vmem:[#allocation7 + $0x10] sm:$0xff] %vm163, %v1183
    %4279 = vst.msk [vmem:[#allocation7 + $0x18] sm:$0xff] %vm163, %v1189
    %4280 = vst.msk [vmem:[#allocation7 + $0x20] sm:$0xff] %vm163, %v1697
    %4281 = vst.msk [vmem:[#allocation7 + $0x28] sm:$0xff] %vm163, %v1703
    %4282 = vst.msk [vmem:[#allocation7 + $0x30] sm:$0xff] %vm163, %v2211
    %4283 = vst.msk [vmem:[#allocation7 + $0x38] sm:$0xff] %vm163, %v2217
    %4284 = vst.msk [vmem:[#allocation7 + $0x40] sm:$0xff] %vm163, %v2725
    %4285 = vst.msk [vmem:[#allocation7 + $0x48] sm:$0xff] %vm163, %v2731
    %4286 = vst.msk [vmem:[#allocation7 + $0x50] sm:$0xff] %vm163, %v3239
    %4287 = vst.msk [vmem:[#allocation7 + $0x58] sm:$0xff] %vm163, %v3245
    %4288 = vst.msk [vmem:[#allocation7 + $0x60] sm:$0xff] %vm163, %v3753
    %4289 = vst.msk [vmem:[#allocation7 + $0x68] sm:$0xff] %vm163, %v3759
    %4290 = vst.msk [vmem:[#allocation7 + $0x70] sm:$0xff] %vm163, %v4267
    %4291 = vst.msk [vmem:[#allocation7 + $0x78] sm:$0xff] %vm163, %v4273
    // Predicated region
    $region18: #{tpu_custom_call.1} parent=1 // pred_check
      _
    $region19: #{tpu_custom_call.1} parent=1 // pred_check_branch
      %4293 = sbr.rel (0) target = $region21
    $region20: #{tpu_custom_call.1} parent=1 // pred_region
      %s4295 = ssub.s32 2048, 2048
      %4296 = vsyncadd [#allocation4], %s4295
      %s4297 = sshll.u32 [#allocation7], 4
      %s4298 = int_to_ptr.vmem [resolvable:$true] %s4297
      %4303 = dma.vmem_to_hbm [thread:$0]  %s4298, 2048, %s2, [#allocation4], 128, 128, 8
    $region21: #{tpu_custom_call.1} parent=1 // pred_fallthru
      _
    // Predicated region
    $region22: #{tpu_custom_call.1} parent=1 // pred_check
      _
    $region23: #{tpu_custom_call.1} parent=1 // pred_check_branch
      %4305 = sbr.rel (0) target = $region25
    $region24: #{tpu_custom_call.1} parent=1 // pred_region
      %4306 = dma.done [#allocation4], 2048
    $region25: #{tpu_custom_call.1} parent=1 // pred_fallthru
      _
    %4307 = vsyncpa [#allocation3], 1
    %4308 = vsyncpa [#allocation6], 1
    %4309 = vsyncpa [#allocation4], 1

</llo_original>
